<compile_context>
chip_gen: v7x
topology: tpu7x:2x2x1
jax: 0.10.0
libtpu: 0.0.40
codegen_flags: <defaults>
</compile_context>

<pallas_src>
import math
from functools import partial

import jax
import jax.numpy as jnp
from jax.experimental import pallas as pl
from jax.experimental.pallas import tpu as pltpu


# Explicit scoped-VMEM cap for the GEMM/MLP kernels (v5e default is only
# 16 MiB; 48 MiB is still comfortably inside v7x's 64 MiB physical VMEM).
_GEMM_VMEM_LIMIT = 48 * 1024 * 1024


# ------------------------------ tiling helpers ------------------------------ #

def _pick_tile(dim, target, base):
    """Largest tile <= target that is a multiple of `base` and divides `dim`.
    Small dims fall through to the full dimension (always a legal block)."""
    if dim <= target:
        return dim
    t = (target // base) * base
    while t >= base:
        if dim % t == 0:
            return t
        t -= base
    # No aligned divisor: allow a single modest whole-dim block, but refuse to
    # silently create a giant un-pipelined (VMEM-busting) block.
    if dim <= 4 * target:
        return dim
    raise ValueError(
        f"_pick_tile: no {base}-aligned tile <= {target} divides {dim}; "
        f"pad the leading dimension to a multiple of {base}.")


def _pick_head_block(heads, head_dim, target_cols=384):
    """Number of heads per attention block such that hpb*head_dim is a
    multiple of 128 (legal lane-dim column slice of the packed QKV tensor)."""
    best = None
    for d in range(1, heads + 1):
        if heads % d != 0 or (d * head_dim) % 128 != 0:
            continue
        if d * head_dim > target_cols:
            if best is None:
                best = d
            break
        best = d
    if best is None:
        raise ValueError("width = heads*head_dim must be a multiple of 128")
    return best


# ------------------------------ Pallas kernels ------------------------------ #

def _ln_pre_kernel(x_ref, pos_ref, g_ref, b_ref, o_ref, *, eps):
    """(class-token-prepended tokens + positional embedding) -> LayerNorm."""
    x = x_ref[0] + pos_ref[0]                              # (S, D) f32
    mu = jnp.mean(x, axis=-1, keepdims=True)
    var = jnp.mean(jnp.square(x - mu), axis=-1, keepdims=True)
    inv = jax.lax.rsqrt(var + eps)
    o_ref[0] = ((x - mu) * inv * g_ref[...] + b_ref[...]).astype(o_ref.dtype)


def _ln_matmul_bias_kernel(x_ref, g_ref, b_ref, w_ref, bias_ref, o_ref,
                           ln_scr, *, eps):
    """Fused LayerNorm(x) @ W + bias.  LN(x) is computed once per row tile
    (j == 0) into a bf16 VMEM scratch and reused across the column (j) axis."""
    @pl.when(pl.program_id(1) == 0)
    def _():
        x = x_ref[...]                                      # f32 (tm, D)
        mu = jnp.mean(x, axis=-1, keepdims=True)
        var = jnp.mean(jnp.square(x - mu), axis=-1, keepdims=True)
        inv = jax.lax.rsqrt(var + eps)
        ln_scr[...] = ((x - mu) * inv * g_ref[...] + b_ref[...]).astype(jnp.bfloat16)

    o_ref[...] = (
        jnp.dot(ln_scr[...], w_ref[...], preferred_element_type=jnp.float32)
        + bias_ref[...]
    ).astype(o_ref.dtype)


def _matmul_bias_kernel(x_ref, w_ref, bias_ref, o_ref):
    o_ref[...] = (
        jnp.dot(x_ref[...].astype(jnp.bfloat16), w_ref[...],
                preferred_element_type=jnp.float32)
        + bias_ref[...]
    ).astype(o_ref.dtype)


def _matmul_bias_res_kernel(x_ref, w_ref, bias_ref, r_ref, o_ref):
    """x @ W + bias + residual  (residual add fused into the matmul epilogue)."""
    o_ref[...] = (
        jnp.dot(x_ref[...].astype(jnp.bfloat16), w_ref[...],
                preferred_element_type=jnp.float32)
        + bias_ref[...]
        + r_ref[...]
    ).astype(o_ref.dtype)


def _mlp_block_kernel(x_ref, g_ref, b_ref, w1_ref, b1_ref, w2_ref, b2_ref,
                      o_ref, ln_scr, acc_scr, *, eps):
    """Fused  x + c_proj(QuickGELU(c_fc(LN(x))))  with the 4D hidden dim tiled
    on the grid (never materialized in full).  x is both LN input and residual."""
    h_idx = pl.program_id(1)

    @pl.when(h_idx == 0)
    def _():
        x = x_ref[...]                                      # f32 (tm, D)
        mu = jnp.mean(x, axis=-1, keepdims=True)
        var = jnp.mean(jnp.square(x - mu), axis=-1, keepdims=True)
        inv = jax.lax.rsqrt(var + eps)
        ln_scr[...] = ((x - mu) * inv * g_ref[...] + b_ref[...]).astype(jnp.bfloat16)
        acc_scr[...] = jnp.zeros_like(acc_scr)

    h = (
        jnp.dot(ln_scr[...], w1_ref[...], preferred_element_type=jnp.float32)
        + b1_ref[...]
    )
    # QuickGELU (CLIP): x * sigmoid(1.702 * x) -- f32 on the VPU/EUP.
    h = h * jax.nn.sigmoid(1.702 * h)
    acc_scr[...] += jnp.dot(h.astype(jnp.bfloat16), w2_ref[...],
                            preferred_element_type=jnp.float32)

    @pl.when(h_idx == pl.num_programs(1) - 1)
    def _():
        o_ref[...] = (acc_scr[...] + b2_ref[...] + x_ref[...]).astype(o_ref.dtype)


def _attention_kernel(q_ref, k_ref, v_ref, o_ref, *, scale, hpb, head_dim):
    """Per-head scaled dot-product attention on a packed head block.
    q/k/v refs are (1, S, hpb*head_dim) bf16 slices of the packed QKV tensor;
    the output block is lane-dense (1, S, hpb*head_dim)."""
    q = (q_ref[0].astype(jnp.float32) * scale).astype(jnp.bfloat16)   # (S, hpb*hd)
    k = k_ref[0]
    v = v_ref[0]
    # TODO(synk): pack 2 heads along the MXU contraction dim to raise MXU fill
    # for head_dim=64 on v6e/v7x; attention is memory-bound after the bf16 I/O
    # change so this is a secondary win.
    for h in range(hpb):
        lo = h * head_dim
        hi = lo + head_dim
        qh = q[:, lo:hi]                                    # (S, hd) bf16
        kh = k[:, lo:hi]
        vh = v[:, lo:hi]
        s = jax.lax.dot_general(qh, kh, (((1,), (1,)), ((), ())),
                                preferred_element_type=jnp.float32)   # (S, S)
        m = jnp.max(s, axis=-1, keepdims=True)
        p = jnp.exp(s - m)                                  # f32 softmax
        denom = jnp.sum(p, axis=-1, keepdims=True)
        p = p * pl.reciprocal(denom, approx=True)           # EUP, not a VALU divide
        oh = jnp.dot(p.astype(jnp.bfloat16), vh,
                     preferred_element_type=jnp.float32)    # (S, hd)
        o_ref[0, :, lo:hi] = oh.astype(o_ref.dtype)


# ------------------------------ kernel wrappers ------------------------------ #

def pallas_ln_pre(x_bsd, pos, gamma, beta, *, eps=1e-5):
    """LayerNorm(x + positional_embedding).  x:(B,S,D) f32, pos:(S,D) f32."""
    B, S, D = x_bsd.shape
    return pl.pallas_call(
        partial(_ln_pre_kernel, eps=eps),
        out_shape=jax.ShapeDtypeStruct((B, S, D), jnp.float32),
        grid=(B,),
        in_specs=[
            pl.BlockSpec((1, S, D), lambda i: (i, 0, 0)),
            pl.BlockSpec((1, S, D), lambda i: (0, 0, 0)),
            pl.BlockSpec((1, D), lambda i: (0, 0)),
            pl.BlockSpec((1, D), lambda i: (0, 0)),
        ],
        out_specs=pl.BlockSpec((1, S, D), lambda i: (i, 0, 0)),
        compiler_params=pltpu.CompilerParams(
            dimension_semantics=("parallel",)),
    )(x_bsd, pos.reshape(1, S, D), gamma.reshape(1, D), beta.reshape(1, D))


def pallas_ln_matmul_bias(x, gamma, beta, w, bias, *, eps=1e-5,
                          tm_target=512, tn_target=512, out_dtype=jnp.float32):
    """LayerNorm(x) @ w + bias.  x:(M,D) f32, w:(D,N) bf16, bias:(N,) f32.
    The column-tile axis is 'arbitrary' (LN scratch carries state across it)."""
    M, D = x.shape
    N = w.shape[1]
    tm = _pick_tile(M, tm_target, 8)
    tn = _pick_tile(N, tn_target, 128)
    return pl.pallas_call(
        partial(_ln_matmul_bias_kernel, eps=eps),
        out_shape=jax.ShapeDtypeStruct((M, N), out_dtype),
        grid=(M // tm, N // tn),
        in_specs=[
            pl.BlockSpec((tm, D), lambda i, j: (i, 0)),
            pl.BlockSpec((1, D), lambda i, j: (0, 0)),
            pl.BlockSpec((1, D), lambda i, j: (0, 0)),
            pl.BlockSpec((D, tn), lambda i, j: (0, j)),
            pl.BlockSpec((1, tn), lambda i, j: (0, j)),
        ],
        out_specs=pl.BlockSpec((tm, tn), lambda i, j: (i, j)),
        scratch_shapes=[pltpu.VMEM((tm, D), jnp.bfloat16)],   # cached LN(x)
        compiler_params=pltpu.CompilerParams(
            dimension_semantics=("parallel", "arbitrary"),
            vmem_limit_bytes=_GEMM_VMEM_LIMIT),
        cost_estimate=pl.CostEstimate(
            flops=2 * M * D * N, transcendentals=0,
            bytes_accessed=M * D * 4 + D * N * 2
                           + M * N * jnp.dtype(out_dtype).itemsize),
    )(x, gamma.reshape(1, D), beta.reshape(1, D), w, bias.reshape(1, N))


def pallas_matmul_bias(x, w, bias, *, tm_target=512, tn_target=512):
    """x @ w + bias.  x:(M,K) f32, w:(K,N) bf16, bias:(N,) f32."""
    M, K = x.shape
    N = w.shape[1]
    tm = _pick_tile(M, tm_target, 8)
    tn = _pick_tile(N, tn_target, 128)
    return pl.pallas_call(
        _matmul_bias_kernel,
        out_shape=jax.ShapeDtypeStruct((M, N), jnp.float32),
        grid=(M // tm, N // tn),
        in_specs=[
            pl.BlockSpec((tm, K), lambda i, j: (i, 0)),
            pl.BlockSpec((K, tn), lambda i, j: (0, j)),
            pl.BlockSpec((1, tn), lambda i, j: (0, j)),
        ],
        out_specs=pl.BlockSpec((tm, tn), lambda i, j: (i, j)),
        compiler_params=pltpu.CompilerParams(
            dimension_semantics=("parallel", "parallel"),
            vmem_limit_bytes=_GEMM_VMEM_LIMIT),
        cost_estimate=pl.CostEstimate(
            flops=2 * M * K * N, transcendentals=0,
            bytes_accessed=M * K * 4 + K * N * 2 + M * N * 4),
    )(x, w, bias.reshape(1, N))


def pallas_matmul_bias_residual(x, w, bias, residual, *, tm_target=512,
                                tn_target=512):
    """x @ w + bias + residual.  x:(M,K) bf16/f32, residual:(M,N) f32."""
    M, K = x.shape
    N = w.shape[1]
    tm = _pick_tile(M, tm_target, 8)
    tn = _pick_tile(N, tn_target, 128)
    return pl.pallas_call(
        _matmul_bias_res_kernel,
        out_shape=jax.ShapeDtypeStruct((M, N), jnp.float32),
        grid=(M // tm, N // tn),
        in_specs=[
            pl.BlockSpec((tm, K), lambda i, j: (i, 0)),
            pl.BlockSpec((K, tn), lambda i, j: (0, j)),
            pl.BlockSpec((1, tn), lambda i, j: (0, j)),
            pl.BlockSpec((tm, tn), lambda i, j: (i, j)),
        ],
        out_specs=pl.BlockSpec((tm, tn), lambda i, j: (i, j)),
        compiler_params=pltpu.CompilerParams(
            dimension_semantics=("parallel", "parallel"),
            vmem_limit_bytes=_GEMM_VMEM_LIMIT),
        cost_estimate=pl.CostEstimate(
            flops=2 * M * K * N, transcendentals=0,
            bytes_accessed=M * K * x.dtype.itemsize + K * N * 2 + 2 * M * N * 4),
    )(x, w, bias.reshape(1, N), residual)


def pallas_mlp_block(x, gamma, beta, w1, b1, w2, b2, *, eps=1e-5,
                     tm_target=512, th_target=512):
    """x + c_proj(QuickGELU(c_fc(LN(x)))).  Hidden (4D) dim tiled on the grid."""
    M, D = x.shape
    H4 = w1.shape[1]
    tm = _pick_tile(M, tm_target, 8)
    th = _pick_tile(H4, th_target, 128)
    return pl.pallas_call(
        partial(_mlp_block_kernel, eps=eps),
        out_shape=jax.ShapeDtypeStruct((M, D), jnp.float32),
        grid=(M // tm, H4 // th),
        in_specs=[
            pl.BlockSpec((tm, D), lambda i, h: (i, 0)),    # x (LN input + residual)
            pl.BlockSpec((1, D), lambda i, h: (0, 0)),     # ln2 gamma
            pl.BlockSpec((1, D), lambda i, h: (0, 0)),     # ln2 beta
            pl.BlockSpec((D, th), lambda i, h: (0, h)),    # c_fc weight tile
            pl.BlockSpec((1, th), lambda i, h: (0, h)),    # c_fc bias tile
            pl.BlockSpec((th, D), lambda i, h: (h, 0)),    # c_proj weight tile
            pl.BlockSpec((1, D), lambda i, h: (0, 0)),     # c_proj bias
        ],
        out_specs=pl.BlockSpec((tm, D), lambda i, h: (i, 0)),
        scratch_shapes=[
            pltpu.VMEM((tm, D), jnp.bfloat16),             # LN(x), reused across h
            pltpu.VMEM((tm, D), jnp.float32),              # c_proj accumulator
        ],
        compiler_params=pltpu.CompilerParams(
            dimension_semantics=("parallel", "arbitrary"),
            vmem_limit_bytes=_GEMM_VMEM_LIMIT),
        cost_estimate=pl.CostEstimate(
            flops=4 * M * D * H4, transcendentals=M * H4,
            bytes_accessed=2 * M * D * 4 + 2 * D * H4 * 2 + (H4 + D) * 4),
    )(x, gamma.reshape(1, D), beta.reshape(1, D), w1, b1.reshape(1, H4),
      w2, b2.reshape(1, D))


def pallas_attention_packed(qkv, B, S, heads, head_dim):
    """Multi-head attention straight from the packed (B*S, 3*width) bf16 QKV
    tensor.  No head split/merge transposes: q/k/v head-block column slices are
    read via BlockSpecs and the output is written lane-dense as (B, S, width)."""
    width = heads * head_dim
    qkv3 = qkv.reshape(B, S, 3 * width)                    # free reshape
    hpb = _pick_head_block(heads, head_dim)
    nhb = heads // hpb
    chunk = hpb * head_dim                                  # multiple of 128
    scale = 1.0 / math.sqrt(head_dim)
    return pl.pallas_call(
        partial(_attention_kernel, scale=scale, hpb=hpb, head_dim=head_dim),
        out_shape=jax.ShapeDtypeStruct((B, S, width), jnp.bfloat16),
        grid=(B, nhb),
        in_specs=[
            pl.BlockSpec((1, S, chunk), lambda b, h: (b, 0, h)),            # Q
            pl.BlockSpec((1, S, chunk), lambda b, h: (b, 0, h + nhb)),      # K
            pl.BlockSpec((1, S, chunk), lambda b, h: (b, 0, h + 2 * nhb)),  # V
        ],
        out_specs=pl.BlockSpec((1, S, chunk), lambda b, h: (b, 0, h)),
        compiler_params=pltpu.CompilerParams(
            dimension_semantics=("parallel", "parallel"),
            vmem_limit_bytes=_GEMM_VMEM_LIMIT),
        cost_estimate=pl.CostEstimate(
            flops=4 * B * heads * S * S * head_dim,
            transcendentals=B * heads * S * S,
            bytes_accessed=4 * B * S * width * 2),
    )(qkv3, qkv3, qkv3)


# --------------------------- parameter construction -------------------------- #

def init_params(key, *, in_ch, patch, width, layers, out_dim, grid):
    keys = list(jax.random.split(key, 8 + layers * 10))
    ki = iter(keys)

    def nrm(shape, scale=0.02, dtype=jnp.float32):
        return (scale * jax.random.normal(next(ki), shape)).astype(dtype)

    wdt = jnp.bfloat16   # MXU operand dtype: weights stored pre-cast + pre-transposed (K, N)

    params = {
        # conv1 (kernel=stride=patch, bias=False) expressed as a (C*P*P, width) matmul
        "patch_w": nrm((in_ch * patch * patch, width), dtype=wdt),
        "class_embedding": nrm((width,)),
        "positional_embedding": nrm((grid * grid + 1, width)),
        "ln_pre_g": jnp.ones((width,), jnp.float32),
        "ln_pre_b": jnp.zeros((width,), jnp.float32),
        "ln_post_g": jnp.ones((width,), jnp.float32),
        "ln_post_b": jnp.zeros((width,), jnp.float32),
        "proj": nrm((width, out_dim), dtype=wdt),          # no bias in CLIP
        "blocks": [],
    }
    for _ in range(layers):
        params["blocks"].append({
            "ln1_g": jnp.ones((width,), jnp.float32),
            "ln1_b": jnp.zeros((width,), jnp.float32),
            "in_proj_w": nrm((width, 3 * width), dtype=wdt),   # (K, N) layout
            "in_proj_b": nrm((3 * width,)),
            "out_proj_w": nrm((width, width), dtype=wdt),
            "out_proj_b": nrm((width,)),
            "ln2_g": jnp.ones((width,), jnp.float32),
            "ln2_b": jnp.zeros((width,), jnp.float32),
            "c_fc_w": nrm((width, 4 * width), dtype=wdt),
            "c_fc_b": nrm((4 * width,)),
            "c_proj_w": nrm((4 * width, width), dtype=wdt),
            "c_proj_b": nrm((width,)),
        })
    return params


# -------------------------------- forward pass -------------------------------- #

def encode_image(params, images, *, patch, width, heads):
    """images: (B, C, H, W) f32  ->  (B, out_dim) f32   (CLIP VisionTransformer)."""
    B, C, H, W = images.shape
    gh, gw = H // patch, W // patch
    n_patch = gh * gw
    head_dim = width // heads
    out_dim = params["proj"].shape[1]
    S = n_patch + 1

    # --- patch embedding (conv1, stride=kernel=patch, bias=False) as matmul ---
    # TODO(synk): fold this im2col reshape/transpose into the patch GEMM's
    # in_spec with a (B, gh, gw) grid to save one image-sized HBM round trip.
    x = images.reshape(B, C, gh, patch, gw, patch)
    x = x.transpose(0, 2, 4, 1, 3, 5).reshape(B * n_patch, C * patch * patch)
    x = pallas_matmul_bias(x, params["patch_w"], jnp.zeros((width,), jnp.float32))
    x = x.reshape(B, n_patch, width)

    # --- prepend class token (XLA glue); pos-embedding add is fused into ln_pre ---
    cls = jnp.broadcast_to(params["class_embedding"], (B, 1, width))
    x = jnp.concatenate([cls, x], axis=1)                          # (B, S, width)

    # --- ln_pre (positional embedding added inside the kernel) ---
    x = pallas_ln_pre(x, params["positional_embedding"],
                      params["ln_pre_g"], params["ln_pre_b"])
    x = x.reshape(B * S, width)                                    # residual stream, f32

    # --- transformer (ResidualAttentionBlocks) ---
    for blk in params["blocks"]:
        # attn branch: ln_1 fused into the QKV projection; QKV emitted in bf16
        qkv = pallas_ln_matmul_bias(x, blk["ln1_g"], blk["ln1_b"],
                                    blk["in_proj_w"], blk["in_proj_b"],
                                    out_dtype=jnp.bfloat16)        # (B*S, 3*width) bf16
        # attention reads packed head-block slices directly (no split/merge transposes)
        attn = pallas_attention_packed(qkv, B, S, heads, head_dim)  # (B, S, width) bf16
        # out_proj with bias + residual add fused into the matmul epilogue
        x = pallas_matmul_bias_residual(attn.reshape(B * S, width),
                                        blk["out_proj_w"], blk["out_proj_b"], x)
        # mlp branch: ln_2 + c_fc + QuickGELU + c_proj + residual, fully fused
        x = pallas_mlp_block(x, blk["ln2_g"], blk["ln2_b"],
                             blk["c_fc_w"], blk["c_fc_b"],
                             blk["c_proj_w"], blk["c_proj_b"])

    # --- ln_post + projection on the CLS token, fused into one tiny kernel ---
    cls_tok = x.reshape(B, S, width)[:, 0, :]                      # (B, width)
    out = pallas_ln_matmul_bias(cls_tok, params["ln_post_g"], params["ln_post_b"],
                                params["proj"],
                                jnp.zeros((out_dim,), jnp.float32))
    return out                                                      # (B, out_dim)


# ------------------------------------ main ------------------------------------ #

if __name__ == "__main__":
    # Small ViT configuration consistent with CLIP's VisionTransformer forward.
    # width is kept a multiple of 128 so the packed-head attention BlockSpecs
    # are lane-legal (true for all real CLIP widths: 768 / 1024 / 1280).
    B, C, H, W = 2, 3, 32, 32
    PATCH = 8
    WIDTH = 128
    HEADS = 4
    LAYERS = 2
    OUT_DIM = 64
    GRID = H // PATCH

    key = jax.random.PRNGKey(0)
    k_img, k_params = jax.random.split(key)
    images = jax.random.normal(k_img, (B, C, H, W), dtype=jnp.float32)

    params = init_params(
        k_params, in_ch=C, patch=PATCH, width=WIDTH,
        layers=LAYERS, out_dim=OUT_DIM, grid=GRID,
    )

    fwd = jax.jit(partial(encode_image, patch=PATCH, width=WIDTH, heads=HEADS))
    out = fwd(params, images)
    out = jax.block_until_ready(out)
    assert out.shape == (B, OUT_DIM), out.shape
    assert jnp.all(jnp.isfinite(out))
    print("KERNEL_OK")
</pallas_src>

<mosaic_0001>
module attributes {stable_mosaic.version = 11 : i64} {
  func.func @_matmul_bias_kernel(%arg0: i32, %arg1: i32, %arg2: memref<32x192xf32, #tpu.memory_space<vmem>>, %arg3: memref<192x128xbf16, #tpu.memory_space<vmem>>, %arg4: memref<1x128xf32, #tpu.memory_space<vmem>>, %arg5: memref<32x128xf32, #tpu.memory_space<vmem>>) attributes {dimension_semantics = [#tpu.dimension_semantics<parallel>, #tpu.dimension_semantics<parallel>], iteration_bounds = array<i64: 1, 1>, scalar_prefetch = 0 : i64, scratch_operands = 0 : i64, tpu.core_type = #tpu.core_type<tc>, window_params = [{transform_indices = @transform_0, window_bounds = array<i64: 32, 192>}, {transform_indices = @transform_1, window_bounds = array<i64: 192, 128>}, {transform_indices = @transform_2, window_bounds = array<i64: 1, 128>}, {transform_indices = @transform_3, window_bounds = array<i64: 32, 128>}]} {
    %c0 = arith.constant 0 : index
    %c0_0 = arith.constant 0 : index
    %0 = vector.load %arg2[%c0, %c0_0] : memref<32x192xf32, #tpu.memory_space<vmem>>, vector<32x192xf32>
    %1 = arith.truncf %0 : vector<32x192xf32> to vector<32x192xbf16>
    %c0_1 = arith.constant 0 : index
    %c0_2 = arith.constant 0 : index
    %2 = vector.load %arg3[%c0_1, %c0_2] : memref<192x128xbf16, #tpu.memory_space<vmem>>, vector<192x128xbf16>
    %cst = arith.constant dense<0.000000e+00> : vector<32x128xf32>
    %3 = tpu.matmul %1, %2, %cst {dimension_numbers = #tpu.dot_dimension_numbers<[1], [0], [0], [1], [0, 0, 1, 1], [], []>} : vector<32x192xbf16>, vector<192x128xbf16>, vector<32x128xf32> -> vector<32x128xf32>
    %c0_3 = arith.constant 0 : index
    %c0_4 = arith.constant 0 : index
    %4 = vector.load %arg4[%c0_3, %c0_4] : memref<1x128xf32, #tpu.memory_space<vmem>>, vector<1x128xf32>
    %5 = vector.broadcast %4 : vector<1x128xf32> to vector<32x128xf32>
    %6 = arith.addf %3, %5 : vector<32x128xf32>
    %c0_5 = arith.constant 0 : index
    %c0_6 = arith.constant 0 : index
    %7 = vector.load %arg5[%c0_5, %c0_6] : memref<32x128xf32, #tpu.memory_space<vmem>>, vector<32x128xf32>
    tpu.vector_store %arg5[%c0_5, %c0_6], %6 {strides = array<i32>} : memref<32x128xf32, #tpu.memory_space<vmem>>, vector<32x128xf32>,
    return
  }
  func.func @transform_0(%arg0: i32, %arg1: i32) -> (i32, i32) {
    %c0_i32 = arith.constant 0 : i32
    %c0_i32_0 = arith.constant 0 : i32
    return %arg0, %c0_i32 : i32, i32
  }
  func.func @transform_1(%arg0: i32, %arg1: i32) -> (i32, i32) {
    %c0_i32 = arith.constant 0 : i32
    %c0_i32_0 = arith.constant 0 : i32
    return %c0_i32, %arg1 : i32, i32
  }
  func.func @transform_2(%arg0: i32, %arg1: i32) -> (i32, i32) {
    %c0_i32 = arith.constant 0 : i32
    %c0_i32_0 = arith.constant 0 : i32
    return %c0_i32, %arg1 : i32, i32
  }
  func.func @transform_3(%arg0: i32, %arg1: i32) -> (i32, i32) {
    %c0_i32 = arith.constant 0 : i32
    return %arg0, %arg1 : i32, i32
  }
}

module attributes {stable_mosaic.version = 11 : i64} {
  func.func @_attention_kernel(%arg0: i32, %arg1: i32, %arg2: memref<1x17x128xbf16, #tpu.memory_space<vmem>>, %arg3: memref<1x17x128xbf16, #tpu.memory_space<vmem>>, %arg4: memref<1x17x128xbf16, #tpu.memory_space<vmem>>, %arg5: memref<1x17x128xbf16, #tpu.memory_space<vmem>>) attributes {dimension_semantics = [#tpu.dimension_semantics<parallel>, #tpu.dimension_semantics<parallel>], iteration_bounds = array<i64: 2, 1>, scalar_prefetch = 0 : i64, scratch_operands = 0 : i64, tpu.core_type = #tpu.core_type<tc>, window_params = [{transform_indices = @transform_0, window_bounds = array<i64: 1, 17, 128>}, {transform_indices = @transform_1, window_bounds = array<i64: 1, 17, 128>}, {transform_indices = @transform_2, window_bounds = array<i64: 1, 17, 128>}, {transform_indices = @transform_3, window_bounds = array<i64: 1, 17, 128>}]} {
    %c0 = arith.constant 0 : index
    %c0_0 = arith.constant 0 : index
    %c0_1 = arith.constant 0 : index
    %0 = vector.load %arg2[%c0, %c0_0, %c0_1] : memref<1x17x128xbf16, #tpu.memory_space<vmem>>, vector<1x17x128xbf16>
    %1 = vector.shape_cast %0 : vector<1x17x128xbf16> to vector<17x128xbf16>
    %2 = arith.extf %1 : vector<17x128xbf16> to vector<17x128xf32>
    %cst = arith.constant 0.176776692 : f32
    %3 = vector.broadcast %cst : f32 to vector<17x128xf32>
    %4 = arith.mulf %2, %3 : vector<17x128xf32>
    %5 = arith.truncf %4 : vector<17x128xf32> to vector<17x128xbf16>
    %c0_2 = arith.constant 0 : index
    %c0_3 = arith.constant 0 : index
    %c0_4 = arith.constant 0 : index
    %6 = vector.load %arg3[%c0_2, %c0_3, %c0_4] : memref<1x17x128xbf16, #tpu.memory_space<vmem>>, vector<1x17x128xbf16>
    %7 = vector.shape_cast %6 : vector<1x17x128xbf16> to vector<17x128xbf16>
    %c0_5 = arith.constant 0 : index
    %c0_6 = arith.constant 0 : index
    %c0_7 = arith.constant 0 : index
    %8 = vector.load %arg4[%c0_5, %c0_6, %c0_7] : memref<1x17x128xbf16, #tpu.memory_space<vmem>>, vector<1x17x128xbf16>
    %9 = vector.shape_cast %8 : vector<1x17x128xbf16> to vector<17x128xbf16>
    %10 = vector.extract_strided_slice %5 {offsets = [0, 0], sizes = [17, 32], strides = [1, 1]} : vector<17x128xbf16> to vector<17x32xbf16>
    %11 = vector.extract_strided_slice %7 {offsets = [0, 0], sizes = [17, 32], strides = [1, 1]} : vector<17x128xbf16> to vector<17x32xbf16>
    %12 = vector.extract_strided_slice %9 {offsets = [0, 0], sizes = [17, 32], strides = [1, 1]} : vector<17x128xbf16> to vector<17x32xbf16>
    %cst_8 = arith.constant dense<0.000000e+00> : vector<17x17xf32>
    %13 = tpu.matmul %10, %11, %cst_8 {dimension_numbers = #tpu.dot_dimension_numbers<[1], [1], [0], [0], [0, 0, 1, 0], [], []>} : vector<17x32xbf16>, vector<17x32xbf16>, vector<17x17xf32> -> vector<17x17xf32>
    %cst_9 = arith.constant dense<0xFF800000> : vector<17xf32>
    %14 = vector.multi_reduction <maximumf>, %13, %cst_9 [1] : vector<17x17xf32> to vector<17xf32>
    %15 = vector.shape_cast %14 : vector<17xf32> to vector<17x1xf32>
    %16 = vector.broadcast %15 : vector<17x1xf32> to vector<17x17xf32>
    %17 = arith.subf %13, %16 : vector<17x17xf32>
    %18 = math.exp %17 : vector<17x17xf32>
    %cst_10 = arith.constant dense<0.000000e+00> : vector<17xf32>
    %19 = vector.multi_reduction <add>, %18, %cst_10 [1] : vector<17x17xf32> to vector<17xf32>
    %20 = vector.shape_cast %19 : vector<17xf32> to vector<17x1xf32>
    %21 = tpu.reciprocal %20 {approx = true} : vector<17x1xf32> -> vector<17x1xf32>
    %22 = vector.broadcast %21 : vector<17x1xf32> to vector<17x17xf32>
    %23 = arith.mulf %18, %22 : vector<17x17xf32>
    %24 = arith.truncf %23 : vector<17x17xf32> to vector<17x17xbf16>
    %cst_11 = arith.constant dense<0.000000e+00> : vector<17x32xf32>
    %25 = tpu.matmul %24, %12, %cst_11 {dimension_numbers = #tpu.dot_dimension_numbers<[1], [0], [0], [1], [0, 0, 1, 1], [], []>} : vector<17x17xbf16>, vector<17x32xbf16>, vector<17x32xf32> -> vector<17x32xf32>
    %26 = arith.truncf %25 : vector<17x32xf32> to vector<17x32xbf16>
    %c0_12 = arith.constant 0 : index
    %c0_13 = arith.constant 0 : index
    %c0_14 = arith.constant 0 : index
    %27 = vector.load %arg5[%c0_12, %c0_13, %c0_14] : memref<1x17x128xbf16, #tpu.memory_space<vmem>>, vector<1x17x32xbf16>
    %28 = vector.shape_cast %27 : vector<1x17x32xbf16> to vector<17x32xbf16>
    %29 = vector.shape_cast %26 : vector<17x32xbf16> to vector<1x17x32xbf16>
    tpu.vector_store %arg5[%c0_12, %c0_13, %c0_14], %29 {strides = array<i32>} : memref<1x17x128xbf16, #tpu.memory_space<vmem>>, vector<1x17x32xbf16>,
    %30 = vector.extract_strided_slice %5 {offsets = [0, 32], sizes = [17, 32], strides = [1, 1]} : vector<17x128xbf16> to vector<17x32xbf16>
    %31 = vector.extract_strided_slice %7 {offsets = [0, 32], sizes = [17, 32], strides = [1, 1]} : vector<17x128xbf16> to vector<17x32xbf16>
    %32 = vector.extract_strided_slice %9 {offsets = [0, 32], sizes = [17, 32], strides = [1, 1]} : vector<17x128xbf16> to vector<17x32xbf16>
    %cst_15 = arith.constant dense<0.000000e+00> : vector<17x17xf32>
    %33 = tpu.matmul %30, %31, %cst_15 {dimension_numbers = #tpu.dot_dimension_numbers<[1], [1], [0], [0], [0, 0, 1, 0], [], []>} : vector<17x32xbf16>, vector<17x32xbf16>, vector<17x17xf32> -> vector<17x17xf32>
    %cst_16 = arith.constant dense<0xFF800000> : vector<17xf32>
    %34 = vector.multi_reduction <maximumf>, %33, %cst_16 [1] : vector<17x17xf32> to vector<17xf32>
    %35 = vector.shape_cast %34 : vector<17xf32> to vector<17x1xf32>
    %36 = vector.broadcast %35 : vector<17x1xf32> to vector<17x17xf32>
    %37 = arith.subf %33, %36 : vector<17x17xf32>
    %38 = math.exp %37 : vector<17x17xf32>
    %cst_17 = arith.constant dense<0.000000e+00> : vector<17xf32>
    %39 = vector.multi_reduction <add>, %38, %cst_17 [1] : vector<17x17xf32> to vector<17xf32>
    %40 = vector.shape_cast %39 : vector<17xf32> to vector<17x1xf32>
    %41 = tpu.reciprocal %40 {approx = true} : vector<17x1xf32> -> vector<17x1xf32>
    %42 = vector.broadcast %41 : vector<17x1xf32> to vector<17x17xf32>
    %43 = arith.mulf %38, %42 : vector<17x17xf32>
    %44 = arith.truncf %43 : vector<17x17xf32> to vector<17x17xbf16>
    %cst_18 = arith.constant dense<0.000000e+00> : vector<17x32xf32>
    %45 = tpu.matmul %44, %32, %cst_18 {dimension_numbers = #tpu.dot_dimension_numbers<[1], [0], [0], [1], [0, 0, 1, 1], [], []>} : vector<17x17xbf16>, vector<17x32xbf16>, vector<17x32xf32> -> vector<17x32xf32>
    %46 = arith.truncf %45 : vector<17x32xf32> to vector<17x32xbf16>
    %c0_19 = arith.constant 0 : index
    %c0_20 = arith.constant 0 : index
    %c32 = arith.constant 32 : index
    %47 = vector.load %arg5[%c0_19, %c0_20, %c32] : memref<1x17x128xbf16, #tpu.memory_space<vmem>>, vector<1x17x32xbf16>
    %48 = vector.shape_cast %47 : vector<1x17x32xbf16> to vector<17x32xbf16>
    %49 = vector.shape_cast %46 : vector<17x32xbf16> to vector<1x17x32xbf16>
    tpu.vector_store %arg5[%c0_19, %c0_20, %c32], %49 {strides = array<i32>} : memref<1x17x128xbf16, #tpu.memory_space<vmem>>, vector<1x17x32xbf16>,
    %50 = vector.extract_strided_slice %5 {offsets = [0, 64], sizes = [17, 32], strides = [1, 1]} : vector<17x128xbf16> to vector<17x32xbf16>
    %51 = vector.extract_strided_slice %7 {offsets = [0, 64], sizes = [17, 32], strides = [1, 1]} : vector<17x128xbf16> to vector<17x32xbf16>
    %52 = vector.extract_strided_slice %9 {offsets = [0, 64], sizes = [17, 32], strides = [1, 1]} : vector<17x128xbf16> to vector<17x32xbf16>
    %cst_21 = arith.constant dense<0.000000e+00> : vector<17x17xf32>
    %53 = tpu.matmul %50, %51, %cst_21 {dimension_numbers = #tpu.dot_dimension_numbers<[1], [1], [0], [0], [0, 0, 1, 0], [], []>} : vector<17x32xbf16>, vector<17x32xbf16>, vector<17x17xf32> -> vector<17x17xf32>
    %cst_22 = arith.constant dense<0xFF800000> : vector<17xf32>
    %54 = vector.multi_reduction <maximumf>, %53, %cst_22 [1] : vector<17x17xf32> to vector<17xf32>
    %55 = vector.shape_cast %54 : vector<17xf32> to vector<17x1xf32>
    %56 = vector.broadcast %55 : vector<17x1xf32> to vector<17x17xf32>
    %57 = arith.subf %53, %56 : vector<17x17xf32>
    %58 = math.exp %57 : vector<17x17xf32>
    %cst_23 = arith.constant dense<0.000000e+00> : vector<17xf32>
    %59 = vector.multi_reduction <add>, %58, %cst_23 [1] : vector<17x17xf32> to vector<17xf32>
    %60 = vector.shape_cast %59 : vector<17xf32> to vector<17x1xf32>
    %61 = tpu.reciprocal %60 {approx = true} : vector<17x1xf32> -> vector<17x1xf32>
    %62 = vector.broadcast %61 : vector<17x1xf32> to vector<17x17xf32>
    %63 = arith.mulf %58, %62 : vector<17x17xf32>
    %64 = arith.truncf %63 : vector<17x17xf32> to vector<17x17xbf16>
    %cst_24 = arith.constant dense<0.000000e+00> : vector<17x32xf32>
    %65 = tpu.matmul %64, %52, %cst_24 {dimension_numbers = #tpu.dot_dimension_numbers<[1], [0], [0], [1], [0, 0, 1, 1], [], []>} : vector<17x17xbf16>, vector<17x32xbf16>, vector<17x32xf32> -> vector<17x32xf32>
    %66 = arith.truncf %65 : vector<17x32xf32> to vector<17x32xbf16>
    %c0_25 = arith.constant 0 : index
    %c0_26 = arith.constant 0 : index
    %c64 = arith.constant 64 : index
    %67 = vector.load %arg5[%c0_25, %c0_26, %c64] : memref<1x17x128xbf16, #tpu.memory_space<vmem>>, vector<1x17x32xbf16>
    %68 = vector.shape_cast %67 : vector<1x17x32xbf16> to vector<17x32xbf16>
    %69 = vector.shape_cast %66 : vector<17x32xbf16> to vector<1x17x32xbf16>
    tpu.vector_store %arg5[%c0_25, %c0_26, %c64], %69 {strides = array<i32>} : memref<1x17x128xbf16, #tpu.memory_space<vmem>>, vector<1x17x32xbf16>,
    %70 = vector.extract_strided_slice %5 {offsets = [0, 96], sizes = [17, 32], strides = [1, 1]} : vector<17x128xbf16> to vector<17x32xbf16>
    %71 = vector.extract_strided_slice %7 {offsets = [0, 96], sizes = [17, 32], strides = [1, 1]} : vector<17x128xbf16> to vector<17x32xbf16>
    %72 = vector.extract_strided_slice %9 {offsets = [0, 96], sizes = [17, 32], strides = [1, 1]} : vector<17x128xbf16> to vector<17x32xbf16>
    %cst_27 = arith.constant dense<0.000000e+00> : vector<17x17xf32>
    %73 = tpu.matmul %70, %71, %cst_27 {dimension_numbers = #tpu.dot_dimension_numbers<[1], [1], [0], [0], [0, 0, 1, 0], [], []>} : vector<17x32xbf16>, vector<17x32xbf16>, vector<17x17xf32> -> vector<17x17xf32>
    %cst_28 = arith.constant dense<0xFF800000> : vector<17xf32>
    %74 = vector.multi_reduction <maximumf>, %73, %cst_28 [1] : vector<17x17xf32> to vector<17xf32>
    %75 = vector.shape_cast %74 : vector<17xf32> to vector<17x1xf32>
    %76 = vector.broadcast %75 : vector<17x1xf32> to vector<17x17xf32>
    %77 = arith.subf %73, %76 : vector<17x17xf32>
    %78 = math.exp %77 : vector<17x17xf32>
    %cst_29 = arith.constant dense<0.000000e+00> : vector<17xf32>
    %79 = vector.multi_reduction <add>, %78, %cst_29 [1] : vector<17x17xf32> to vector<17xf32>
    %80 = vector.shape_cast %79 : vector<17xf32> to vector<17x1xf32>
    %81 = tpu.reciprocal %80 {approx = true} : vector<17x1xf32> -> vector<17x1xf32>
    %82 = vector.broadcast %81 : vector<17x1xf32> to vector<17x17xf32>
    %83 = arith.mulf %78, %82 : vector<17x17xf32>
    %84 = arith.truncf %83 : vector<17x17xf32> to vector<17x17xbf16>
    %cst_30 = arith.constant dense<0.000000e+00> : vector<17x32xf32>
    %85 = tpu.matmul %84, %72, %cst_30 {dimension_numbers = #tpu.dot_dimension_numbers<[1], [0], [0], [1], [0, 0, 1, 1], [], []>} : vector<17x17xbf16>, vector<17x32xbf16>, vector<17x32xf32> -> vector<17x32xf32>
    %86 = arith.truncf %85 : vector<17x32xf32> to vector<17x32xbf16>
    %c0_31 = arith.constant 0 : index
    %c0_32 = arith.constant 0 : index
    %c96 = arith.constant 96 : index
    %87 = vector.load %arg5[%c0_31, %c0_32, %c96] : memref<1x17x128xbf16, #tpu.memory_space<vmem>>, vector<1x17x32xbf16>
    %88 = vector.shape_cast %87 : vector<1x17x32xbf16> to vector<17x32xbf16>
    %89 = vector.shape_cast %86 : vector<17x32xbf16> to vector<1x17x32xbf16>
    tpu.vector_store %arg5[%c0_31, %c0_32, %c96], %89 {strides = array<i32>} : memref<1x17x128xbf16, #tpu.memory_space<vmem>>, vector<1x17x32xbf16>,
    return
  }
  func.func @transform_0(%arg0: i32, %arg1: i32) -> (i32, i32, i32) {
    %c0_i32 = arith.constant 0 : i32
    %c0_i32_0 = arith.constant 0 : i32
    return %arg0, %c0_i32, %arg1 : i32, i32, i32
  }
  func.func @transform_1(%arg0: i32, %arg1: i32) -> (i32, i32, i32) {
    %c1_i32 = arith.constant 1 : i32
    %0 = arith.addi %arg1, %c1_i32 : i32
    %c0_i32 = arith.constant 0 : i32
    %c0_i32_0 = arith.constant 0 : i32
    return %arg0, %c0_i32, %0 : i32, i32, i32
  }
  func.func @transform_2(%arg0: i32, %arg1: i32) -> (i32, i32, i32) {
    %c2_i32 = arith.constant 2 : i32
    %0 = arith.addi %arg1, %c2_i32 : i32
    %c0_i32 = arith.constant 0 : i32
    %c0_i32_0 = arith.constant 0 : i32
    return %arg0, %c0_i32, %0 : i32, i32, i32
  }
  func.func @transform_3(%arg0: i32, %arg1: i32) -> (i32, i32, i32) {
    %c0_i32 = arith.constant 0 : i32
    %c0_i32_0 = arith.constant 0 : i32
    return %arg0, %c0_i32, %arg1 : i32, i32, i32
  }
}

module attributes {stable_mosaic.version = 11 : i64} {
  func.func @_ln_matmul_bias_kernel(%arg0: i32, %arg1: i32, %arg2: memref<34x128xf32, #tpu.memory_space<vmem>>, %arg3: memref<1x128xf32, #tpu.memory_space<vmem>>, %arg4: memref<1x128xf32, #tpu.memory_space<vmem>>, %arg5: memref<128x384xbf16, #tpu.memory_space<vmem>>, %arg6: memref<1x384xf32, #tpu.memory_space<vmem>>, %arg7: memref<34x384xbf16, #tpu.memory_space<vmem>>, %arg8: memref<34x128xbf16, #tpu.memory_space<vmem>>) attributes {dimension_semantics = [#tpu.dimension_semantics<parallel>, #tpu.dimension_semantics<arbitrary>], iteration_bounds = array<i64: 1, 1>, scalar_prefetch = 0 : i64, scratch_operands = 1 : i64, tpu.core_type = #tpu.core_type<tc>, window_params = [{transform_indices = @transform_0, window_bounds = array<i64: 34, 128>}, {pipeline_mode = #tpu.pipeline_mode<synchronous>, transform_indices = @transform_1, window_bounds = array<i64: 1, 128>}, {pipeline_mode = #tpu.pipeline_mode<synchronous>, transform_indices = @transform_2, window_bounds = array<i64: 1, 128>}, {transform_indices = @transform_3, window_bounds = array<i64: 128, 384>}, {transform_indices = @transform_4, window_bounds = array<i64: 1, 384>}, {transform_indices = @transform_5, window_bounds = array<i64: 34, 384>}]} {
    %c0_i32 = arith.constant 0 : i32
    %0 = arith.cmpi eq, %arg1, %c0_i32 : i32
    %1 = arith.extui %0 : i1 to i32
    %c0_i32_0 = arith.constant 0 : i32
    %2 = arith.cmpi ne, %1, %c0_i32_0 : i32
    scf.if %2 {
      %c0_8 = arith.constant 0 : index
      %c0_9 = arith.constant 0 : index
      %11 = vector.load %arg2[%c0_8, %c0_9] : memref<34x128xf32, #tpu.memory_space<vmem>>, vector<34x128xf32>
      %cst_10 = arith.constant dense<0.000000e+00> : vector<34xf32>
      %12 = vector.multi_reduction <add>, %11, %cst_10 [1] : vector<34x128xf32> to vector<34xf32>
      %13 = vector.shape_cast %12 : vector<34xf32> to vector<34x1xf32>
      %cst_11 = arith.constant 1.280000e+02 : f32
      %14 = vector.broadcast %cst_11 : f32 to vector<34x1xf32>
      %15 = arith.divf %13, %14 : vector<34x1xf32>
      %16 = vector.broadcast %15 : vector<34x1xf32> to vector<34x128xf32>
      %17 = arith.subf %11, %16 : vector<34x128xf32>
      %18 = arith.mulf %17, %17 : vector<34x128xf32>
      %cst_12 = arith.constant dense<0.000000e+00> : vector<34xf32>
      %19 = vector.multi_reduction <add>, %18, %cst_12 [1] : vector<34x128xf32> to vector<34xf32>
      %20 = vector.shape_cast %19 : vector<34xf32> to vector<34x1xf32>
      %cst_13 = arith.constant 1.280000e+02 : f32
      %21 = vector.broadcast %cst_13 : f32 to vector<34x1xf32>
      %22 = arith.divf %20, %21 : vector<34x1xf32>
      %cst_14 = arith.constant 9.99999974E-6 : f32
      %23 = vector.broadcast %cst_14 : f32 to vector<34x1xf32>
      %24 = arith.addf %22, %23 : vector<34x1xf32>
      %25 = math.rsqrt %24 : vector<34x1xf32>
      %26 = vector.broadcast %15 : vector<34x1xf32> to vector<34x128xf32>
      %27 = arith.subf %11, %26 : vector<34x128xf32>
      %28 = vector.broadcast %25 : vector<34x1xf32> to vector<34x128xf32>
      %29 = arith.mulf %27, %28 : vector<34x128xf32>
      %c0_15 = arith.constant 0 : index
      %c0_16 = arith.constant 0 : index
      %30 = vector.load %arg3[%c0_15, %c0_16] : memref<1x128xf32, #tpu.memory_space<vmem>>, vector<1x128xf32>
      %31 = vector.broadcast %30 : vector<1x128xf32> to vector<34x128xf32>
      %32 = arith.mulf %29, %31 : vector<34x128xf32>
      %c0_17 = arith.constant 0 : index
      %c0_18 = arith.constant 0 : index
      %33 = vector.load %arg4[%c0_17, %c0_18] : memref<1x128xf32, #tpu.memory_space<vmem>>, vector<1x128xf32>
      %34 = vector.broadcast %33 : vector<1x128xf32> to vector<34x128xf32>
      %35 = arith.addf %32, %34 : vector<34x128xf32>
      %36 = arith.truncf %35 : vector<34x128xf32> to vector<34x128xbf16>
      %c0_19 = arith.constant 0 : index
      %c0_20 = arith.constant 0 : index
      %37 = vector.load %arg8[%c0_19, %c0_20] : memref<34x128xbf16, #tpu.memory_space<vmem>>, vector<34x128xbf16>
      tpu.vector_store %arg8[%c0_19, %c0_20], %36 {strides = array<i32>} : memref<34x128xbf16, #tpu.memory_space<vmem>>, vector<34x128xbf16>,
    } else {
    }
    %c0 = arith.constant 0 : index
    %c0_1 = arith.constant 0 : index
    %3 = vector.load %arg8[%c0, %c0_1] : memref<34x128xbf16, #tpu.memory_space<vmem>>, vector<34x128xbf16>
    %c0_2 = arith.constant 0 : index
    %c0_3 = arith.constant 0 : index
    %4 = vector.load %arg5[%c0_2, %c0_3] : memref<128x384xbf16, #tpu.memory_space<vmem>>, vector<128x384xbf16>
    %cst = arith.constant dense<0.000000e+00> : vector<34x384xf32>
    %5 = tpu.matmul %3, %4, %cst {dimension_numbers = #tpu.dot_dimension_numbers<[1], [0], [0], [1], [0, 0, 1, 1], [], []>} : vector<34x128xbf16>, vector<128x384xbf16>, vector<34x384xf32> -> vector<34x384xf32>
    %c0_4 = arith.constant 0 : index
    %c0_5 = arith.constant 0 : index
    %6 = vector.load %arg6[%c0_4, %c0_5] : memref<1x384xf32, #tpu.memory_space<vmem>>, vector<1x384xf32>
    %7 = vector.broadcast %6 : vector<1x384xf32> to vector<34x384xf32>
    %8 = arith.addf %5, %7 : vector<34x384xf32>
    %9 = arith.truncf %8 : vector<34x384xf32> to vector<34x384xbf16>
    %c0_6 = arith.constant 0 : index
    %c0_7 = arith.constant 0 : index
    %10 = vector.load %arg7[%c0_6, %c0_7] : memref<34x384xbf16, #tpu.memory_space<vmem>>, vector<34x384xbf16>
    tpu.vector_store %arg7[%c0_6, %c0_7], %9 {strides = array<i32>} : memref<34x384xbf16, #tpu.memory_space<vmem>>, vector<34x384xbf16>,
    return
  }
  func.func @transform_0(%arg0: i32, %arg1: i32) -> (i32, i32) {
    %c0_i32 = arith.constant 0 : i32
    %c0_i32_0 = arith.constant 0 : i32
    return %arg0, %c0_i32 : i32, i32
  }
  func.func @transform_1(%arg0: i32, %arg1: i32) -> (i32, i32) {
    %c0_i32 = arith.constant 0 : i32
    %c0_i32_0 = arith.constant 0 : i32
    %c0_i32_1 = arith.constant 0 : i32
    return %c0_i32, %c0_i32_0 : i32, i32
  }
  func.func @transform_2(%arg0: i32, %arg1: i32) -> (i32, i32) {
    %c0_i32 = arith.constant 0 : i32
    %c0_i32_0 = arith.constant 0 : i32
    %c0_i32_1 = arith.constant 0 : i32
    return %c0_i32, %c0_i32_0 : i32, i32
  }
  func.func @transform_3(%arg0: i32, %arg1: i32) -> (i32, i32) {
    %c0_i32 = arith.constant 0 : i32
    %c0_i32_0 = arith.constant 0 : i32
    return %c0_i32, %arg1 : i32, i32
  }
  func.func @transform_4(%arg0: i32, %arg1: i32) -> (i32, i32) {
    %c0_i32 = arith.constant 0 : i32
    %c0_i32_0 = arith.constant 0 : i32
    return %c0_i32, %arg1 : i32, i32
  }
  func.func @transform_5(%arg0: i32, %arg1: i32) -> (i32, i32) {
    %c0_i32 = arith.constant 0 : i32
    return %arg0, %arg1 : i32, i32
  }
}

module attributes {stable_mosaic.version = 11 : i64} {
  func.func @_ln_pre_kernel(%arg0: i32, %arg1: memref<1x17x128xf32, #tpu.memory_space<vmem>>, %arg2: memref<1x17x128xf32, #tpu.memory_space<vmem>>, %arg3: memref<1x128xf32, #tpu.memory_space<vmem>>, %arg4: memref<1x128xf32, #tpu.memory_space<vmem>>, %arg5: memref<1x17x128xf32, #tpu.memory_space<vmem>>) attributes {dimension_semantics = [#tpu.dimension_semantics<parallel>], iteration_bounds = array<i64: 2>, scalar_prefetch = 0 : i64, scratch_operands = 0 : i64, tpu.core_type = #tpu.core_type<tc>, window_params = [{transform_indices = @transform_0, window_bounds = array<i64: 1, 17, 128>}, {pipeline_mode = #tpu.pipeline_mode<synchronous>, transform_indices = @transform_1, window_bounds = array<i64: 1, 17, 128>}, {pipeline_mode = #tpu.pipeline_mode<synchronous>, transform_indices = @transform_2, window_bounds = array<i64: 1, 128>}, {pipeline_mode = #tpu.pipeline_mode<synchronous>, transform_indices = @transform_3, window_bounds = array<i64: 1, 128>}, {transform_indices = @transform_4, window_bounds = array<i64: 1, 17, 128>}]} {
    %c0 = arith.constant 0 : index
    %c0_0 = arith.constant 0 : index
    %c0_1 = arith.constant 0 : index
    %0 = vector.load %arg1[%c0, %c0_0, %c0_1] : memref<1x17x128xf32, #tpu.memory_space<vmem>>, vector<1x17x128xf32>
    %1 = vector.shape_cast %0 : vector<1x17x128xf32> to vector<17x128xf32>
    %c0_2 = arith.constant 0 : index
    %c0_3 = arith.constant 0 : index
    %c0_4 = arith.constant 0 : index
    %2 = vector.load %arg2[%c0_2, %c0_3, %c0_4] : memref<1x17x128xf32, #tpu.memory_space<vmem>>, vector<1x17x128xf32>
    %3 = vector.shape_cast %2 : vector<1x17x128xf32> to vector<17x128xf32>
    %4 = arith.addf %1, %3 : vector<17x128xf32>
    %cst = arith.constant dense<0.000000e+00> : vector<17xf32>
    %5 = vector.multi_reduction <add>, %4, %cst [1] : vector<17x128xf32> to vector<17xf32>
    %6 = vector.shape_cast %5 : vector<17xf32> to vector<17x1xf32>
    %cst_5 = arith.constant 1.280000e+02 : f32
    %7 = vector.broadcast %cst_5 : f32 to vector<17x1xf32>
    %8 = arith.divf %6, %7 : vector<17x1xf32>
    %9 = vector.broadcast %8 : vector<17x1xf32> to vector<17x128xf32>
    %10 = arith.subf %4, %9 : vector<17x128xf32>
    %11 = arith.mulf %10, %10 : vector<17x128xf32>
    %cst_6 = arith.constant dense<0.000000e+00> : vector<17xf32>
    %12 = vector.multi_reduction <add>, %11, %cst_6 [1] : vector<17x128xf32> to vector<17xf32>
    %13 = vector.shape_cast %12 : vector<17xf32> to vector<17x1xf32>
    %cst_7 = arith.constant 1.280000e+02 : f32
    %14 = vector.broadcast %cst_7 : f32 to vector<17x1xf32>
    %15 = arith.divf %13, %14 : vector<17x1xf32>
    %cst_8 = arith.constant 9.99999974E-6 : f32
    %16 = vector.broadcast %cst_8 : f32 to vector<17x1xf32>
    %17 = arith.addf %15, %16 : vector<17x1xf32>
    %18 = math.rsqrt %17 : vector<17x1xf32>
    %19 = vector.broadcast %8 : vector<17x1xf32> to vector<17x128xf32>
    %20 = arith.subf %4, %19 : vector<17x128xf32>
    %21 = vector.broadcast %18 : vector<17x1xf32> to vector<17x128xf32>
    %22 = arith.mulf %20, %21 : vector<17x128xf32>
    %c0_9 = arith.constant 0 : index
    %c0_10 = arith.constant 0 : index
    %23 = vector.load %arg3[%c0_9, %c0_10] : memref<1x128xf32, #tpu.memory_space<vmem>>, vector<1x128xf32>
    %24 = vector.broadcast %23 : vector<1x128xf32> to vector<17x128xf32>
    %25 = arith.mulf %22, %24 : vector<17x128xf32>
    %c0_11 = arith.constant 0 : index
    %c0_12 = arith.constant 0 : index
    %26 = vector.load %arg4[%c0_11, %c0_12] : memref<1x128xf32, #tpu.memory_space<vmem>>, vector<1x128xf32>
    %27 = vector.broadcast %26 : vector<1x128xf32> to vector<17x128xf32>
    %28 = arith.addf %25, %27 : vector<17x128xf32>
    %c0_13 = arith.constant 0 : index
    %c0_14 = arith.constant 0 : index
    %c0_15 = arith.constant 0 : index
    %29 = vector.load %arg5[%c0_13, %c0_14, %c0_15] : memref<1x17x128xf32, #tpu.memory_space<vmem>>, vector<1x17x128xf32>
    %30 = vector.shape_cast %29 : vector<1x17x128xf32> to vector<17x128xf32>
    %31 = vector.shape_cast %28 : vector<17x128xf32> to vector<1x17x128xf32>
    tpu.vector_store %arg5[%c0_13, %c0_14, %c0_15], %31 {strides = array<i32>} : memref<1x17x128xf32, #tpu.memory_space<vmem>>, vector<1x17x128xf32>,
    return
  }
  func.func @transform_0(%arg0: i32) -> (i32, i32, i32) {
    %c0_i32 = arith.constant 0 : i32
    %c0_i32_0 = arith.constant 0 : i32
    %c0_i32_1 = arith.constant 0 : i32
    return %arg0, %c0_i32, %c0_i32_0 : i32, i32, i32
  }
  func.func @transform_1(%arg0: i32) -> (i32, i32, i32) {
    %c0_i32 = arith.constant 0 : i32
    %c0_i32_0 = arith.constant 0 : i32
    %c0_i32_1 = arith.constant 0 : i32
    %c0_i32_2 = arith.constant 0 : i32
    return %c0_i32, %c0_i32_0, %c0_i32_1 : i32, i32, i32
  }
  func.func @transform_2(%arg0: i32) -> (i32, i32) {
    %c0_i32 = arith.constant 0 : i32
    %c0_i32_0 = arith.constant 0 : i32
    %c0_i32_1 = arith.constant 0 : i32
    return %c0_i32, %c0_i32_0 : i32, i32
  }
  func.func @transform_3(%arg0: i32) -> (i32, i32) {
    %c0_i32 = arith.constant 0 : i32
    %c0_i32_0 = arith.constant 0 : i32
    %c0_i32_1 = arith.constant 0 : i32
    return %c0_i32, %c0_i32_0 : i32, i32
  }
  func.func @transform_4(%arg0: i32) -> (i32, i32, i32) {
    %c0_i32 = arith.constant 0 : i32
    %c0_i32_0 = arith.constant 0 : i32
    %c0_i32_1 = arith.constant 0 : i32
    return %arg0, %c0_i32, %c0_i32_0 : i32, i32, i32
  }
}

module attributes {stable_mosaic.version = 11 : i64} {
  func.func @_matmul_bias_res_kernel(%arg0: i32, %arg1: i32, %arg2: memref<34x128xbf16, #tpu.memory_space<vmem>>, %arg3: memref<128x128xbf16, #tpu.memory_space<vmem>>, %arg4: memref<1x128xf32, #tpu.memory_space<vmem>>, %arg5: memref<34x128xf32, #tpu.memory_space<vmem>>, %arg6: memref<34x128xf32, #tpu.memory_space<vmem>>) attributes {dimension_semantics = [#tpu.dimension_semantics<parallel>, #tpu.dimension_semantics<parallel>], iteration_bounds = array<i64: 1, 1>, scalar_prefetch = 0 : i64, scratch_operands = 0 : i64, tpu.core_type = #tpu.core_type<tc>, window_params = [{transform_indices = @transform_0, window_bounds = array<i64: 34, 128>}, {transform_indices = @transform_1, window_bounds = array<i64: 128, 128>}, {transform_indices = @transform_2, window_bounds = array<i64: 1, 128>}, {transform_indices = @transform_3, window_bounds = array<i64: 34, 128>}, {transform_indices = @transform_4, window_bounds = array<i64: 34, 128>}]} {
    %c0 = arith.constant 0 : index
    %c0_0 = arith.constant 0 : index
    %0 = vector.load %arg2[%c0, %c0_0] : memref<34x128xbf16, #tpu.memory_space<vmem>>, vector<34x128xbf16>
    %c0_1 = arith.constant 0 : index
    %c0_2 = arith.constant 0 : index
    %1 = vector.load %arg3[%c0_1, %c0_2] : memref<128x128xbf16, #tpu.memory_space<vmem>>, vector<128x128xbf16>
    %cst = arith.constant dense<0.000000e+00> : vector<34x128xf32>
    %2 = tpu.matmul %0, %1, %cst {dimension_numbers = #tpu.dot_dimension_numbers<[1], [0], [0], [1], [0, 0, 1, 1], [], []>} : vector<34x128xbf16>, vector<128x128xbf16>, vector<34x128xf32> -> vector<34x128xf32>
    %c0_3 = arith.constant 0 : index
    %c0_4 = arith.constant 0 : index
    %3 = vector.load %arg4[%c0_3, %c0_4] : memref<1x128xf32, #tpu.memory_space<vmem>>, vector<1x128xf32>
    %4 = vector.broadcast %3 : vector<1x128xf32> to vector<34x128xf32>
    %5 = arith.addf %2, %4 : vector<34x128xf32>
    %c0_5 = arith.constant 0 : index
    %c0_6 = arith.constant 0 : index
    %6 = vector.load %arg5[%c0_5, %c0_6] : memref<34x128xf32, #tpu.memory_space<vmem>>, vector<34x128xf32>
    %7 = arith.addf %5, %6 : vector<34x128xf32>
    %c0_7 = arith.constant 0 : index
    %c0_8 = arith.constant 0 : index
    %8 = vector.load %arg6[%c0_7, %c0_8] : memref<34x128xf32, #tpu.memory_space<vmem>>, vector<34x128xf32>
    tpu.vector_store %arg6[%c0_7, %c0_8], %7 {strides = array<i32>} : memref<34x128xf32, #tpu.memory_space<vmem>>, vector<34x128xf32>,
    return
  }
  func.func @transform_0(%arg0: i32, %arg1: i32) -> (i32, i32) {
    %c0_i32 = arith.constant 0 : i32
    %c0_i32_0 = arith.constant 0 : i32
    return %arg0, %c0_i32 : i32, i32
  }
  func.func @transform_1(%arg0: i32, %arg1: i32) -> (i32, i32) {
    %c0_i32 = arith.constant 0 : i32
    %c0_i32_0 = arith.constant 0 : i32
    return %c0_i32, %arg1 : i32, i32
  }
  func.func @transform_2(%arg0: i32, %arg1: i32) -> (i32, i32) {
    %c0_i32 = arith.constant 0 : i32
    %c0_i32_0 = arith.constant 0 : i32
    return %c0_i32, %arg1 : i32, i32
  }
  func.func @transform_3(%arg0: i32, %arg1: i32) -> (i32, i32) {
    %c0_i32 = arith.constant 0 : i32
    return %arg0, %arg1 : i32, i32
  }
  func.func @transform_4(%arg0: i32, %arg1: i32) -> (i32, i32) {
    %c0_i32 = arith.constant 0 : i32
    return %arg0, %arg1 : i32, i32
  }
}

module attributes {stable_mosaic.version = 11 : i64} {
  func.func @_mlp_block_kernel(%arg0: i32, %arg1: i32, %arg2: memref<34x128xf32, #tpu.memory_space<vmem>>, %arg3: memref<1x128xf32, #tpu.memory_space<vmem>>, %arg4: memref<1x128xf32, #tpu.memory_space<vmem>>, %arg5: memref<128x512xbf16, #tpu.memory_space<vmem>>, %arg6: memref<1x512xf32, #tpu.memory_space<vmem>>, %arg7: memref<512x128xbf16, #tpu.memory_space<vmem>>, %arg8: memref<1x128xf32, #tpu.memory_space<vmem>>, %arg9: memref<34x128xf32, #tpu.memory_space<vmem>>, %arg10: memref<34x128xbf16, #tpu.memory_space<vmem>>, %arg11: memref<34x128xf32, #tpu.memory_space<vmem>>) attributes {dimension_semantics = [#tpu.dimension_semantics<parallel>, #tpu.dimension_semantics<arbitrary>], iteration_bounds = array<i64: 1, 1>, scalar_prefetch = 0 : i64, scratch_operands = 2 : i64, tpu.core_type = #tpu.core_type<tc>, window_params = [{transform_indices = @transform_0, window_bounds = array<i64: 34, 128>}, {pipeline_mode = #tpu.pipeline_mode<synchronous>, transform_indices = @transform_1, window_bounds = array<i64: 1, 128>}, {pipeline_mode = #tpu.pipeline_mode<synchronous>, transform_indices = @transform_2, window_bounds = array<i64: 1, 128>}, {transform_indices = @transform_3, window_bounds = array<i64: 128, 512>}, {transform_indices = @transform_4, window_bounds = array<i64: 1, 512>}, {transform_indices = @transform_5, window_bounds = array<i64: 512, 128>}, {pipeline_mode = #tpu.pipeline_mode<synchronous>, transform_indices = @transform_6, window_bounds = array<i64: 1, 128>}, {transform_indices = @transform_7, window_bounds = array<i64: 34, 128>}]} {
    %c0_i32 = arith.constant 0 : i32
    %0 = arith.cmpi eq, %arg1, %c0_i32 : i32
    %1 = arith.extui %0 : i1 to i32
    %c0_i32_0 = arith.constant 0 : i32
    %2 = arith.cmpi ne, %1, %c0_i32_0 : i32
    scf.if %2 {
      %c0_17 = arith.constant 0 : index
      %c0_18 = arith.constant 0 : index
      %26 = vector.load %arg2[%c0_17, %c0_18] : memref<34x128xf32, #tpu.memory_space<vmem>>, vector<34x128xf32>
      %cst_19 = arith.constant dense<0.000000e+00> : vector<34xf32>
      %27 = vector.multi_reduction <add>, %26, %cst_19 [1] : vector<34x128xf32> to vector<34xf32>
      %28 = vector.shape_cast %27 : vector<34xf32> to vector<34x1xf32>
      %cst_20 = arith.constant 1.280000e+02 : f32
      %29 = vector.broadcast %cst_20 : f32 to vector<34x1xf32>
      %30 = arith.divf %28, %29 : vector<34x1xf32>
      %31 = vector.broadcast %30 : vector<34x1xf32> to vector<34x128xf32>
      %32 = arith.subf %26, %31 : vector<34x128xf32>
      %33 = arith.mulf %32, %32 : vector<34x128xf32>
      %cst_21 = arith.constant dense<0.000000e+00> : vector<34xf32>
      %34 = vector.multi_reduction <add>, %33, %cst_21 [1] : vector<34x128xf32> to vector<34xf32>
      %35 = vector.shape_cast %34 : vector<34xf32> to vector<34x1xf32>
      %cst_22 = arith.constant 1.280000e+02 : f32
      %36 = vector.broadcast %cst_22 : f32 to vector<34x1xf32>
      %37 = arith.divf %35, %36 : vector<34x1xf32>
      %cst_23 = arith.constant 9.99999974E-6 : f32
      %38 = vector.broadcast %cst_23 : f32 to vector<34x1xf32>
      %39 = arith.addf %37, %38 : vector<34x1xf32>
      %40 = math.rsqrt %39 : vector<34x1xf32>
      %41 = vector.broadcast %30 : vector<34x1xf32> to vector<34x128xf32>
      %42 = arith.subf %26, %41 : vector<34x128xf32>
      %43 = vector.broadcast %40 : vector<34x1xf32> to vector<34x128xf32>
      %44 = arith.mulf %42, %43 : vector<34x128xf32>
      %c0_24 = arith.constant 0 : index
      %c0_25 = arith.constant 0 : index
      %45 = vector.load %arg3[%c0_24, %c0_25] : memref<1x128xf32, #tpu.memory_space<vmem>>, vector<1x128xf32>
      %46 = vector.broadcast %45 : vector<1x128xf32> to vector<34x128xf32>
      %47 = arith.mulf %44, %46 : vector<34x128xf32>
      %c0_26 = arith.constant 0 : index
      %c0_27 = arith.constant 0 : index
      %48 = vector.load %arg4[%c0_26, %c0_27] : memref<1x128xf32, #tpu.memory_space<vmem>>, vector<1x128xf32>
      %49 = vector.broadcast %48 : vector<1x128xf32> to vector<34x128xf32>
      %50 = arith.addf %47, %49 : vector<34x128xf32>
      %51 = arith.truncf %50 : vector<34x128xf32> to vector<34x128xbf16>
      %c0_28 = arith.constant 0 : index
      %c0_29 = arith.constant 0 : index
      %52 = vector.load %arg10[%c0_28, %c0_29] : memref<34x128xbf16, #tpu.memory_space<vmem>>, vector<34x128xbf16>
      tpu.vector_store %arg10[%c0_28, %c0_29], %51 {strides = array<i32>} : memref<34x128xbf16, #tpu.memory_space<vmem>>, vector<34x128xbf16>,
      %cst_30 = arith.constant 0.000000e+00 : f32
      %53 = vector.broadcast %cst_30 : f32 to vector<34x128xf32>
      %c0_31 = arith.constant 0 : index
      %c0_32 = arith.constant 0 : index
      %54 = vector.load %arg11[%c0_31, %c0_32] : memref<34x128xf32, #tpu.memory_space<vmem>>, vector<34x128xf32>
      tpu.vector_store %arg11[%c0_31, %c0_32], %53 {strides = array<i32>} : memref<34x128xf32, #tpu.memory_space<vmem>>, vector<34x128xf32>,
    } else {
    }
    %c0 = arith.constant 0 : index
    %c0_1 = arith.constant 0 : index
    %3 = vector.load %arg10[%c0, %c0_1] : memref<34x128xbf16, #tpu.memory_space<vmem>>, vector<34x128xbf16>
    %c0_2 = arith.constant 0 : index
    %c0_3 = arith.constant 0 : index
    %4 = vector.load %arg5[%c0_2, %c0_3] : memref<128x512xbf16, #tpu.memory_space<vmem>>, vector<128x512xbf16>
    %cst = arith.constant dense<0.000000e+00> : vector<34x512xf32>
    %5 = tpu.matmul %3, %4, %cst {dimension_numbers = #tpu.dot_dimension_numbers<[1], [0], [0], [1], [0, 0, 1, 1], [], []>} : vector<34x128xbf16>, vector<128x512xbf16>, vector<34x512xf32> -> vector<34x512xf32>
    %c0_4 = arith.constant 0 : index
    %c0_5 = arith.constant 0 : index
    %6 = vector.load %arg6[%c0_4, %c0_5] : memref<1x512xf32, #tpu.memory_space<vmem>>, vector<1x512xf32>
    %7 = vector.broadcast %6 : vector<1x512xf32> to vector<34x512xf32>
    %8 = arith.addf %5, %7 : vector<34x512xf32>
    %cst_6 = arith.constant 1.702000e+00 : f32
    %9 = vector.broadcast %cst_6 : f32 to vector<34x512xf32>
    %10 = arith.mulf %9, %8 : vector<34x512xf32>
    %11 = arith.negf %10 : vector<34x512xf32>
    %12 = math.exp %11 : vector<34x512xf32>
    %cst_7 = arith.constant 1.000000e+00 : f32
    %13 = vector.broadcast %cst_7 : f32 to vector<34x512xf32>
    %14 = arith.addf %13, %12 : vector<34x512xf32>
    %15 = arith.divf %13, %14 : vector<34x512xf32>
    %16 = arith.mulf %8, %15 : vector<34x512xf32>
    %c0_8 = arith.constant 0 : index
    %c0_9 = arith.constant 0 : index
    %17 = vector.load %arg11[%c0_8, %c0_9] : memref<34x128xf32, #tpu.memory_space<vmem>>, vector<34x128xf32>
    %18 = arith.truncf %16 : vector<34x512xf32> to vector<34x512xbf16>
    %c0_10 = arith.constant 0 : index
    %c0_11 = arith.constant 0 : index
    %19 = vector.load %arg7[%c0_10, %c0_11] : memref<512x128xbf16, #tpu.memory_space<vmem>>, vector<512x128xbf16>
    %cst_12 = arith.constant dense<0.000000e+00> : vector<34x128xf32>
    %20 = tpu.matmul %18, %19, %cst_12 {dimension_numbers = #tpu.dot_dimension_numbers<[1], [0], [0], [1], [0, 0, 1, 1], [], []>} : vector<34x512xbf16>, vector<512x128xbf16>, vector<34x128xf32> -> vector<34x128xf32>
    %21 = arith.addf %17, %20 : vector<34x128xf32>
    %c0_13 = arith.constant 0 : index
    %c0_14 = arith.constant 0 : index
    %22 = vector.load %arg11[%c0_13, %c0_14] : memref<34x128xf32, #tpu.memory_space<vmem>>, vector<34x128xf32>
    tpu.vector_store %arg11[%c0_13, %c0_14], %21 {strides = array<i32>} : memref<34x128xf32, #tpu.memory_space<vmem>>, vector<34x128xf32>,
    %c0_i32_15 = arith.constant 0 : i32
    %23 = arith.cmpi eq, %arg1, %c0_i32_15 : i32
    %24 = arith.extui %23 : i1 to i32
    %c0_i32_16 = arith.constant 0 : i32
    %25 = arith.cmpi ne, %24, %c0_i32_16 : i32
    scf.if %25 {
      %c0_17 = arith.constant 0 : index
      %c0_18 = arith.constant 0 : index
      %26 = vector.load %arg11[%c0_17, %c0_18] : memref<34x128xf32, #tpu.memory_space<vmem>>, vector<34x128xf32>
      %c0_19 = arith.constant 0 : index
      %c0_20 = arith.constant 0 : index
      %27 = vector.load %arg8[%c0_19, %c0_20] : memref<1x128xf32, #tpu.memory_space<vmem>>, vector<1x128xf32>
      %28 = vector.broadcast %27 : vector<1x128xf32> to vector<34x128xf32>
      %29 = arith.addf %26, %28 : vector<34x128xf32>
      %c0_21 = arith.constant 0 : index
      %c0_22 = arith.constant 0 : index
      %30 = vector.load %arg2[%c0_21, %c0_22] : memref<34x128xf32, #tpu.memory_space<vmem>>, vector<34x128xf32>
      %31 = arith.addf %29, %30 : vector<34x128xf32>
      %c0_23 = arith.constant 0 : index
      %c0_24 = arith.constant 0 : index
      %32 = vector.load %arg9[%c0_23, %c0_24] : memref<34x128xf32, #tpu.memory_space<vmem>>, vector<34x128xf32>
      tpu.vector_store %arg9[%c0_23, %c0_24], %31 {strides = array<i32>} : memref<34x128xf32, #tpu.memory_space<vmem>>, vector<34x128xf32>,
    } else {
    }
    return
  }
  func.func @transform_0(%arg0: i32, %arg1: i32) -> (i32, i32) {
    %c0_i32 = arith.constant 0 : i32
    %c0_i32_0 = arith.constant 0 : i32
    return %arg0, %c0_i32 : i32, i32
  }
  func.func @transform_1(%arg0: i32, %arg1: i32) -> (i32, i32) {
    %c0_i32 = arith.constant 0 : i32
    %c0_i32_0 = arith.constant 0 : i32
    %c0_i32_1 = arith.constant 0 : i32
    return %c0_i32, %c0_i32_0 : i32, i32
  }
  func.func @transform_2(%arg0: i32, %arg1: i32) -> (i32, i32) {
    %c0_i32 = arith.constant 0 : i32
    %c0_i32_0 = arith.constant 0 : i32
    %c0_i32_1 = arith.constant 0 : i32
    return %c0_i32, %c0_i32_0 : i32, i32
  }
  func.func @transform_3(%arg0: i32, %arg1: i32) -> (i32, i32) {
    %c0_i32 = arith.constant 0 : i32
    %c0_i32_0 = arith.constant 0 : i32
    return %c0_i32, %arg1 : i32, i32
  }
  func.func @transform_4(%arg0: i32, %arg1: i32) -> (i32, i32) {
    %c0_i32 = arith.constant 0 : i32
    %c0_i32_0 = arith.constant 0 : i32
    return %c0_i32, %arg1 : i32, i32
  }
  func.func @transform_5(%arg0: i32, %arg1: i32) -> (i32, i32) {
    %c0_i32 = arith.constant 0 : i32
    %c0_i32_0 = arith.constant 0 : i32
    return %arg1, %c0_i32 : i32, i32
  }
  func.func @transform_6(%arg0: i32, %arg1: i32) -> (i32, i32) {
    %c0_i32 = arith.constant 0 : i32
    %c0_i32_0 = arith.constant 0 : i32
    %c0_i32_1 = arith.constant 0 : i32
    return %c0_i32, %c0_i32_0 : i32, i32
  }
  func.func @transform_7(%arg0: i32, %arg1: i32) -> (i32, i32) {
    %c0_i32 = arith.constant 0 : i32
    %c0_i32_0 = arith.constant 0 : i32
    return %arg0, %c0_i32 : i32, i32
  }
}

module attributes {stable_mosaic.version = 11 : i64} {
  func.func @_ln_matmul_bias_kernel(%arg0: i32, %arg1: i32, %arg2: memref<2x128xf32, #tpu.memory_space<vmem>>, %arg3: memref<1x128xf32, #tpu.memory_space<vmem>>, %arg4: memref<1x128xf32, #tpu.memory_space<vmem>>, %arg5: memref<128x64xbf16, #tpu.memory_space<vmem>>, %arg6: memref<1x64xf32, #tpu.memory_space<vmem>>, %arg7: memref<2x64xf32, #tpu.memory_space<vmem>>, %arg8: memref<2x128xbf16, #tpu.memory_space<vmem>>) attributes {dimension_semantics = [#tpu.dimension_semantics<parallel>, #tpu.dimension_semantics<arbitrary>], iteration_bounds = array<i64: 1, 1>, scalar_prefetch = 0 : i64, scratch_operands = 1 : i64, tpu.core_type = #tpu.core_type<tc>, window_params = [{transform_indices = @transform_0, window_bounds = array<i64: 2, 128>}, {pipeline_mode = #tpu.pipeline_mode<synchronous>, transform_indices = @transform_1, window_bounds = array<i64: 1, 128>}, {pipeline_mode = #tpu.pipeline_mode<synchronous>, transform_indices = @transform_2, window_bounds = array<i64: 1, 128>}, {transform_indices = @transform_3, window_bounds = array<i64: 128, 64>}, {transform_indices = @transform_4, window_bounds = array<i64: 1, 64>}, {transform_indices = @transform_5, window_bounds = array<i64: 2, 64>}]} {
    %c0_i32 = arith.constant 0 : i32
    %0 = arith.cmpi eq, %arg1, %c0_i32 : i32
    %1 = arith.extui %0 : i1 to i32
    %c0_i32_0 = arith.constant 0 : i32
    %2 = arith.cmpi ne, %1, %c0_i32_0 : i32
    scf.if %2 {
      %c0_8 = arith.constant 0 : index
      %c0_9 = arith.constant 0 : index
      %10 = vector.load %arg2[%c0_8, %c0_9] : memref<2x128xf32, #tpu.memory_space<vmem>>, vector<2x128xf32>
      %cst_10 = arith.constant dense<0.000000e+00> : vector<2xf32>
      %11 = vector.multi_reduction <add>, %10, %cst_10 [1] : vector<2x128xf32> to vector<2xf32>
      %12 = vector.shape_cast %11 : vector<2xf32> to vector<2x1xf32>
      %cst_11 = arith.constant 1.280000e+02 : f32
      %13 = vector.broadcast %cst_11 : f32 to vector<2x1xf32>
      %14 = arith.divf %12, %13 : vector<2x1xf32>
      %15 = vector.broadcast %14 : vector<2x1xf32> to vector<2x128xf32>
      %16 = arith.subf %10, %15 : vector<2x128xf32>
      %17 = arith.mulf %16, %16 : vector<2x128xf32>
      %cst_12 = arith.constant dense<0.000000e+00> : vector<2xf32>
      %18 = vector.multi_reduction <add>, %17, %cst_12 [1] : vector<2x128xf32> to vector<2xf32>
      %19 = vector.shape_cast %18 : vector<2xf32> to vector<2x1xf32>
      %cst_13 = arith.constant 1.280000e+02 : f32
      %20 = vector.broadcast %cst_13 : f32 to vector<2x1xf32>
      %21 = arith.divf %19, %20 : vector<2x1xf32>
      %cst_14 = arith.constant 9.99999974E-6 : f32
      %22 = vector.broadcast %cst_14 : f32 to vector<2x1xf32>
      %23 = arith.addf %21, %22 : vector<2x1xf32>
      %24 = math.rsqrt %23 : vector<2x1xf32>
      %25 = vector.broadcast %14 : vector<2x1xf32> to vector<2x128xf32>
      %26 = arith.subf %10, %25 : vector<2x128xf32>
      %27 = vector.broadcast %24 : vector<2x1xf32> to vector<2x128xf32>
      %28 = arith.mulf %26, %27 : vector<2x128xf32>
      %c0_15 = arith.constant 0 : index
      %c0_16 = arith.constant 0 : index
      %29 = vector.load %arg3[%c0_15, %c0_16] : memref<1x128xf32, #tpu.memory_space<vmem>>, vector<1x128xf32>
      %30 = vector.broadcast %29 : vector<1x128xf32> to vector<2x128xf32>
      %31 = arith.mulf %28, %30 : vector<2x128xf32>
      %c0_17 = arith.constant 0 : index
      %c0_18 = arith.constant 0 : index
      %32 = vector.load %arg4[%c0_17, %c0_18] : memref<1x128xf32, #tpu.memory_space<vmem>>, vector<1x128xf32>
      %33 = vector.broadcast %32 : vector<1x128xf32> to vector<2x128xf32>
      %34 = arith.addf %31, %33 : vector<2x128xf32>
      %35 = arith.truncf %34 : vector<2x128xf32> to vector<2x128xbf16>
      %c0_19 = arith.constant 0 : index
      %c0_20 = arith.constant 0 : index
      %36 = vector.load %arg8[%c0_19, %c0_20] : memref<2x128xbf16, #tpu.memory_space<vmem>>, vector<2x128xbf16>
      tpu.vector_store %arg8[%c0_19, %c0_20], %35 {strides = array<i32>} : memref<2x128xbf16, #tpu.memory_space<vmem>>, vector<2x128xbf16>,
    } else {
    }
    %c0 = arith.constant 0 : index
    %c0_1 = arith.constant 0 : index
    %3 = vector.load %arg8[%c0, %c0_1] : memref<2x128xbf16, #tpu.memory_space<vmem>>, vector<2x128xbf16>
    %c0_2 = arith.constant 0 : index
    %c0_3 = arith.constant 0 : index
    %4 = vector.load %arg5[%c0_2, %c0_3] : memref<128x64xbf16, #tpu.memory_space<vmem>>, vector<128x64xbf16>
    %cst = arith.constant dense<0.000000e+00> : vector<2x64xf32>
    %5 = tpu.matmul %3, %4, %cst {dimension_numbers = #tpu.dot_dimension_numbers<[1], [0], [0], [1], [0, 0, 1, 1], [], []>} : vector<2x128xbf16>, vector<128x64xbf16>, vector<2x64xf32> -> vector<2x64xf32>
    %c0_4 = arith.constant 0 : index
    %c0_5 = arith.constant 0 : index
    %6 = vector.load %arg6[%c0_4, %c0_5] : memref<1x64xf32, #tpu.memory_space<vmem>>, vector<1x64xf32>
    %7 = vector.broadcast %6 : vector<1x64xf32> to vector<2x64xf32>
    %8 = arith.addf %5, %7 : vector<2x64xf32>
    %c0_6 = arith.constant 0 : index
    %c0_7 = arith.constant 0 : index
    %9 = vector.load %arg7[%c0_6, %c0_7] : memref<2x64xf32, #tpu.memory_space<vmem>>, vector<2x64xf32>
    tpu.vector_store %arg7[%c0_6, %c0_7], %8 {strides = array<i32>} : memref<2x64xf32, #tpu.memory_space<vmem>>, vector<2x64xf32>,
    return
  }
  func.func @transform_0(%arg0: i32, %arg1: i32) -> (i32, i32) {
    %c0_i32 = arith.constant 0 : i32
    %c0_i32_0 = arith.constant 0 : i32
    return %arg0, %c0_i32 : i32, i32
  }
  func.func @transform_1(%arg0: i32, %arg1: i32) -> (i32, i32) {
    %c0_i32 = arith.constant 0 : i32
    %c0_i32_0 = arith.constant 0 : i32
    %c0_i32_1 = arith.constant 0 : i32
    return %c0_i32, %c0_i32_0 : i32, i32
  }
  func.func @transform_2(%arg0: i32, %arg1: i32) -> (i32, i32) {
    %c0_i32 = arith.constant 0 : i32
    %c0_i32_0 = arith.constant 0 : i32
    %c0_i32_1 = arith.constant 0 : i32
    return %c0_i32, %c0_i32_0 : i32, i32
  }
  func.func @transform_3(%arg0: i32, %arg1: i32) -> (i32, i32) {
    %c0_i32 = arith.constant 0 : i32
    %c0_i32_0 = arith.constant 0 : i32
    return %c0_i32, %arg1 : i32, i32
  }
  func.func @transform_4(%arg0: i32, %arg1: i32) -> (i32, i32) {
    %c0_i32 = arith.constant 0 : i32
    %c0_i32_0 = arith.constant 0 : i32
    return %c0_i32, %arg1 : i32, i32
  }
  func.func @transform_5(%arg0: i32, %arg1: i32) -> (i32, i32) {
    %c0_i32 = arith.constant 0 : i32
    return %arg0, %arg1 : i32, i32
  }
}

</mosaic_0001>

<llo_original>
// kernel: encode_image.12
$region0: #{encode_image.12}
  #allocation0 [shape = 'u32[]', space=smem, size = 0x4, offset = 0x4, fixed_abs, tag = 'smem constant byte address 0x4 - core index']
  #allocation1 [shape = 'u32[144,128]{1,0:T(1,128)}', space=vmem, size = 0x12000, scoped, tag = 'internal scratch']
  %s0 = inlined_call_operand.vmem [shape: f32[2,17,128], index: 0, kind: input, shape index: {}]
  %s1 = inlined_call_operand.vmem [shape: f32[1,17,128], index: 1, kind: input, shape index: {}]
  %s2 = inlined_call_operand.vmem [shape: f32[1,128], index: 2, kind: input, shape index: {}]
  %s3 = inlined_call_operand.vmem [shape: f32[1,128], index: 3, kind: input, shape index: {}]
  %s4 = inlined_call_operand.vmem [shape: f32[2,17,128], index: 4, kind: output, shape index: {}]
  %s5 = sld [smem:[#allocation0]]
  $region49: #{encode_image.12} parent=0
    _
  %s7 = ssub.s32 1, %s5
  %s8 = scalar_select 0, %s7, %s5
  loop: start=0, step=1, limit=4
  $region2: #{encode_image.12} parent=0 // loop_pre_header
    _
  $region3: #{encode_image.12} parent=0 // loop_header
    %s10 = sphi 0, %s14
    %p11 = scmp.ge.s32.totalorder %s10, 4
    %s20 = sphi 0, %s22
    %s23 = sphi 0, %s20
    %s24 = sphi 0, %s23
    %s40 = sphi 0, %s24
    %s44 = sphi 0, %s44
    %s46 = sphi 0, %s44
    %s47 = sphi 0, %s46
    %s61 = sphi 0, %s47
    %s65 = sphi 0, %s65
    %s67 = sphi 0, %s65
    %s68 = sphi 0, %s67
    %s82 = sphi 0, %s68
    %s86 = sphi 0, %s86
    %s88 = sphi 0, %s86
    %s89 = sphi 0, %s88
    %s103 = sphi 0, %s89
    %s109 = sphi 0, %s111
    %s112 = sphi 0, %s109
    %s113 = sphi 0, %s112
    %s129 = sphi 0, %s113
  $region4: #{encode_image.12} parent=0 // loop_header_branch
    %13 = sbr.rel (%p11) target = $region8
  $region5: #{encode_image.12} parent=0 // loop_body
    %s15 = ssub.s32 %s10, 1
    %s16 = ssub.s32 %s10, 2
    %s17 = sadd.s32 %s10, 1
    %s18 = ssub.s32 %s10, %s17
    %p19 = scmp.eq.s32.totalorder %s18, 0
    %s21 = sadd.s32 %s20, 1
    %s22 = scalar_select %p19, %s20, %s21
    %p25 = pneg %p19
    %p26 = scmp.eq.s32.totalorder %s10, 1
    %p27 = por %p25, %p26
    %p28 = scmp.ne.s32.totalorder %s20, %s23
    %p29 = scmp.eq.s32.totalorder %s10, 0
    %p30 = por %p28, %p29
    %p31 = scmp.ne.s32.totalorder %s20, %s23
    %p32 = scmp.eq.s32.totalorder %s15, 1
    %p33 = por %p31, %p32
    %p34 = scmp.ne.s32.totalorder %s23, %s24
    %p35 = scmp.eq.s32.totalorder %s15, 0
    %p36 = por %p34, %p35
    %p37 = scmp.ne.s32.totalorder %s23, %s24
    %p38 = scmp.eq.s32.totalorder %s16, 1
    %p39 = por %p37, %p38
    %p41 = scmp.ne.s32.totalorder %s24, %s40
    %p42 = scmp.eq.s32.totalorder %s16, 0
    %p43 = por %p41, %p42
    %s45 = sadd.s32 %s44, 1
    %p48 = scmp.eq.s32.totalorder %s10, 1
    %p49 = scmp.ne.s32.totalorder %s44, %s46
    %p50 = scmp.eq.s32.totalorder %s10, 0
    %p51 = por %p49, %p50
    %p52 = scmp.ne.s32.totalorder %s44, %s46
    %p53 = scmp.eq.s32.totalorder %s15, 1
    %p54 = por %p52, %p53
    %p55 = scmp.ne.s32.totalorder %s46, %s47
    %p56 = scmp.eq.s32.totalorder %s15, 0
    %p57 = por %p55, %p56
    %p58 = scmp.ne.s32.totalorder %s46, %s47
    %p59 = scmp.eq.s32.totalorder %s16, 1
    %p60 = por %p58, %p59
    %p62 = scmp.ne.s32.totalorder %s47, %s61
    %p63 = scmp.eq.s32.totalorder %s16, 0
    %p64 = por %p62, %p63
    %s66 = sadd.s32 %s65, 1
    %p69 = scmp.eq.s32.totalorder %s10, 1
    %p70 = scmp.ne.s32.totalorder %s65, %s67
    %p71 = scmp.eq.s32.totalorder %s10, 0
    %p72 = por %p70, %p71
    %p73 = scmp.ne.s32.totalorder %s65, %s67
    %p74 = scmp.eq.s32.totalorder %s15, 1
    %p75 = por %p73, %p74
    %p76 = scmp.ne.s32.totalorder %s67, %s68
    %p77 = scmp.eq.s32.totalorder %s15, 0
    %p78 = por %p76, %p77
    %p79 = scmp.ne.s32.totalorder %s67, %s68
    %p80 = scmp.eq.s32.totalorder %s16, 1
    %p81 = por %p79, %p80
    %p83 = scmp.ne.s32.totalorder %s68, %s82
    %p84 = scmp.eq.s32.totalorder %s16, 0
    %p85 = por %p83, %p84
    %s87 = sadd.s32 %s86, 1
    %p90 = scmp.eq.s32.totalorder %s10, 1
    %p91 = scmp.ne.s32.totalorder %s86, %s88
    %p92 = scmp.eq.s32.totalorder %s10, 0
    %p93 = por %p91, %p92
    %p94 = scmp.ne.s32.totalorder %s86, %s88
    %p95 = scmp.eq.s32.totalorder %s15, 1
    %p96 = por %p94, %p95
    %p97 = scmp.ne.s32.totalorder %s88, %s89
    %p98 = scmp.eq.s32.totalorder %s15, 0
    %p99 = por %p97, %p98
    %p100 = scmp.ne.s32.totalorder %s88, %s89
    %p101 = scmp.eq.s32.totalorder %s16, 1
    %p102 = por %p100, %p101
    %p104 = scmp.ne.s32.totalorder %s89, %s103
    %p105 = scmp.eq.s32.totalorder %s16, 0
    %p106 = por %p104, %p105
    %s107 = ssub.s32 %s10, %s17
    %p108 = scmp.eq.s32.totalorder %s107, 0
    %s110 = sadd.s32 %s109, 1
    %s111 = scalar_select %p108, %s109, %s110
    %p114 = pneg %p108
    %p115 = scmp.eq.s32.totalorder %s10, 1
    %p116 = por %p114, %p115
    %p117 = scmp.ne.s32.totalorder %s109, %s112
    %p118 = scmp.eq.s32.totalorder %s10, 0
    %p119 = por %p117, %p118
    %p120 = scmp.ne.s32.totalorder %s109, %s112
    %p121 = scmp.eq.s32.totalorder %s15, 1
    %p122 = por %p120, %p121
    %p123 = scmp.ne.s32.totalorder %s112, %s113
    %p124 = scmp.eq.s32.totalorder %s15, 0
    %p125 = por %p123, %p124
    %p126 = scmp.ne.s32.totalorder %s112, %s113
    %p127 = scmp.eq.s32.totalorder %s16, 1
    %p128 = por %p126, %p127
    %p130 = scmp.ne.s32.totalorder %s113, %s129
    %p131 = scmp.eq.s32.totalorder %s16, 0
    %p132 = por %p130, %p131
    %p133 = scmp.le.s32.totalorder 1, %s10
    %p134 = scmp.lt.s32.totalorder %s10, 3
    %p135 = pnand %p133, %p134
    %p136 = pneg %p135
    // Predicated region
    $region9: #{encode_image.12} parent=5 // pred_check
      _
    $region10: #{encode_image.12} parent=5 // pred_check_branch
      %138 = sbr.rel (%p135) target = $region12
    $region11: #{encode_image.12} parent=5 // pred_region
      %s139 = ssub.s32 %s10, 1
      // Predicated region
      $region13: #{encode_image.12} parent=11 // pred_check
        %p140 = pneg %p57
      $region14: #{encode_image.12} parent=11 // pred_check_branch
        %142 = sbr.rel (%p140) target = $region16
      $region15: #{encode_image.12} parent=11 // pred_region
        _
      $region16: #{encode_image.12} parent=11 // pred_fallthru
        _
      // Predicated region
      $region17: #{encode_image.12} parent=11 // pred_check
        %p143 = pneg %p78
      $region18: #{encode_image.12} parent=11 // pred_check_branch
        %145 = sbr.rel (%p143) target = $region20
      $region19: #{encode_image.12} parent=11 // pred_region
        _
      $region20: #{encode_image.12} parent=11 // pred_fallthru
        _
      // Predicated region
      $region21: #{encode_image.12} parent=11 // pred_check
        %p146 = pneg %p99
      $region22: #{encode_image.12} parent=11 // pred_check_branch
        %148 = sbr.rel (%p146) target = $region24
      $region23: #{encode_image.12} parent=11 // pred_region
        _
      $region24: #{encode_image.12} parent=11 // pred_fallthru
        _
    $region12: #{encode_image.12} parent=5 // pred_fallthru
      _
    %p149 = scmp.lt.s32.totalorder %s10, 2
    // Predicated region
    $region25: #{encode_image.12} parent=5 // pred_check
      %p150 = pneg %p149
    $region26: #{encode_image.12} parent=5 // pred_check_branch
      %152 = sbr.rel (%p150) target = $region28
    $region27: #{encode_image.12} parent=5 // pred_region
      // Predicated region
      $region29: #{encode_image.12} parent=27 // pred_check
        %p153 = pneg %p30
      $region30: #{encode_image.12} parent=27 // pred_check_branch
        %155 = sbr.rel (%p153) target = $region32
      $region31: #{encode_image.12} parent=27 // pred_region
        %p156 = scmp.lt.s32.totalorder %s10, 1
        %s157 = scalar_select %p156, %s10, 1
        %s158 = smul.addr %s157, 3
        %s159 = smul.addr %s158, 8
        %s160 = scalar_lea.vmem %s0, %s159
      $region32: #{encode_image.12} parent=27 // pred_fallthru
        _
    $region28: #{encode_image.12} parent=5 // pred_fallthru
      _
    %p161 = scmp.le.s32.totalorder 1, %s10
    %p162 = scmp.lt.s32.totalorder %s10, 3
    %p163 = pnand %p161, %p162
    %p164 = pneg %p163
    // Predicated region
    $region33: #{encode_image.12} parent=5 // pred_check
      _
    $region34: #{encode_image.12} parent=5 // pred_check_branch
      %166 = sbr.rel (%p163) target = $region36
    $region35: #{encode_image.12} parent=5 // pred_region
      %s167 = ssub.s32 %s10, 1
      %p168 = scmp.lt.s32.totalorder %s15, 1
      %s169 = scalar_select %p168, %s15, 1
      %s170 = smul.addr %s169, 3
      %s171 = smul.addr %s170, 8
      %s172 = scalar_lea.vmem %s0, %s171
      %p173 = pneg %p36
      %p174 = pneg %p33
      %p175 = pneg %p57
      %p176 = pneg %p54
      %p177 = pneg %p78
      %p178 = pneg %p75
      %p179 = pneg %p99
      %p180 = pneg %p96
      %p181 = pneg %p125
      %p182 = pneg %p122
      %p183 = scmp.lt.s32.totalorder %s15, 1
      %s184 = scalar_select %p183, %s15, 1
      %s185 = smul.addr %s184, 3
      %s186 = smul.addr %s185, 8
      %s187 = scalar_lea.vmem %s4, %s186
      %p188 = scmp.lt.s32.totalorder %s15, 1
      %s189 = scalar_select %p188, %s15, 1
      %s190 = smul.addr %s189, 3
      %s191 = smul.addr %s190, 8
      %s192 = scalar_lea.vmem %s0, %s191
      %p193 = scmp.lt.s32.totalorder %s15, 1
      %s194 = scalar_select %p193, %s15, 1
      %s195 = smul.addr %s194, 3
      %s196 = smul.addr %s195, 8
      %s197 = scalar_lea.vmem %s4, %s196
      %v198 = vld [vmem:[%s192] sm:$0xff]
      %v199 = vld [vmem:[%s192 + $0x8] sm:$0xff]
      %v200 = vld [vmem:[%s192 + $0x10] sm:$0x1]
      %v201 = vld [vmem:[%s1] sm:$0xff]
      %v202 = vld [vmem:[%s1 + $0x8] sm:$0xff]
      %v203 = vld [vmem:[%s1 + $0x10] sm:$0x1]
      %v204 = vadd.f32 %v198, %v201
      %v205 = vadd.f32 %v199, %v202
      %v206 = vadd.f32 %v200, %v203
      %207 = vadd.xlane.f32.xlu0 %v204
      %v208 = vpop.xlane.xlu0 %207
      %209 = vadd.xlane.f32.xlu0 %v205
      %v210 = vpop.xlane.xlu0 %209
      %vm211 = vcmask 1040384
      %v212 = vsel %vm211, %v206, 0.0
      %213 = vadd.xlane.f32.xlu0 %v212
      %v214 = vpop.xlane.xlu0 %213
      %v215 = vrcp.pop 128.0
      %v216 = vmul.f32 %v208, %v215
      %v217 = vmul.f32 %v210, %v215
      %v218 = vmul.f32 %v214, %v215
      %v219 = vsub.f32 %v204, %v216
      %v220 = vsub.f32 %v205, %v217
      %v221 = vsub.f32 %v206, %v218
      %v222 = vmul.f32 %v219, %v219
      %v223 = vmul.f32 %v220, %v220
      %v224 = vmul.f32 %v221, %v221
      %225 = vadd.xlane.f32.xlu0 %v222
      %v226 = vpop.xlane.xlu0 %225
      %227 = vadd.xlane.f32.xlu0 %v223
      %v228 = vpop.xlane.xlu0 %227
      %v229 = vsel %vm211, %v224, 0.0
      %230 = vadd.xlane.f32.xlu0 %v229
      %v231 = vpop.xlane.xlu0 %230
      %v232 = vmul.f32 %v226, %v215
      %v233 = vmul.f32 %v228, %v215
      %v234 = vmul.f32 %v231, %v215
      %v235 = vadd.f32 %v232, 1e-05
      %v236 = vadd.f32 %v233, 1e-05
      %v237 = vadd.f32 %v234, 1e-05
      %v238 = vrsqrt.pop %v235
      %v239 = vrsqrt.pop %v236
      %v240 = vrsqrt.pop %v237
      %v241 = vmul.f32 %v219, %v238
      %v242 = vmul.f32 %v220, %v239
      %v243 = vmul.f32 %v221, %v240
      %v244 = vld [vmem:[%s2] sm:$0x1]
      %v246 = vlaneseq
      %v247 = vshrl.u32 %v246, 7
      %v248 = vsub.s32 0, %v247
      %v249 = vrot.slane %v244, %v248
      %v251 = vmul.f32 %v241, %v249
      %v252 = vmul.f32 %v242, %v249
      %v253 = vmul.f32 %v243, %v249
      %v254 = vld [vmem:[%s3] sm:$0x1]
      %v256 = vlaneseq
      %v257 = vshrl.u32 %v256, 7
      %v258 = vsub.s32 0, %v257
      %v259 = vrot.slane %v254, %v258
      %v261 = vadd.f32 %v251, %v259
      %v262 = vadd.f32 %v252, %v259
      %v263 = vadd.f32 %v253, %v259
      %264 = vst [vmem:[%s197] sm:$0xff] %v261
      %265 = vst [vmem:[%s197 + $0x8] sm:$0xff] %v262
      %266 = vst [vmem:[%s197 + $0x10] sm:$0x1] %v263
      %p267 = scmp.lt.s32.totalorder %s15, 1
      %s268 = scalar_select %p267, %s15, 1
      %s269 = smul.addr %s268, 3
      %s270 = smul.addr %s269, 8
      %s271 = scalar_lea.vmem %s4, %s270
      // Predicated region
      $region37: #{encode_image.12} parent=35 // pred_check
        %p272 = pneg %p122
      $region38: #{encode_image.12} parent=35 // pred_check_branch
        %274 = sbr.rel (%p272) target = $region40
      $region39: #{encode_image.12} parent=35 // pred_region
        _
      $region40: #{encode_image.12} parent=35 // pred_fallthru
        _
    $region36: #{encode_image.12} parent=5 // pred_fallthru
      _
    %p275 = scmp.le.s32.totalorder 2, %s10
    // Predicated region
    $region41: #{encode_image.12} parent=5 // pred_check
      %p276 = pneg %p275
    $region42: #{encode_image.12} parent=5 // pred_check_branch
      %278 = sbr.rel (%p276) target = $region44
    $region43: #{encode_image.12} parent=5 // pred_region
      %s279 = ssub.s32 %s10, 2
      // Predicated region
      $region45: #{encode_image.12} parent=43 // pred_check
        %p280 = pneg %p128
      $region46: #{encode_image.12} parent=43 // pred_check_branch
        %282 = sbr.rel (%p280) target = $region48
      $region47: #{encode_image.12} parent=43 // pred_region
        %p283 = scmp.lt.s32.totalorder %s16, 1
        %s284 = scalar_select %p283, %s16, 1
        %s285 = smul.addr %s284, 3
        %s286 = smul.addr %s285, 8
        %s287 = scalar_lea.vmem %s4, %s286
      $region48: #{encode_image.12} parent=43 // pred_fallthru
        _
    $region44: #{encode_image.12} parent=5 // pred_fallthru
      _
  $region6: #{encode_image.12} parent=0 // loop_footer
    %s14 = sadd.s32 1, %s10
  $region7: #{encode_image.12} parent=0 // loop_footer_branch
    %9 = sbr.rel target = $region3
  $region8: #{encode_image.12} parent=0 // loop_exit
    _

// kernel: encode_image.11
$region0: #{encode_image.11}
  #allocation0 [shape = 'u32[]', space=smem, size = 0x4, offset = 0x4, fixed_abs, tag = 'smem constant byte address 0x4 - core index']
  #allocation1 [shape = 'u32[144,128]{1,0:T(1,128)}', space=vmem, size = 0x12000, scoped, tag = 'internal scratch']
  %s0 = inlined_call_operand.vmem [shape: f32[32,192], index: 0, kind: input, shape index: {}]
  %s1 = inlined_call_operand.vmem [shape: bf16[192,128], index: 1, kind: input, shape index: {}]
  %s2 = inlined_call_operand.vmem [shape: f32[1,128], index: 2, kind: input, shape index: {}]
  %s3 = inlined_call_operand.vmem [shape: f32[32,128], index: 3, kind: output, shape index: {}]
  %s4 = sld [smem:[#allocation0]]
  $region22: #{encode_image.11} parent=0
    _
  %s6 = ssub.s32 1, %s4
  %s7 = scalar_select 0, %s6, %s4
  // Predicated region
  $region2: #{encode_image.11} parent=0 // pred_check
    _
  $region3: #{encode_image.11} parent=0 // pred_check_branch
    %9 = sbr.rel (0) target = $region5
  $region4: #{encode_image.11} parent=0 // pred_region
    _
  $region5: #{encode_image.11} parent=0 // pred_fallthru
    _
  // Predicated region
  $region6: #{encode_image.11} parent=0 // pred_check
    _
  $region7: #{encode_image.11} parent=0 // pred_check_branch
    %11 = sbr.rel (0) target = $region9
  $region8: #{encode_image.11} parent=0 // pred_region
    _
  $region9: #{encode_image.11} parent=0 // pred_fallthru
    _
  // Predicated region
  $region10: #{encode_image.11} parent=0 // pred_check
    _
  $region11: #{encode_image.11} parent=0 // pred_check_branch
    %13 = sbr.rel (0) target = $region13
  $region12: #{encode_image.11} parent=0 // pred_region
    _
  $region13: #{encode_image.11} parent=0 // pred_fallthru
    _
  %v15 = vld [vmem:[%s0] sm:$0xff]
  %v16 = vld [vmem:[%s0 + $0x8] sm:$0xff]
  %v17 = vld [vmem:[%s0 + $0x10] sm:$0xff]
  %v18 = vld [vmem:[%s0 + $0x18] sm:$0xff]
  %v19 = vld [vmem:[%s0 + $0x20] sm:$0xff]
  %v20 = vld [vmem:[%s0 + $0x28] sm:$0xff]
  %v21 = vld [vmem:[%s0 + $0x30] sm:$0xff]
  %v22 = vld [vmem:[%s0 + $0x38] sm:$0xff]
  %v23 = vpack.c.bf16 %v17, %v15
  %v24 = vpack.c.bf16 %v18, %v16
  %v25 = vpack.c.bf16 %v21, %v19
  %v26 = vpack.c.bf16 %v22, %v20
  %v27 = vld [vmem:[%s1] sm:$0xf]
  %v28 = vld [vmem:[%s1 + $0x4] sm:$0xf]
  %v29 = vld [vmem:[%s1 + $0x8] sm:$0xf]
  %v30 = vld [vmem:[%s1 + $0xc] sm:$0xf]
  %v31 = vld [vmem:[%s1 + $0x10] sm:$0xf]
  %v32 = vld [vmem:[%s1 + $0x14] sm:$0xf]
  %v33 = vld [vmem:[%s1 + $0x18] sm:$0xf]
  %v34 = vld [vmem:[%s1 + $0x1c] sm:$0xf]
  %v35 = vld [vmem:[%s1 + $0x20] sm:$0xf]
  %v36 = vld [vmem:[%s1 + $0x24] sm:$0xf]
  %v37 = vld [vmem:[%s1 + $0x28] sm:$0xf]
  %v38 = vld [vmem:[%s1 + $0x2c] sm:$0xf]
  %v39 = vld [vmem:[%s1 + $0x30] sm:$0xf]
  %v40 = vld [vmem:[%s1 + $0x34] sm:$0xf]
  %v41 = vld [vmem:[%s1 + $0x38] sm:$0xf]
  %v42 = vld [vmem:[%s1 + $0x3c] sm:$0xf]
  %v43 = vld [vmem:[%s1 + $0x40] sm:$0xf]
  %v44 = vld [vmem:[%s1 + $0x44] sm:$0xf]
  %v45 = vld [vmem:[%s1 + $0x48] sm:$0xf]
  %v46 = vld [vmem:[%s1 + $0x4c] sm:$0xf]
  %v47 = vld [vmem:[%s1 + $0x50] sm:$0xf]
  %v48 = vld [vmem:[%s1 + $0x54] sm:$0xf]
  %v49 = vld [vmem:[%s1 + $0x58] sm:$0xf]
  %v50 = vld [vmem:[%s1 + $0x5c] sm:$0xf]
  %v51 = vld [vmem:[%s2] sm:$0x1]
  %v53 = vlaneseq
  %v54 = vshrl.u32 %v53, 7
  %v55 = vsub.s32 0, %v54
  %v56 = vrot.slane %v51, %v55
  %v82 = vunpack.c.l.b16 %v27
  %v83 = vunpack.c.l.b16 %v28
  %v84 = vunpack.c.l.b16 %v29
  %v85 = vunpack.c.l.b16 %v30
  %v86 = vunpack.c.l.b16 %v31
  %v87 = vunpack.c.l.b16 %v32
  %v88 = vunpack.c.l.b16 %v33
  %v89 = vunpack.c.l.b16 %v34
  %v90 = vunpack.c.l.b16 %v35
  %v91 = vunpack.c.l.b16 %v36
  %v92 = vunpack.c.l.b16 %v37
  %v93 = vunpack.c.l.b16 %v38
  %v94 = vunpack.c.l.b16 %v39
  %v95 = vunpack.c.l.b16 %v40
  %v96 = vunpack.c.l.b16 %v41
  %v97 = vunpack.c.l.b16 %v42
  %v98 = vunpack.c.l.b16 %v43
  %v99 = vunpack.c.l.b16 %v44
  %v100 = vunpack.c.l.b16 %v45
  %v101 = vunpack.c.l.b16 %v46
  %v102 = vunpack.c.l.b16 %v47
  %v103 = vunpack.c.l.b16 %v48
  %v104 = vunpack.c.l.b16 %v49
  %v105 = vunpack.c.l.b16 %v50
  %v106 = vpack.c.b16 %v83, %v82
  %v107 = vpack.c.b16 %v85, %v84
  %v108 = vpack.c.b16 %v87, %v86
  %v109 = vpack.c.b16 %v89, %v88
  %v110 = vpack.c.b16 %v91, %v90
  %v111 = vpack.c.b16 %v93, %v92
  %v112 = vpack.c.b16 %v95, %v94
  %v113 = vpack.c.b16 %v97, %v96
  %v114 = vpack.c.b16 %v99, %v98
  %v115 = vpack.c.b16 %v101, %v100
  %v116 = vpack.c.b16 %v103, %v102
  %v117 = vpack.c.b16 %v105, %v104
  %vm130 = vcmask 523264
  %v132 = vsel %vm130, %v24, 0
  %v135 = vsel %vm130, %v26, 0
  %137 = vmatprep.subr.bf16.mxu0 0
  %138 = vmatpush1.bf16.msra.mxu0 %v106
  %139 = vmatprep.subr.bf16.mxu0 0
  %140 = vmatpush1.bf16.msra.mxu0 %v107
  %141 = vmatprep.subr.bf16.mxu0 0
  %142 = vmatpush1.bf16.msra.mxu0 %v108
  %143 = vmatprep.subr.bf16.mxu0 0
  %144 = vmatpush1.bf16.msra.mxu0 %v109
  %145 = vmatprep.subr.bf16.mxu0 0
  %146 = vmatpush1.bf16.msra.mxu0 %v110
  %147 = vmatprep.subr.bf16.mxu0 0
  %148 = vmatpush1.bf16.msra.mxu0 %v111
  %149 = vmatprep.subr.bf16.mxu0 0
  %150 = vmatpush1.bf16.msra.mxu0 %v112
  %151 = vmatprep.subr.bf16.mxu0 0
  %152 = vmatpush1.bf16.msra.mxu0 %v113
  %153 = vmatprep.subr.bf16.mxu0 0
  %154 = vmatpush1.bf16.msra.mxu0 %v114
  %155 = vmatprep.subr.bf16.mxu0 0
  %156 = vmatpush1.bf16.msra.mxu0 %v115
  %157 = vmatprep.subr.bf16.mxu0 0
  %158 = vmatpush1.bf16.msra.mxu0 %v116
  %159 = vmatprep.subr.bf16.mxu0 0
  %160 = vmatpush1.bf16.msra.mxu0 %v117
  %161 = vmatprep.subr.bf16.mxu0 0
  %162 = vmatpush1.bf16.msra.mxu0 0
  %163 = vmatprep.subr.bf16.mxu0 0
  %164 = vmatpush1.bf16.msra.mxu0 0
  %165 = vmatprep.subr.bf16.mxu0 0
  %166 = vmatpush1.bf16.msra.mxu0 0
  %167 = vmatprep.subr.bf16.mxu0 0
  %168 = vmatpush1.bf16.msra.mxu0 0
  %169 = vmatprep.mubr.bf16.mxu0 %v132
  %170 = vmatmul.mubr.bf16.gmra.mrb[0].mxu0 %v23
  %v171 = vpop.f32.mrb[0].mxu0
  %v172 = vadd.f32 %v56, %v171
  %v173 = vpop.f32.mrb[0].mxu0
  %v174 = vpop.f32.mrb[0].mxu0
  %v175 = vadd.f32 %v56, %v174
  %v176 = vpop.f32.mrb[0].mxu0
  %177 = vmatprep.mubr.bf16.mxu0 %v135
  %178 = vmatmul.mubr.bf16.gmra.mrb[0].mxu0 %v25
  %v179 = vpop.f32.mrb[0].mxu0
  %v180 = vadd.f32 %v56, %v179
  %v181 = vpop.f32.mrb[0].mxu0
  %v182 = vpop.f32.mrb[0].mxu0
  %v183 = vadd.f32 %v56, %v182
  %v184 = vpop.f32.mrb[0].mxu0
  %185 = vdwg.mxu0
  %186 = vst [vmem:[%s3] sm:$0xff] %v172
  %187 = vst [vmem:[%s3 + $0x8] sm:$0xff] %v175
  %188 = vst [vmem:[%s3 + $0x10] sm:$0xff] %v180
  %189 = vst [vmem:[%s3 + $0x18] sm:$0xff] %v183
  // Predicated region
  $region14: #{encode_image.11} parent=0 // pred_check
    _
  $region15: #{encode_image.11} parent=0 // pred_check_branch
    %191 = sbr.rel (0) target = $region17
  $region16: #{encode_image.11} parent=0 // pred_region
    _
  $region17: #{encode_image.11} parent=0 // pred_fallthru
    _
  // Predicated region
  $region18: #{encode_image.11} parent=0 // pred_check
    _
  $region19: #{encode_image.11} parent=0 // pred_check_branch
    %193 = sbr.rel (0) target = $region21
  $region20: #{encode_image.11} parent=0 // pred_region
    _
  $region21: #{encode_image.11} parent=0 // pred_fallthru
    _

// kernel: encode_image.14
$region0: #{encode_image.14}
  #allocation0 [shape = 'u32[]', space=smem, size = 0x4, offset = 0x4, fixed_abs, tag = 'smem constant byte address 0x4 - core index']
  #allocation1 [shape = 'u32[144,128]{1,0:T(1,128)}', space=vmem, size = 0x12000, scoped, tag = 'internal scratch']
  %s0 = inlined_call_operand.vmem [shape: bf16[2,17,384], index: 0, kind: input, shape index: {}, may-alias: {0,1,2}]
  %s1 = inlined_call_operand.vmem [shape: bf16[2,17,384], index: 1, kind: input, shape index: {}, may-alias: {0,1,2}]
  %s2 = inlined_call_operand.vmem [shape: bf16[2,17,384], index: 2, kind: input, shape index: {}, may-alias: {0,1,2}]
  %s3 = inlined_call_operand.vmem [shape: bf16[2,17,128], index: 3, kind: output, shape index: {}]
  %s4 = sld [smem:[#allocation0]]
  $region168: #{encode_image.14} parent=0
    _
  %s6 = ssub.s32 1, %s4
  %s7 = scalar_select 0, %s6, %s4
  $region1: #{encode_image.14} parent=0
    #allocation2 [shape = 'u8[12288]{0}', space=vmem, size = 0x3000, scoped, tag = 'input window, operand 0']
    #allocation3 [shape = 'u8[12288]{0}', space=vmem, size = 0x3000, scoped, tag = 'input window, operand 1']
    #allocation4 [shape = 'u8[12288]{0}', space=vmem, size = 0x3000, scoped, tag = 'input window, operand 2']
    loop: start=0, step=1, limit=4
    $region2: #{encode_image.14} parent=1 // loop_pre_header
      _
    $region3: #{encode_image.14} parent=1 // loop_header
      %s9 = sphi 0, %s13
      %p10 = scmp.ge.s32.totalorder %s9, 4
      %s16 = sphi 0, %s28
      %s17 = sphi 0, %s24
      %s18 = sphi 0, %s16
      %s19 = sphi 0, %s17
      %s20 = sphi 0, %s18
      %s21 = sphi 0, %s19
      %s33 = sphi 0, %s35
      %s36 = sphi 0, %s33
      %s37 = sphi 0, %s36
      %s53 = sphi 0, %s37
      %s63 = sphi 0, %s65
      %s66 = sphi 0, %s63
      %s67 = sphi 0, %s66
      %s83 = sphi 0, %s67
      %s93 = sphi 0, %s95
      %s96 = sphi 0, %s93
      %s97 = sphi 0, %s96
      %s113 = sphi 0, %s97
      %s121 = sphi 0, %s123
      %s124 = sphi 0, %s121
      %s125 = sphi 0, %s124
      %s141 = sphi 0, %s125
    $region4: #{encode_image.14} parent=1 // loop_header_branch
      %12 = sbr.rel (%p10) target = $region8
    $region5: #{encode_image.14} parent=1 // loop_body
      %s14 = ssub.s32 %s9, 1
      %s15 = ssub.s32 %s9, 2
      %s22 = sadd.s32 1, %s17
      %p23 = scmp.ge.s32.totalorder %s22, 1
      %s24 = scalar_select %p23, 0, %s22
      %s25 = sadd.s32 1, %s16
      %s26 = scalar_select %p23, %s25, %s16
      %p27 = scmp.ge.s32.totalorder %s26, 2
      %s28 = scalar_select %p27, 0, %s26
      %s29 = ssub.s32 %s16, %s28
      %s30 = ssub.s32 %s17, %s24
      %s31 = sor.u32 %s29, %s30
      %p32 = scmp.eq.s32.totalorder %s31, 0
      %s34 = sadd.s32 %s33, 1
      %s35 = scalar_select %p32, %s33, %s34
      %p38 = pneg %p32
      %p39 = scmp.eq.s32.totalorder %s9, 1
      %p40 = por %p38, %p39
      %p41 = scmp.ne.s32.totalorder %s33, %s36
      %p42 = scmp.eq.s32.totalorder %s9, 0
      %p43 = por %p41, %p42
      %p44 = scmp.ne.s32.totalorder %s33, %s36
      %p45 = scmp.eq.s32.totalorder %s14, 1
      %p46 = por %p44, %p45
      %p47 = scmp.ne.s32.totalorder %s36, %s37
      %p48 = scmp.eq.s32.totalorder %s14, 0
      %p49 = por %p47, %p48
      %p50 = scmp.ne.s32.totalorder %s36, %s37
      %p51 = scmp.eq.s32.totalorder %s15, 1
      %p52 = por %p50, %p51
      %p54 = scmp.ne.s32.totalorder %s37, %s53
      %p55 = scmp.eq.s32.totalorder %s15, 0
      %p56 = por %p54, %p55
      %s57 = sadd.s32 %s17, 1
      %s58 = sadd.s32 %s24, 1
      %s59 = ssub.s32 %s16, %s28
      %s60 = ssub.s32 %s57, %s58
      %s61 = sor.u32 %s59, %s60
      %p62 = scmp.eq.s32.totalorder %s61, 0
      %s64 = sadd.s32 %s63, 1
      %s65 = scalar_select %p62, %s63, %s64
      %p68 = pneg %p62
      %p69 = scmp.eq.s32.totalorder %s9, 1
      %p70 = por %p68, %p69
      %p71 = scmp.ne.s32.totalorder %s63, %s66
      %p72 = scmp.eq.s32.totalorder %s9, 0
      %p73 = por %p71, %p72
      %p74 = scmp.ne.s32.totalorder %s63, %s66
      %p75 = scmp.eq.s32.totalorder %s14, 1
      %p76 = por %p74, %p75
      %p77 = scmp.ne.s32.totalorder %s66, %s67
      %p78 = scmp.eq.s32.totalorder %s14, 0
      %p79 = por %p77, %p78
      %p80 = scmp.ne.s32.totalorder %s66, %s67
      %p81 = scmp.eq.s32.totalorder %s15, 1
      %p82 = por %p80, %p81
      %p84 = scmp.ne.s32.totalorder %s67, %s83
      %p85 = scmp.eq.s32.totalorder %s15, 0
      %p86 = por %p84, %p85
      %s87 = sadd.s32 %s17, 2
      %s88 = sadd.s32 %s24, 2
      %s89 = ssub.s32 %s16, %s28
      %s90 = ssub.s32 %s87, %s88
      %s91 = sor.u32 %s89, %s90
      %p92 = scmp.eq.s32.totalorder %s91, 0
      %s94 = sadd.s32 %s93, 1
      %s95 = scalar_select %p92, %s93, %s94
      %p98 = pneg %p92
      %p99 = scmp.eq.s32.totalorder %s9, 1
      %p100 = por %p98, %p99
      %p101 = scmp.ne.s32.totalorder %s93, %s96
      %p102 = scmp.eq.s32.totalorder %s9, 0
      %p103 = por %p101, %p102
      %p104 = scmp.ne.s32.totalorder %s93, %s96
      %p105 = scmp.eq.s32.totalorder %s14, 1
      %p106 = por %p104, %p105
      %p107 = scmp.ne.s32.totalorder %s96, %s97
      %p108 = scmp.eq.s32.totalorder %s14, 0
      %p109 = por %p107, %p108
      %p110 = scmp.ne.s32.totalorder %s96, %s97
      %p111 = scmp.eq.s32.totalorder %s15, 1
      %p112 = por %p110, %p111
      %p114 = scmp.ne.s32.totalorder %s97, %s113
      %p115 = scmp.eq.s32.totalorder %s15, 0
      %p116 = por %p114, %p115
      %s117 = ssub.s32 %s16, %s28
      %s118 = ssub.s32 %s17, %s24
      %s119 = sor.u32 %s117, %s118
      %p120 = scmp.eq.s32.totalorder %s119, 0
      %s122 = sadd.s32 %s121, 1
      %s123 = scalar_select %p120, %s121, %s122
      %p126 = pneg %p120
      %p127 = scmp.eq.s32.totalorder %s9, 1
      %p128 = por %p126, %p127
      %p129 = scmp.ne.s32.totalorder %s121, %s124
      %p130 = scmp.eq.s32.totalorder %s9, 0
      %p131 = por %p129, %p130
      %p132 = scmp.ne.s32.totalorder %s121, %s124
      %p133 = scmp.eq.s32.totalorder %s14, 1
      %p134 = por %p132, %p133
      %p135 = scmp.ne.s32.totalorder %s124, %s125
      %p136 = scmp.eq.s32.totalorder %s14, 0
      %p137 = por %p135, %p136
      %p138 = scmp.ne.s32.totalorder %s124, %s125
      %p139 = scmp.eq.s32.totalorder %s15, 1
      %p140 = por %p138, %p139
      %p142 = scmp.ne.s32.totalorder %s125, %s141
      %p143 = scmp.eq.s32.totalorder %s15, 0
      %p144 = por %p142, %p143
      %p145 = scmp.le.s32.totalorder 1, %s9
      %p146 = scmp.lt.s32.totalorder %s9, 3
      %p147 = pnand %p145, %p146
      %p148 = pneg %p147
      // Predicated region
      $region9: #{encode_image.14} parent=5 // pred_check
        _
      $region10: #{encode_image.14} parent=5 // pred_check_branch
        %150 = sbr.rel (%p147) target = $region12
      $region11: #{encode_image.14} parent=5 // pred_region
        %s151 = ssub.s32 %s9, 1
      $region12: #{encode_image.14} parent=5 // pred_fallthru
        _
      %p152 = scmp.lt.s32.totalorder %s9, 2
      // Predicated region
      $region13: #{encode_image.14} parent=5 // pred_check
        %p153 = pneg %p152
      $region14: #{encode_image.14} parent=5 // pred_check_branch
        %155 = sbr.rel (%p153) target = $region16
      $region15: #{encode_image.14} parent=5 // pred_region
        // Predicated region
        $region17: #{encode_image.14} parent=15 // pred_check
          %p156 = pneg %p43
        $region18: #{encode_image.14} parent=15 // pred_check_branch
          %158 = sbr.rel (%p156) target = $region20
        $region19: #{encode_image.14} parent=15 // pred_region
          %s159 = sand.u32 %s33, 1
          %s160 = sand.u32 %s33, 1
          %s161 = smul.addr %s160, 12
          %s162 = scalar_lea.vmem [#allocation2], %s161
          %s163 = smul.addr %s16, 9
          %s164 = sadd.s32 %s17, %s163
          %s165 = smul.addr %s164, 4
          %s166 = scalar_lea.vmem %s0, %s165
          // Predicated region
          $region21: #{encode_image.14} parent=19 // pred_check
            _
          $region22: #{encode_image.14} parent=19 // pred_check_branch
            %168 = sbr.rel (0) target = $region24
          $region23: #{encode_image.14} parent=19 // pred_region
            // Predicated region
            $region25: #{encode_image.14} parent=23 // pred_check
              _
            $region26: #{encode_image.14} parent=23 // pred_check_branch
              %170 = sbr.rel target = $region28
            $region27: #{encode_image.14} parent=23 // pred_region
              // Predicated region
              $region40: #{encode_image.14} parent=27 // pred_check
                _
              $region41: #{encode_image.14} parent=27 // pred_check_branch
                %189 = sbr.rel (0) target = $region43
              $region42: #{encode_image.14} parent=27 // pred_region
                loop: start=0, step=1, limit=1
                $region44: #{encode_image.14} parent=42 // loop_pre_header
                  _
                $region45: #{encode_image.14} parent=42 // loop_header
                  %s191 = sphi 0, %s195
                  %p192 = scmp.ge.s32.totalorder %s191, 1
                  %s196 = sphi %s166, %s166
                  %s197 = sphi %s162, %s162
                $region46: #{encode_image.14} parent=42 // loop_header_branch
                  %194 = sbr.rel (%p192) target = $region50
                $region47: #{encode_image.14} parent=42 // loop_body
                  _
                $region48: #{encode_image.14} parent=42 // loop_footer
                  %s195 = sadd.s32 1, %s191
                $region49: #{encode_image.14} parent=42 // loop_footer_branch
                  %190 = sbr.rel target = $region45
                $region50: #{encode_image.14} parent=42 // loop_exit
                  _
                loop: start=0, step=1, limit=1
                $region51: #{encode_image.14} parent=42 // loop_pre_header
                  _
                $region52: #{encode_image.14} parent=42 // loop_header
                  %s200 = sphi 0, %s204
                  %p201 = scmp.ge.s32.totalorder %s200, 1
                  %s205 = sphi %s166, %s166
                  %s206 = sphi %s162, %s162
                $region53: #{encode_image.14} parent=42 // loop_header_branch
                  %203 = sbr.rel (%p201) target = $region57
                $region54: #{encode_image.14} parent=42 // loop_body
                  %v207 = vld [vmem:[%s205] sm:$0xf]
                  %208 = vst [vmem:[%s206] sm:$0xf] %v207
                  %v209 = vld [vmem:[%s205 + $0xc] sm:$0xf]
                  %210 = vst [vmem:[%s206 + $0x4] sm:$0xf] %v209
                  %v211 = vld [vmem:[%s205 + $0x18] sm:$0xf]
                  %212 = vst [vmem:[%s206 + $0x8] sm:$0xf] %v211
                $region55: #{encode_image.14} parent=42 // loop_footer
                  %s204 = sadd.s32 1, %s200
                $region56: #{encode_image.14} parent=42 // loop_footer_branch
                  %199 = sbr.rel target = $region52
                $region57: #{encode_image.14} parent=42 // loop_exit
                  _
              $region43: #{encode_image.14} parent=27 // pred_fallthru
                _
            $region28: #{encode_image.14} parent=23 // pred_fallthru
              _
            // Predicated region
            $region29: #{encode_image.14} parent=23 // pred_check
              _
            $region30: #{encode_image.14} parent=23 // pred_check_branch
              %172 = sbr.rel (0) target = $region32
            $region31: #{encode_image.14} parent=23 // pred_region
              loop: start=0, step=1, limit=1
              $region33: #{encode_image.14} parent=31 // loop_pre_header
                _
              $region34: #{encode_image.14} parent=31 // loop_header
                %s175 = sphi 0, %s179
                %p176 = scmp.ge.s32.totalorder %s175, 1
                %s180 = sphi %s166, %s166
                %s181 = sphi %s162, %s162
              $region35: #{encode_image.14} parent=31 // loop_header_branch
                %178 = sbr.rel (%p176) target = $region39
              $region36: #{encode_image.14} parent=31 // loop_body
                %v182 = vld [vmem:[%s180] sm:$0xf]
                %183 = vst [vmem:[%s181] sm:$0xf] %v182
                %v184 = vld [vmem:[%s180 + $0xc] sm:$0xf]
                %185 = vst [vmem:[%s181 + $0x4] sm:$0xf] %v184
                %v186 = vld [vmem:[%s180 + $0x18] sm:$0xf]
                %187 = vst [vmem:[%s181 + $0x8] sm:$0xf] %v186
              $region37: #{encode_image.14} parent=31 // loop_footer
                %s179 = sadd.s32 1, %s175
              $region38: #{encode_image.14} parent=31 // loop_footer_branch
                %174 = sbr.rel target = $region34
              $region39: #{encode_image.14} parent=31 // loop_exit
                _
            $region32: #{encode_image.14} parent=23 // pred_fallthru
              _
          $region24: #{encode_image.14} parent=19 // pred_fallthru
            _
          %213 = vnop
        $region20: #{encode_image.14} parent=15 // pred_fallthru
          _
        // Predicated region
        $region58: #{encode_image.14} parent=15 // pred_check
          %p214 = pneg %p73
        $region59: #{encode_image.14} parent=15 // pred_check_branch
          %216 = sbr.rel (%p214) target = $region61
        $region60: #{encode_image.14} parent=15 // pred_region
          %s217 = sand.u32 %s63, 1
          %s218 = sand.u32 %s63, 1
          %s219 = smul.addr %s218, 12
          %s220 = scalar_lea.vmem [#allocation3], %s219
          %s221 = sadd.s32 %s17, 1
          %s222 = smul.addr %s16, 9
          %s223 = sadd.s32 %s221, %s222
          %s224 = smul.addr %s223, 4
          %s225 = scalar_lea.vmem %s1, %s224
          // Predicated region
          $region62: #{encode_image.14} parent=60 // pred_check
            _
          $region63: #{encode_image.14} parent=60 // pred_check_branch
            %227 = sbr.rel (0) target = $region65
          $region64: #{encode_image.14} parent=60 // pred_region
            // Predicated region
            $region66: #{encode_image.14} parent=64 // pred_check
              _
            $region67: #{encode_image.14} parent=64 // pred_check_branch
              %229 = sbr.rel target = $region69
            $region68: #{encode_image.14} parent=64 // pred_region
              // Predicated region
              $region81: #{encode_image.14} parent=68 // pred_check
                _
              $region82: #{encode_image.14} parent=68 // pred_check_branch
                %248 = sbr.rel (0) target = $region84
              $region83: #{encode_image.14} parent=68 // pred_region
                loop: start=0, step=1, limit=1
                $region85: #{encode_image.14} parent=83 // loop_pre_header
                  _
                $region86: #{encode_image.14} parent=83 // loop_header
                  %s250 = sphi 0, %s254
                  %p251 = scmp.ge.s32.totalorder %s250, 1
                  %s255 = sphi %s225, %s225
                  %s256 = sphi %s220, %s220
                $region87: #{encode_image.14} parent=83 // loop_header_branch
                  %253 = sbr.rel (%p251) target = $region91
                $region88: #{encode_image.14} parent=83 // loop_body
                  _
                $region89: #{encode_image.14} parent=83 // loop_footer
                  %s254 = sadd.s32 1, %s250
                $region90: #{encode_image.14} parent=83 // loop_footer_branch
                  %249 = sbr.rel target = $region86
                $region91: #{encode_image.14} parent=83 // loop_exit
                  _
                loop: start=0, step=1, limit=1
                $region92: #{encode_image.14} parent=83 // loop_pre_header
                  _
                $region93: #{encode_image.14} parent=83 // loop_header
                  %s259 = sphi 0, %s263
                  %p260 = scmp.ge.s32.totalorder %s259, 1
                  %s264 = sphi %s225, %s225
                  %s265 = sphi %s220, %s220
                $region94: #{encode_image.14} parent=83 // loop_header_branch
                  %262 = sbr.rel (%p260) target = $region98
                $region95: #{encode_image.14} parent=83 // loop_body
                  %v266 = vld [vmem:[%s264] sm:$0xf]
                  %267 = vst [vmem:[%s265] sm:$0xf] %v266
                  %v268 = vld [vmem:[%s264 + $0xc] sm:$0xf]
                  %269 = vst [vmem:[%s265 + $0x4] sm:$0xf] %v268
                  %v270 = vld [vmem:[%s264 + $0x18] sm:$0xf]
                  %271 = vst [vmem:[%s265 + $0x8] sm:$0xf] %v270
                $region96: #{encode_image.14} parent=83 // loop_footer
                  %s263 = sadd.s32 1, %s259
                $region97: #{encode_image.14} parent=83 // loop_footer_branch
                  %258 = sbr.rel target = $region93
                $region98: #{encode_image.14} parent=83 // loop_exit
                  _
              $region84: #{encode_image.14} parent=68 // pred_fallthru
                _
            $region69: #{encode_image.14} parent=64 // pred_fallthru
              _
            // Predicated region
            $region70: #{encode_image.14} parent=64 // pred_check
              _
            $region71: #{encode_image.14} parent=64 // pred_check_branch
              %231 = sbr.rel (0) target = $region73
            $region72: #{encode_image.14} parent=64 // pred_region
              loop: start=0, step=1, limit=1
              $region74: #{encode_image.14} parent=72 // loop_pre_header
                _
              $region75: #{encode_image.14} parent=72 // loop_header
                %s234 = sphi 0, %s238
                %p235 = scmp.ge.s32.totalorder %s234, 1
                %s239 = sphi %s225, %s225
                %s240 = sphi %s220, %s220
              $region76: #{encode_image.14} parent=72 // loop_header_branch
                %237 = sbr.rel (%p235) target = $region80
              $region77: #{encode_image.14} parent=72 // loop_body
                %v241 = vld [vmem:[%s239] sm:$0xf]
                %242 = vst [vmem:[%s240] sm:$0xf] %v241
                %v243 = vld [vmem:[%s239 + $0xc] sm:$0xf]
                %244 = vst [vmem:[%s240 + $0x4] sm:$0xf] %v243
                %v245 = vld [vmem:[%s239 + $0x18] sm:$0xf]
                %246 = vst [vmem:[%s240 + $0x8] sm:$0xf] %v245
              $region78: #{encode_image.14} parent=72 // loop_footer
                %s238 = sadd.s32 1, %s234
              $region79: #{encode_image.14} parent=72 // loop_footer_branch
                %233 = sbr.rel target = $region75
              $region80: #{encode_image.14} parent=72 // loop_exit
                _
            $region73: #{encode_image.14} parent=64 // pred_fallthru
              _
          $region65: #{encode_image.14} parent=60 // pred_fallthru
            _
          %272 = vnop
        $region61: #{encode_image.14} parent=15 // pred_fallthru
          _
        // Predicated region
        $region99: #{encode_image.14} parent=15 // pred_check
          %p273 = pneg %p103
        $region100: #{encode_image.14} parent=15 // pred_check_branch
          %275 = sbr.rel (%p273) target = $region102
        $region101: #{encode_image.14} parent=15 // pred_region
          %s276 = sand.u32 %s93, 1
          %s277 = sand.u32 %s93, 1
          %s278 = smul.addr %s277, 12
          %s279 = scalar_lea.vmem [#allocation4], %s278
          %s280 = sadd.s32 %s17, 2
          %s281 = smul.addr %s16, 9
          %s282 = sadd.s32 %s280, %s281
          %s283 = smul.addr %s282, 4
          %s284 = scalar_lea.vmem %s2, %s283
          // Predicated region
          $region103: #{encode_image.14} parent=101 // pred_check
            _
          $region104: #{encode_image.14} parent=101 // pred_check_branch
            %286 = sbr.rel (0) target = $region106
          $region105: #{encode_image.14} parent=101 // pred_region
            // Predicated region
            $region107: #{encode_image.14} parent=105 // pred_check
              _
            $region108: #{encode_image.14} parent=105 // pred_check_branch
              %288 = sbr.rel target = $region110
            $region109: #{encode_image.14} parent=105 // pred_region
              // Predicated region
              $region122: #{encode_image.14} parent=109 // pred_check
                _
              $region123: #{encode_image.14} parent=109 // pred_check_branch
                %307 = sbr.rel (0) target = $region125
              $region124: #{encode_image.14} parent=109 // pred_region
                loop: start=0, step=1, limit=1
                $region126: #{encode_image.14} parent=124 // loop_pre_header
                  _
                $region127: #{encode_image.14} parent=124 // loop_header
                  %s309 = sphi 0, %s313
                  %p310 = scmp.ge.s32.totalorder %s309, 1
                  %s314 = sphi %s284, %s284
                  %s315 = sphi %s279, %s279
                $region128: #{encode_image.14} parent=124 // loop_header_branch
                  %312 = sbr.rel (%p310) target = $region132
                $region129: #{encode_image.14} parent=124 // loop_body
                  _
                $region130: #{encode_image.14} parent=124 // loop_footer
                  %s313 = sadd.s32 1, %s309
                $region131: #{encode_image.14} parent=124 // loop_footer_branch
                  %308 = sbr.rel target = $region127
                $region132: #{encode_image.14} parent=124 // loop_exit
                  _
                loop: start=0, step=1, limit=1
                $region133: #{encode_image.14} parent=124 // loop_pre_header
                  _
                $region134: #{encode_image.14} parent=124 // loop_header
                  %s318 = sphi 0, %s322
                  %p319 = scmp.ge.s32.totalorder %s318, 1
                  %s323 = sphi %s284, %s284
                  %s324 = sphi %s279, %s279
                $region135: #{encode_image.14} parent=124 // loop_header_branch
                  %321 = sbr.rel (%p319) target = $region139
                $region136: #{encode_image.14} parent=124 // loop_body
                  %v325 = vld [vmem:[%s323] sm:$0xf]
                  %326 = vst [vmem:[%s324] sm:$0xf] %v325
                  %v327 = vld [vmem:[%s323 + $0xc] sm:$0xf]
                  %328 = vst [vmem:[%s324 + $0x4] sm:$0xf] %v327
                  %v329 = vld [vmem:[%s323 + $0x18] sm:$0xf]
                  %330 = vst [vmem:[%s324 + $0x8] sm:$0xf] %v329
                $region137: #{encode_image.14} parent=124 // loop_footer
                  %s322 = sadd.s32 1, %s318
                $region138: #{encode_image.14} parent=124 // loop_footer_branch
                  %317 = sbr.rel target = $region134
                $region139: #{encode_image.14} parent=124 // loop_exit
                  _
              $region125: #{encode_image.14} parent=109 // pred_fallthru
                _
            $region110: #{encode_image.14} parent=105 // pred_fallthru
              _
            // Predicated region
            $region111: #{encode_image.14} parent=105 // pred_check
              _
            $region112: #{encode_image.14} parent=105 // pred_check_branch
              %290 = sbr.rel (0) target = $region114
            $region113: #{encode_image.14} parent=105 // pred_region
              loop: start=0, step=1, limit=1
              $region115: #{encode_image.14} parent=113 // loop_pre_header
                _
              $region116: #{encode_image.14} parent=113 // loop_header
                %s293 = sphi 0, %s297
                %p294 = scmp.ge.s32.totalorder %s293, 1
                %s298 = sphi %s284, %s284
                %s299 = sphi %s279, %s279
              $region117: #{encode_image.14} parent=113 // loop_header_branch
                %296 = sbr.rel (%p294) target = $region121
              $region118: #{encode_image.14} parent=113 // loop_body
                %v300 = vld [vmem:[%s298] sm:$0xf]
                %301 = vst [vmem:[%s299] sm:$0xf] %v300
                %v302 = vld [vmem:[%s298 + $0xc] sm:$0xf]
                %303 = vst [vmem:[%s299 + $0x4] sm:$0xf] %v302
                %v304 = vld [vmem:[%s298 + $0x18] sm:$0xf]
                %305 = vst [vmem:[%s299 + $0x8] sm:$0xf] %v304
              $region119: #{encode_image.14} parent=113 // loop_footer
                %s297 = sadd.s32 1, %s293
              $region120: #{encode_image.14} parent=113 // loop_footer_branch
                %292 = sbr.rel target = $region116
              $region121: #{encode_image.14} parent=113 // loop_exit
                _
            $region114: #{encode_image.14} parent=105 // pred_fallthru
              _
          $region106: #{encode_image.14} parent=101 // pred_fallthru
            _
          %331 = vnop
        $region102: #{encode_image.14} parent=15 // pred_fallthru
          _
      $region16: #{encode_image.14} parent=5 // pred_fallthru
        _
      %p332 = scmp.le.s32.totalorder 1, %s9
      %p333 = scmp.lt.s32.totalorder %s9, 3
      %p334 = pnand %p332, %p333
      %p335 = pneg %p334
      // Predicated region
      $region140: #{encode_image.14} parent=5 // pred_check
        _
      $region141: #{encode_image.14} parent=5 // pred_check_branch
        %337 = sbr.rel (%p334) target = $region143
      $region142: #{encode_image.14} parent=5 // pred_region
        %s338 = ssub.s32 %s9, 1
        %s339 = sand.u32 %s36, 1
        %s340 = sand.u32 %s36, 1
        %s341 = smul.addr %s340, 12
        %s342 = scalar_lea.vmem [#allocation2], %s341
        // Predicated region
        $region144: #{encode_image.14} parent=142 // pred_check
          %p343 = pneg %p49
        $region145: #{encode_image.14} parent=142 // pred_check_branch
          %345 = sbr.rel (%p343) target = $region147
        $region146: #{encode_image.14} parent=142 // pred_region
          _
        $region147: #{encode_image.14} parent=142 // pred_fallthru
          _
        %s346 = sand.u32 %s66, 1
        %s347 = sand.u32 %s66, 1
        %s348 = smul.addr %s347, 12
        %s349 = scalar_lea.vmem [#allocation3], %s348
        // Predicated region
        $region148: #{encode_image.14} parent=142 // pred_check
          %p350 = pneg %p79
        $region149: #{encode_image.14} parent=142 // pred_check_branch
          %352 = sbr.rel (%p350) target = $region151
        $region150: #{encode_image.14} parent=142 // pred_region
          _
        $region151: #{encode_image.14} parent=142 // pred_fallthru
          _
        %s353 = sand.u32 %s96, 1
        %s354 = sand.u32 %s96, 1
        %s355 = smul.addr %s354, 12
        %s356 = scalar_lea.vmem [#allocation4], %s355
        // Predicated region
        $region152: #{encode_image.14} parent=142 // pred_check
          %p357 = pneg %p109
        $region153: #{encode_image.14} parent=142 // pred_check_branch
          %359 = sbr.rel (%p357) target = $region155
        $region154: #{encode_image.14} parent=142 // pred_region
          _
        $region155: #{encode_image.14} parent=142 // pred_fallthru
          _
        %s360 = sand.u32 %s36, 1
        %s361 = sand.u32 %s36, 1
        %s362 = smul.addr %s361, 12
        %s363 = scalar_lea.vmem [#allocation2], %s362
        %p364 = pneg %p49
        %p365 = pneg %p46
        %s366 = sand.u32 %s66, 1
        %s367 = sand.u32 %s66, 1
        %s368 = smul.addr %s367, 12
        %s369 = scalar_lea.vmem [#allocation3], %s368
        %p370 = pneg %p79
        %p371 = pneg %p76
        %s372 = sand.u32 %s96, 1
        %s373 = sand.u32 %s96, 1
        %s374 = smul.addr %s373, 12
        %s375 = scalar_lea.vmem [#allocation4], %s374
        %p376 = pneg %p109
        %p377 = pneg %p106
        %p378 = pneg %p137
        %p379 = pneg %p134
        %p380 = scmp.lt.s32.totalorder %s18, 1
        %s381 = scalar_select %p380, %s18, 1
        %p382 = scmp.lt.s32.totalorder %s19, 0
        %s383 = scalar_select %p382, %s19, 0
        %s384 = smul.addr %s381, 3
        %s385 = sadd.s32 %s383, %s384
        %s386 = smul.addr %s385, 4
        %s387 = scalar_lea.vmem %s3, %s386
        %s388 = sadd.s32 %s19, 1
        %s389 = sadd.s32 %s19, 2
        %p390 = scmp.lt.s32.totalorder %s18, 1
        %s391 = scalar_select %p390, %s18, 1
        %p392 = scmp.lt.s32.totalorder %s19, 0
        %s393 = scalar_select %p392, %s19, 0
        %s394 = smul.addr %s391, 3
        %s395 = sadd.s32 %s393, %s394
        %s396 = smul.addr %s395, 4
        %s397 = scalar_lea.vmem %s3, %s396
        %v399 = vld [vmem:[%s342] sm:$0xf]
        %v400 = vld [vmem:[%s342 + $0x4] sm:$0xf]
        %v401 = vld [vmem:[%s342 + $0x8] sm:$0x1]
        %v402 = vunpack.c.l.bf16 %v399
        %v403 = vunpack.c.l.bf16 %v400
        %v404 = vunpack.c.l.bf16 %v401
        %v405 = vmul.f32 %v402, 0.17677669
        %v406 = vmul.f32 %v403, 0.17677669
        %v407 = vmul.f32 %v404, 0.17677669
        %v408 = vpack.c.bf16 %v406, %v405
        %v409 = vpack.c.bf16 %v407, %v407
        %v410 = vld [vmem:[%s349] sm:$0xf]
        %v411 = vld [vmem:[%s349 + $0x4] sm:$0xf]
        %v412 = vld [vmem:[%s349 + $0x8] sm:$0x1]
        %v413 = vld [vmem:[%s356] sm:$0xf]
        %v414 = vld [vmem:[%s356 + $0x4] sm:$0xf]
        %v415 = vld [vmem:[%s356 + $0x8] sm:$0x1]
        %v419 = vunpack.c.l.b16 %v410
        %v420 = vunpack.c.l.b16 %v411
        %v421 = vunpack.c.l.b16 %v412
        %v422 = vpack.c.b16 %v420, %v419
        %v423 = vpack.c.b16 %v421, %v421
        %vm424 = vcmask 261120
        %v426 = vsel %vm424, %v408, 0
        %v429 = vsel %vm424, %v409, 0
        %v432 = vsel %vm424, %v422, 0
        %v435 = vsel %vm424, %v423, 0
        %437 = vmatprep.subr.bf16.mxu0 0
        %438 = vmatpush1.bf16.xpose.msra.mxu0 %v432
        %439 = vmatprep.subr.bf16.mxu0 0
        %440 = vmatpush1.bf16.xpose.msra.mxu0 %v435
        %441 = vmatprep.subr.bf16.mxu0 0
        %442 = vmatpush1.bf16.xpose.msra.mxu0 0
        %443 = vmatprep.subr.bf16.mxu0 0
        %444 = vmatpush1.bf16.xpose.msra.mxu0 0
        %445 = vmatprep.subr.bf16.mxu0 0
        %446 = vmatpush1.bf16.xpose.msra.mxu0 0
        %447 = vmatprep.subr.bf16.mxu0 0
        %448 = vmatpush1.bf16.xpose.msra.mxu0 0
        %449 = vmatprep.subr.bf16.mxu0 0
        %450 = vmatpush1.bf16.xpose.msra.mxu0 0
        %451 = vmatprep.subr.bf16.mxu0 0
        %452 = vmatpush1.bf16.xpose.msra.mxu0 0
        %453 = vmatprep.subr.bf16.mxu0 0
        %454 = vmatpush1.bf16.xpose.msra.mxu0 0
        %455 = vmatprep.subr.bf16.mxu0 0
        %456 = vmatpush1.bf16.xpose.msra.mxu0 0
        %457 = vmatprep.subr.bf16.mxu0 0
        %458 = vmatpush1.bf16.xpose.msra.mxu0 0
        %459 = vmatprep.subr.bf16.mxu0 0
        %460 = vmatpush1.bf16.xpose.msra.mxu0 0
        %461 = vmatprep.subr.bf16.mxu0 0
        %462 = vmatpush1.bf16.xpose.msra.mxu0 0
        %463 = vmatprep.subr.bf16.mxu0 0
        %464 = vmatpush1.bf16.xpose.msra.mxu0 0
        %465 = vmatprep.subr.bf16.mxu0 0
        %466 = vmatpush1.bf16.xpose.msra.mxu0 0
        %467 = vmatprep.subr.bf16.mxu0 0
        %468 = vmatpush1.bf16.xpose.msra.mxu0 0
        %469 = vmatprep.mubr.bf16.mxu0 0
        %470 = vmatmul.mubr.bf16.gmra.mrb[0].mxu0 %v426
        %v471 = vpop.f32.mrb[0].mxu0
        %v472 = vadd.f32 0.0, %v471
        %v473 = vpop.f32.mrb[0].mxu0
        %v474 = vpop.f32.mrb[0].mxu0
        %v475 = vadd.f32 0.0, %v474
        %v476 = vpop.f32.mrb[0].mxu0
        %477 = vmatprep.mubr.bf16.mxu0 0
        %478 = vmatmul.mubr.bf16.gmra.mrb[0].mxu0 %v429
        %v479 = vpop.f32.mrb[0].mxu0
        %v480 = vadd.f32 0.0, %v479
        %v481 = vpop.f32.mrb[0].mxu0
        %v482 = vpop.f32.mrb[0].mxu0
        %v483 = vpop.f32.mrb[0].mxu0
        %484 = vdwg.mxu0
        %vm485 = vcmask 138240
        %v486 = vsel %vm485, %v472, -inf
        %487 = vmax.xlane.f32.xlu0 %v486
        %v488 = vpop.xlane.xlu0 %487
        %v489 = vsel %vm485, %v475, -inf
        %490 = vmax.xlane.f32.xlu0 %v489
        %v491 = vpop.xlane.xlu0 %490
        %vm492 = vcmask 131072
        %v493 = vsel %vm492, %v480, -inf
        %494 = vmax.xlane.f32.xlu0 %v493
        %v495 = vpop.xlane.xlu0 %494
        %v496 = vsub.f32 %v472, %v488
        %v497 = vsub.f32 %v475, %v491
        %v498 = vsub.f32 %v480, %v495
        %v499 = vmul.f32 %v496, 1.442695
        %v500 = vpow.pop %v499
        %v501 = vmul.f32 %v497, 1.442695
        %v502 = vpow.pop %v501
        %v503 = vmul.f32 %v498, 1.442695
        %v504 = vpow.pop %v503
        %v505 = vsel %vm485, %v500, 0.0
        %506 = vadd.xlane.f32.xlu0 %v505
        %v507 = vpop.xlane.xlu0 %506
        %v508 = vsel %vm485, %v502, 0.0
        %509 = vadd.xlane.f32.xlu0 %v508
        %v510 = vpop.xlane.xlu0 %509
        %v511 = vsel %vm492, %v504, 0.0
        %512 = vadd.xlane.f32.xlu0 %v511
        %v513 = vpop.xlane.xlu0 %512
        %v514 = vrcp.pop %v507
        %v515 = vrcp.pop %v510
        %v516 = vrcp.pop %v513
        %v517 = vmul.f32 %v500, %v514
        %v518 = vmul.f32 %v502, %v515
        %v519 = vmul.f32 %v504, %v516
        %v520 = vpack.c.bf16 %v518, %v517
        %v521 = vpack.c.bf16 %v519, %v519
        %v525 = vunpack.c.l.b16 %v413
        %v526 = vunpack.c.l.b16 %v414
        %v527 = vunpack.c.l.b16 %v415
        %v528 = vpack.c.b16 %v526, %v525
        %v529 = vpack.c.b16 %v527, %v527
        %v532 = vsel %vm485, %v520, 0
        %v535 = vsel %vm485, %v521, 0
        %vm537 = vcmask 1040384
        %v538 = vsel 0, 4294967295, 65535
        %v539 = vsel %vm537, %v538, 0
        %v541 = vand.u32 %v529, %v539
        %543 = vmatprep.subr.bf16.mxu0 0
        %544 = vmatpush1.bf16.msra.mxu0 %v528
        %545 = vmatprep.subr.bf16.mxu0 0
        %546 = vmatpush1.bf16.msra.mxu0 %v541
        %547 = vmatprep.subr.bf16.mxu0 0
        %548 = vmatpush1.bf16.msra.mxu0 0
        %549 = vmatprep.subr.bf16.mxu0 0
        %550 = vmatpush1.bf16.msra.mxu0 0
        %551 = vmatprep.subr.bf16.mxu0 0
        %552 = vmatpush1.bf16.msra.mxu0 0
        %553 = vmatprep.subr.bf16.mxu0 0
        %554 = vmatpush1.bf16.msra.mxu0 0
        %555 = vmatprep.subr.bf16.mxu0 0
        %556 = vmatpush1.bf16.msra.mxu0 0
        %557 = vmatprep.subr.bf16.mxu0 0
        %558 = vmatpush1.bf16.msra.mxu0 0
        %559 = vmatprep.subr.bf16.mxu0 0
        %560 = vmatpush1.bf16.msra.mxu0 0
        %561 = vmatprep.subr.bf16.mxu0 0
        %562 = vmatpush1.bf16.msra.mxu0 0
        %563 = vmatprep.subr.bf16.mxu0 0
        %564 = vmatpush1.bf16.msra.mxu0 0
        %565 = vmatprep.subr.bf16.mxu0 0
        %566 = vmatpush1.bf16.msra.mxu0 0
        %567 = vmatprep.subr.bf16.mxu0 0
        %568 = vmatpush1.bf16.msra.mxu0 0
        %569 = vmatprep.subr.bf16.mxu0 0
        %570 = vmatpush1.bf16.msra.mxu0 0
        %571 = vmatprep.subr.bf16.mxu0 0
        %572 = vmatpush1.bf16.msra.mxu0 0
        %573 = vmatprep.subr.bf16.mxu0 0
        %574 = vmatpush1.bf16.msra.mxu0 0
        %575 = vmatprep.mubr.bf16.mxu0 0
        %576 = vmatmul.mubr.bf16.gmra.mrb[0].mxu0 %v532
        %v577 = vpop.f32.mrb[0].mxu0
        %v578 = vadd.f32 0.0, %v577
        %v579 = vpop.f32.mrb[0].mxu0
        %v580 = vpop.f32.mrb[0].mxu0
        %v581 = vadd.f32 0.0, %v580
        %v582 = vpop.f32.mrb[0].mxu0
        %583 = vmatprep.mubr.bf16.mxu0 0
        %584 = vmatmul.mubr.bf16.gmra.mrb[0].mxu0 %v535
        %v585 = vpop.f32.mrb[0].mxu0
        %v586 = vadd.f32 0.0, %v585
        %v587 = vpop.f32.mrb[0].mxu0
        %v588 = vpop.f32.mrb[0].mxu0
        %v589 = vpop.f32.mrb[0].mxu0
        %590 = vdwg.mxu0
        %v591 = vpack.c.bf16 %v581, %v578
        %v592 = vpack.c.bf16 %v586, %v586
        %v595 = vunpack.c.l.b16 %v591
        %v596 = vunpack.c.h.b16 %v591
        %v597 = vunpack.c.l.b16 %v592
        %v598 = vpack.c.b16 %v595, %v595
        %v599 = vpack.c.b16 %v596, %v596
        %v600 = vpack.c.b16 %v597, %v597
        %vm604 = vcmask 257024
        %605 = vst.msk [vmem:[%s397] sm:$0xf] %vm604, %v598
        %606 = vst.msk [vmem:[%s397 + $0x4] sm:$0xf] %vm604, %v599
        %vm607 = vcmask 253952
        %vm608 = vsmask.f32 256
        %vm609 = vmand %vm607, %vm608
        %v610 = vld [vmem:[%s397 + $0x8] sm:$0x1]
        %v611 = vsel %vm609, %v600, %v610
        %612 = vst [vmem:[%s397 + $0x8] sm:$0x1] %v611
        %615 = vrot.lane.b32.xlu0 %v408, 96
        %v616 = vpop.permute.xlu0 %615
        %617 = vrot.lane.b32.xlu0 %v409, 96
        %v618 = vpop.permute.xlu0 %617
        %619 = vrot.lane.b32.xlu0 %v422, 96
        %v620 = vpop.permute.xlu0 %619
        %621 = vrot.lane.b32.xlu0 %v423, 96
        %v622 = vpop.permute.xlu0 %621
        %v624 = vsel %vm424, %v616, 0
        %v627 = vsel %vm424, %v618, 0
        %v630 = vsel %vm424, %v620, 0
        %v633 = vsel %vm424, %v622, 0
        %635 = vmatprep.subr.bf16.mxu0 0
        %636 = vmatpush1.bf16.xpose.msra.mxu0 %v630
        %637 = vmatprep.subr.bf16.mxu0 0
        %638 = vmatpush1.bf16.xpose.msra.mxu0 %v633
        %639 = vmatprep.subr.bf16.mxu0 0
        %640 = vmatpush1.bf16.xpose.msra.mxu0 0
        %641 = vmatprep.subr.bf16.mxu0 0
        %642 = vmatpush1.bf16.xpose.msra.mxu0 0
        %643 = vmatprep.subr.bf16.mxu0 0
        %644 = vmatpush1.bf16.xpose.msra.mxu0 0
        %645 = vmatprep.subr.bf16.mxu0 0
        %646 = vmatpush1.bf16.xpose.msra.mxu0 0
        %647 = vmatprep.subr.bf16.mxu0 0
        %648 = vmatpush1.bf16.xpose.msra.mxu0 0
        %649 = vmatprep.subr.bf16.mxu0 0
        %650 = vmatpush1.bf16.xpose.msra.mxu0 0
        %651 = vmatprep.subr.bf16.mxu0 0
        %652 = vmatpush1.bf16.xpose.msra.mxu0 0
        %653 = vmatprep.subr.bf16.mxu0 0
        %654 = vmatpush1.bf16.xpose.msra.mxu0 0
        %655 = vmatprep.subr.bf16.mxu0 0
        %656 = vmatpush1.bf16.xpose.msra.mxu0 0
        %657 = vmatprep.subr.bf16.mxu0 0
        %658 = vmatpush1.bf16.xpose.msra.mxu0 0
        %659 = vmatprep.subr.bf16.mxu0 0
        %660 = vmatpush1.bf16.xpose.msra.mxu0 0
        %661 = vmatprep.subr.bf16.mxu0 0
        %662 = vmatpush1.bf16.xpose.msra.mxu0 0
        %663 = vmatprep.subr.bf16.mxu0 0
        %664 = vmatpush1.bf16.xpose.msra.mxu0 0
        %665 = vmatprep.subr.bf16.mxu0 0
        %666 = vmatpush1.bf16.xpose.msra.mxu0 0
        %667 = vmatprep.mubr.bf16.mxu0 0
        %668 = vmatmul.mubr.bf16.gmra.mrb[0].mxu0 %v624
        %v669 = vpop.f32.mrb[0].mxu0
        %v670 = vadd.f32 0.0, %v669
        %v671 = vpop.f32.mrb[0].mxu0
        %v672 = vpop.f32.mrb[0].mxu0
        %v673 = vadd.f32 0.0, %v672
        %v674 = vpop.f32.mrb[0].mxu0
        %675 = vmatprep.mubr.bf16.mxu0 0
        %676 = vmatmul.mubr.bf16.gmra.mrb[0].mxu0 %v627
        %v677 = vpop.f32.mrb[0].mxu0
        %v678 = vadd.f32 0.0, %v677
        %v679 = vpop.f32.mrb[0].mxu0
        %v680 = vpop.f32.mrb[0].mxu0
        %v681 = vpop.f32.mrb[0].mxu0
        %682 = vdwg.mxu0
        %v683 = vsel %vm485, %v670, -inf
        %684 = vmax.xlane.f32.xlu0 %v683
        %v685 = vpop.xlane.xlu0 %684
        %v686 = vsel %vm485, %v673, -inf
        %687 = vmax.xlane.f32.xlu0 %v686
        %v688 = vpop.xlane.xlu0 %687
        %v689 = vsel %vm492, %v678, -inf
        %690 = vmax.xlane.f32.xlu0 %v689
        %v691 = vpop.xlane.xlu0 %690
        %v692 = vsub.f32 %v670, %v685
        %v693 = vsub.f32 %v673, %v688
        %v694 = vsub.f32 %v678, %v691
        %v695 = vmul.f32 %v692, 1.442695
        %v696 = vpow.pop %v695
        %v697 = vmul.f32 %v693, 1.442695
        %v698 = vpow.pop %v697
        %v699 = vmul.f32 %v694, 1.442695
        %v700 = vpow.pop %v699
        %v701 = vsel %vm485, %v696, 0.0
        %702 = vadd.xlane.f32.xlu0 %v701
        %v703 = vpop.xlane.xlu0 %702
        %v704 = vsel %vm485, %v698, 0.0
        %705 = vadd.xlane.f32.xlu0 %v704
        %v706 = vpop.xlane.xlu0 %705
        %v707 = vsel %vm492, %v700, 0.0
        %708 = vadd.xlane.f32.xlu0 %v707
        %v709 = vpop.xlane.xlu0 %708
        %v710 = vrcp.pop %v703
        %v711 = vrcp.pop %v706
        %v712 = vrcp.pop %v709
        %v713 = vmul.f32 %v696, %v710
        %v714 = vmul.f32 %v698, %v711
        %v715 = vmul.f32 %v700, %v712
        %v716 = vpack.c.bf16 %v714, %v713
        %v717 = vpack.c.bf16 %v715, %v715
        %718 = vrot.lane.b32.xlu0 %v528, 96
        %v719 = vpop.permute.xlu0 %718
        %720 = vrot.lane.b32.xlu0 %v529, 96
        %v721 = vpop.permute.xlu0 %720
        %v724 = vsel %vm485, %v716, 0
        %v727 = vsel %vm485, %v717, 0
        %v730 = vand.u32 %v721, %v539
        %732 = vmatprep.subr.bf16.mxu0 0
        %733 = vmatpush1.bf16.msra.mxu0 %v719
        %734 = vmatprep.subr.bf16.mxu0 0
        %735 = vmatpush1.bf16.msra.mxu0 %v730
        %736 = vmatprep.subr.bf16.mxu0 0
        %737 = vmatpush1.bf16.msra.mxu0 0
        %738 = vmatprep.subr.bf16.mxu0 0
        %739 = vmatpush1.bf16.msra.mxu0 0
        %740 = vmatprep.subr.bf16.mxu0 0
        %741 = vmatpush1.bf16.msra.mxu0 0
        %742 = vmatprep.subr.bf16.mxu0 0
        %743 = vmatpush1.bf16.msra.mxu0 0
        %744 = vmatprep.subr.bf16.mxu0 0
        %745 = vmatpush1.bf16.msra.mxu0 0
        %746 = vmatprep.subr.bf16.mxu0 0
        %747 = vmatpush1.bf16.msra.mxu0 0
        %748 = vmatprep.subr.bf16.mxu0 0
        %749 = vmatpush1.bf16.msra.mxu0 0
        %750 = vmatprep.subr.bf16.mxu0 0
        %751 = vmatpush1.bf16.msra.mxu0 0
        %752 = vmatprep.subr.bf16.mxu0 0
        %753 = vmatpush1.bf16.msra.mxu0 0
        %754 = vmatprep.subr.bf16.mxu0 0
        %755 = vmatpush1.bf16.msra.mxu0 0
        %756 = vmatprep.subr.bf16.mxu0 0
        %757 = vmatpush1.bf16.msra.mxu0 0
        %758 = vmatprep.subr.bf16.mxu0 0
        %759 = vmatpush1.bf16.msra.mxu0 0
        %760 = vmatprep.subr.bf16.mxu0 0
        %761 = vmatpush1.bf16.msra.mxu0 0
        %762 = vmatprep.subr.bf16.mxu0 0
        %763 = vmatpush1.bf16.msra.mxu0 0
        %764 = vmatprep.mubr.bf16.mxu0 0
        %765 = vmatmul.mubr.bf16.gmra.mrb[0].mxu0 %v724
        %v766 = vpop.f32.mrb[0].mxu0
        %v767 = vadd.f32 0.0, %v766
        %v768 = vpop.f32.mrb[0].mxu0
        %v769 = vpop.f32.mrb[0].mxu0
        %v770 = vadd.f32 0.0, %v769
        %v771 = vpop.f32.mrb[0].mxu0
        %772 = vmatprep.mubr.bf16.mxu0 0
        %773 = vmatmul.mubr.bf16.gmra.mrb[0].mxu0 %v727
        %v774 = vpop.f32.mrb[0].mxu0
        %v775 = vadd.f32 0.0, %v774
        %v776 = vpop.f32.mrb[0].mxu0
        %v777 = vpop.f32.mrb[0].mxu0
        %v778 = vpop.f32.mrb[0].mxu0
        %779 = vdwg.mxu0
        %v780 = vpack.c.bf16 %v770, %v767
        %v781 = vpack.c.bf16 %v775, %v775
        %v784 = vunpack.c.l.b16 %v780
        %v785 = vunpack.c.h.b16 %v780
        %v786 = vunpack.c.l.b16 %v781
        %v787 = vpack.c.b16 %v784, %v784
        %v788 = vpack.c.b16 %v785, %v785
        %v789 = vpack.c.b16 %v786, %v786
        %790 = vrot.lane.b32.xlu0 %v787, 32
        %v791 = vpop.permute.xlu0 %790
        %792 = vrot.lane.b32.xlu0 %v788, 32
        %v793 = vpop.permute.xlu0 %792
        %794 = vrot.lane.b32.xlu0 %v789, 32
        %v795 = vpop.permute.xlu0 %794
        %vm799 = vcmask 519424
        %800 = vst.msk [vmem:[%s397] sm:$0xf] %vm799, %v791
        %801 = vst.msk [vmem:[%s397 + $0x4] sm:$0xf] %vm799, %v793
        %vm802 = vcmask 516352
        %vm803 = vmand %vm802, %vm608
        %v804 = vld [vmem:[%s397 + $0x8] sm:$0x1]
        %v805 = vsel %vm803, %v795, %v804
        %806 = vst [vmem:[%s397 + $0x8] sm:$0x1] %v805
        %807 = vrot.lane.b32.xlu0 %v408, 64
        %v808 = vpop.permute.xlu0 %807
        %809 = vrot.lane.b32.xlu0 %v409, 64
        %v810 = vpop.permute.xlu0 %809
        %811 = vrot.lane.b32.xlu0 %v422, 64
        %v812 = vpop.permute.xlu0 %811
        %813 = vrot.lane.b32.xlu0 %v423, 64
        %v814 = vpop.permute.xlu0 %813
        %v816 = vsel %vm424, %v808, 0
        %v819 = vsel %vm424, %v810, 0
        %v822 = vsel %vm424, %v812, 0
        %v825 = vsel %vm424, %v814, 0
        %827 = vmatprep.subr.bf16.mxu0 0
        %828 = vmatpush1.bf16.xpose.msra.mxu0 %v822
        %829 = vmatprep.subr.bf16.mxu0 0
        %830 = vmatpush1.bf16.xpose.msra.mxu0 %v825
        %831 = vmatprep.subr.bf16.mxu0 0
        %832 = vmatpush1.bf16.xpose.msra.mxu0 0
        %833 = vmatprep.subr.bf16.mxu0 0
        %834 = vmatpush1.bf16.xpose.msra.mxu0 0
        %835 = vmatprep.subr.bf16.mxu0 0
        %836 = vmatpush1.bf16.xpose.msra.mxu0 0
        %837 = vmatprep.subr.bf16.mxu0 0
        %838 = vmatpush1.bf16.xpose.msra.mxu0 0
        %839 = vmatprep.subr.bf16.mxu0 0
        %840 = vmatpush1.bf16.xpose.msra.mxu0 0
        %841 = vmatprep.subr.bf16.mxu0 0
        %842 = vmatpush1.bf16.xpose.msra.mxu0 0
        %843 = vmatprep.subr.bf16.mxu0 0
        %844 = vmatpush1.bf16.xpose.msra.mxu0 0
        %845 = vmatprep.subr.bf16.mxu0 0
        %846 = vmatpush1.bf16.xpose.msra.mxu0 0
        %847 = vmatprep.subr.bf16.mxu0 0
        %848 = vmatpush1.bf16.xpose.msra.mxu0 0
        %849 = vmatprep.subr.bf16.mxu0 0
        %850 = vmatpush1.bf16.xpose.msra.mxu0 0
        %851 = vmatprep.subr.bf16.mxu0 0
        %852 = vmatpush1.bf16.xpose.msra.mxu0 0
        %853 = vmatprep.subr.bf16.mxu0 0
        %854 = vmatpush1.bf16.xpose.msra.mxu0 0
        %855 = vmatprep.subr.bf16.mxu0 0
        %856 = vmatpush1.bf16.xpose.msra.mxu0 0
        %857 = vmatprep.subr.bf16.mxu0 0
        %858 = vmatpush1.bf16.xpose.msra.mxu0 0
        %859 = vmatprep.mubr.bf16.mxu0 0
        %860 = vmatmul.mubr.bf16.gmra.mrb[0].mxu0 %v816
        %v861 = vpop.f32.mrb[0].mxu0
        %v862 = vadd.f32 0.0, %v861
        %v863 = vpop.f32.mrb[0].mxu0
        %v864 = vpop.f32.mrb[0].mxu0
        %v865 = vadd.f32 0.0, %v864
        %v866 = vpop.f32.mrb[0].mxu0
        %867 = vmatprep.mubr.bf16.mxu0 0
        %868 = vmatmul.mubr.bf16.gmra.mrb[0].mxu0 %v819
        %v869 = vpop.f32.mrb[0].mxu0
        %v870 = vadd.f32 0.0, %v869
        %v871 = vpop.f32.mrb[0].mxu0
        %v872 = vpop.f32.mrb[0].mxu0
        %v873 = vpop.f32.mrb[0].mxu0
        %874 = vdwg.mxu0
        %v875 = vsel %vm485, %v862, -inf
        %876 = vmax.xlane.f32.xlu0 %v875
        %v877 = vpop.xlane.xlu0 %876
        %v878 = vsel %vm485, %v865, -inf
        %879 = vmax.xlane.f32.xlu0 %v878
        %v880 = vpop.xlane.xlu0 %879
        %v881 = vsel %vm492, %v870, -inf
        %882 = vmax.xlane.f32.xlu0 %v881
        %v883 = vpop.xlane.xlu0 %882
        %v884 = vsub.f32 %v862, %v877
        %v885 = vsub.f32 %v865, %v880
        %v886 = vsub.f32 %v870, %v883
        %v887 = vmul.f32 %v884, 1.442695
        %v888 = vpow.pop %v887
        %v889 = vmul.f32 %v885, 1.442695
        %v890 = vpow.pop %v889
        %v891 = vmul.f32 %v886, 1.442695
        %v892 = vpow.pop %v891
        %v893 = vsel %vm485, %v888, 0.0
        %894 = vadd.xlane.f32.xlu0 %v893
        %v895 = vpop.xlane.xlu0 %894
        %v896 = vsel %vm485, %v890, 0.0
        %897 = vadd.xlane.f32.xlu0 %v896
        %v898 = vpop.xlane.xlu0 %897
        %v899 = vsel %vm492, %v892, 0.0
        %900 = vadd.xlane.f32.xlu0 %v899
        %v901 = vpop.xlane.xlu0 %900
        %v902 = vrcp.pop %v895
        %v903 = vrcp.pop %v898
        %v904 = vrcp.pop %v901
        %v905 = vmul.f32 %v888, %v902
        %v906 = vmul.f32 %v890, %v903
        %v907 = vmul.f32 %v892, %v904
        %v908 = vpack.c.bf16 %v906, %v905
        %v909 = vpack.c.bf16 %v907, %v907
        %910 = vrot.lane.b32.xlu0 %v528, 64
        %v911 = vpop.permute.xlu0 %910
        %912 = vrot.lane.b32.xlu0 %v529, 64
        %v913 = vpop.permute.xlu0 %912
        %v916 = vsel %vm485, %v908, 0
        %v919 = vsel %vm485, %v909, 0
        %v922 = vand.u32 %v913, %v539
        %924 = vmatprep.subr.bf16.mxu0 0
        %925 = vmatpush1.bf16.msra.mxu0 %v911
        %926 = vmatprep.subr.bf16.mxu0 0
        %927 = vmatpush1.bf16.msra.mxu0 %v922
        %928 = vmatprep.subr.bf16.mxu0 0
        %929 = vmatpush1.bf16.msra.mxu0 0
        %930 = vmatprep.subr.bf16.mxu0 0
        %931 = vmatpush1.bf16.msra.mxu0 0
        %932 = vmatprep.subr.bf16.mxu0 0
        %933 = vmatpush1.bf16.msra.mxu0 0
        %934 = vmatprep.subr.bf16.mxu0 0
        %935 = vmatpush1.bf16.msra.mxu0 0
        %936 = vmatprep.subr.bf16.mxu0 0
        %937 = vmatpush1.bf16.msra.mxu0 0
        %938 = vmatprep.subr.bf16.mxu0 0
        %939 = vmatpush1.bf16.msra.mxu0 0
        %940 = vmatprep.subr.bf16.mxu0 0
        %941 = vmatpush1.bf16.msra.mxu0 0
        %942 = vmatprep.subr.bf16.mxu0 0
        %943 = vmatpush1.bf16.msra.mxu0 0
        %944 = vmatprep.subr.bf16.mxu0 0
        %945 = vmatpush1.bf16.msra.mxu0 0
        %946 = vmatprep.subr.bf16.mxu0 0
        %947 = vmatpush1.bf16.msra.mxu0 0
        %948 = vmatprep.subr.bf16.mxu0 0
        %949 = vmatpush1.bf16.msra.mxu0 0
        %950 = vmatprep.subr.bf16.mxu0 0
        %951 = vmatpush1.bf16.msra.mxu0 0
        %952 = vmatprep.subr.bf16.mxu0 0
        %953 = vmatpush1.bf16.msra.mxu0 0
        %954 = vmatprep.subr.bf16.mxu0 0
        %955 = vmatpush1.bf16.msra.mxu0 0
        %956 = vmatprep.mubr.bf16.mxu0 0
        %957 = vmatmul.mubr.bf16.gmra.mrb[0].mxu0 %v916
        %v958 = vpop.f32.mrb[0].mxu0
        %v959 = vadd.f32 0.0, %v958
        %v960 = vpop.f32.mrb[0].mxu0
        %v961 = vpop.f32.mrb[0].mxu0
        %v962 = vadd.f32 0.0, %v961
        %v963 = vpop.f32.mrb[0].mxu0
        %964 = vmatprep.mubr.bf16.mxu0 0
        %965 = vmatmul.mubr.bf16.gmra.mrb[0].mxu0 %v919
        %v966 = vpop.f32.mrb[0].mxu0
        %v967 = vadd.f32 0.0, %v966
        %v968 = vpop.f32.mrb[0].mxu0
        %v969 = vpop.f32.mrb[0].mxu0
        %v970 = vpop.f32.mrb[0].mxu0
        %971 = vdwg.mxu0
        %v972 = vpack.c.bf16 %v962, %v959
        %v973 = vpack.c.bf16 %v967, %v967
        %v976 = vunpack.c.l.b16 %v972
        %v977 = vunpack.c.h.b16 %v972
        %v978 = vunpack.c.l.b16 %v973
        %v979 = vpack.c.b16 %v976, %v976
        %v980 = vpack.c.b16 %v977, %v977
        %v981 = vpack.c.b16 %v978, %v978
        %982 = vrot.lane.b32.xlu0 %v979, 64
        %v983 = vpop.permute.xlu0 %982
        %984 = vrot.lane.b32.xlu0 %v980, 64
        %v985 = vpop.permute.xlu0 %984
        %986 = vrot.lane.b32.xlu0 %v981, 64
        %v987 = vpop.permute.xlu0 %986
        %vm991 = vcmask 781824
        %992 = vst.msk [vmem:[%s397] sm:$0xf] %vm991, %v983
        %993 = vst.msk [vmem:[%s397 + $0x4] sm:$0xf] %vm991, %v985
        %vm994 = vcmask 778752
        %vm995 = vmand %vm994, %vm608
        %v996 = vld [vmem:[%s397 + $0x8] sm:$0x1]
        %v997 = vsel %vm995, %v987, %v996
        %998 = vst [vmem:[%s397 + $0x8] sm:$0x1] %v997
        %999 = vrot.lane.b32.xlu0 %v408, 32
        %v1000 = vpop.permute.xlu0 %999
        %1001 = vrot.lane.b32.xlu0 %v409, 32
        %v1002 = vpop.permute.xlu0 %1001
        %1003 = vrot.lane.b32.xlu0 %v422, 32
        %v1004 = vpop.permute.xlu0 %1003
        %1005 = vrot.lane.b32.xlu0 %v423, 32
        %v1006 = vpop.permute.xlu0 %1005
        %v1008 = vsel %vm424, %v1000, 0
        %v1011 = vsel %vm424, %v1002, 0
        %v1014 = vsel %vm424, %v1004, 0
        %v1017 = vsel %vm424, %v1006, 0
        %1019 = vmatprep.subr.bf16.mxu0 0
        %1020 = vmatpush1.bf16.xpose.msra.mxu0 %v1014
        %1021 = vmatprep.subr.bf16.mxu0 0
        %1022 = vmatpush1.bf16.xpose.msra.mxu0 %v1017
        %1023 = vmatprep.subr.bf16.mxu0 0
        %1024 = vmatpush1.bf16.xpose.msra.mxu0 0
        %1025 = vmatprep.subr.bf16.mxu0 0
        %1026 = vmatpush1.bf16.xpose.msra.mxu0 0
        %1027 = vmatprep.subr.bf16.mxu0 0
        %1028 = vmatpush1.bf16.xpose.msra.mxu0 0
        %1029 = vmatprep.subr.bf16.mxu0 0
        %1030 = vmatpush1.bf16.xpose.msra.mxu0 0
        %1031 = vmatprep.subr.bf16.mxu0 0
        %1032 = vmatpush1.bf16.xpose.msra.mxu0 0
        %1033 = vmatprep.subr.bf16.mxu0 0
        %1034 = vmatpush1.bf16.xpose.msra.mxu0 0
        %1035 = vmatprep.subr.bf16.mxu0 0
        %1036 = vmatpush1.bf16.xpose.msra.mxu0 0
        %1037 = vmatprep.subr.bf16.mxu0 0
        %1038 = vmatpush1.bf16.xpose.msra.mxu0 0
        %1039 = vmatprep.subr.bf16.mxu0 0
        %1040 = vmatpush1.bf16.xpose.msra.mxu0 0
        %1041 = vmatprep.subr.bf16.mxu0 0
        %1042 = vmatpush1.bf16.xpose.msra.mxu0 0
        %1043 = vmatprep.subr.bf16.mxu0 0
        %1044 = vmatpush1.bf16.xpose.msra.mxu0 0
        %1045 = vmatprep.subr.bf16.mxu0 0
        %1046 = vmatpush1.bf16.xpose.msra.mxu0 0
        %1047 = vmatprep.subr.bf16.mxu0 0
        %1048 = vmatpush1.bf16.xpose.msra.mxu0 0
        %1049 = vmatprep.subr.bf16.mxu0 0
        %1050 = vmatpush1.bf16.xpose.msra.mxu0 0
        %1051 = vmatprep.mubr.bf16.mxu0 0
        %1052 = vmatmul.mubr.bf16.gmra.mrb[0].mxu0 %v1008
        %v1053 = vpop.f32.mrb[0].mxu0
        %v1054 = vadd.f32 0.0, %v1053
        %v1055 = vpop.f32.mrb[0].mxu0
        %v1056 = vpop.f32.mrb[0].mxu0
        %v1057 = vadd.f32 0.0, %v1056
        %v1058 = vpop.f32.mrb[0].mxu0
        %1059 = vmatprep.mubr.bf16.mxu0 0
        %1060 = vmatmul.mubr.bf16.gmra.mrb[0].mxu0 %v1011
        %v1061 = vpop.f32.mrb[0].mxu0
        %v1062 = vadd.f32 0.0, %v1061
        %v1063 = vpop.f32.mrb[0].mxu0
        %v1064 = vpop.f32.mrb[0].mxu0
        %v1065 = vpop.f32.mrb[0].mxu0
        %1066 = vdwg.mxu0
        %v1067 = vsel %vm485, %v1054, -inf
        %1068 = vmax.xlane.f32.xlu0 %v1067
        %v1069 = vpop.xlane.xlu0 %1068
        %v1070 = vsel %vm485, %v1057, -inf
        %1071 = vmax.xlane.f32.xlu0 %v1070
        %v1072 = vpop.xlane.xlu0 %1071
        %v1073 = vsel %vm492, %v1062, -inf
        %1074 = vmax.xlane.f32.xlu0 %v1073
        %v1075 = vpop.xlane.xlu0 %1074
        %v1076 = vsub.f32 %v1054, %v1069
        %v1077 = vsub.f32 %v1057, %v1072
        %v1078 = vsub.f32 %v1062, %v1075
        %v1079 = vmul.f32 %v1076, 1.442695
        %v1080 = vpow.pop %v1079
        %v1081 = vmul.f32 %v1077, 1.442695
        %v1082 = vpow.pop %v1081
        %v1083 = vmul.f32 %v1078, 1.442695
        %v1084 = vpow.pop %v1083
        %v1085 = vsel %vm485, %v1080, 0.0
        %1086 = vadd.xlane.f32.xlu0 %v1085
        %v1087 = vpop.xlane.xlu0 %1086
        %v1088 = vsel %vm485, %v1082, 0.0
        %1089 = vadd.xlane.f32.xlu0 %v1088
        %v1090 = vpop.xlane.xlu0 %1089
        %v1091 = vsel %vm492, %v1084, 0.0
        %1092 = vadd.xlane.f32.xlu0 %v1091
        %v1093 = vpop.xlane.xlu0 %1092
        %v1094 = vrcp.pop %v1087
        %v1095 = vrcp.pop %v1090
        %v1096 = vrcp.pop %v1093
        %v1097 = vmul.f32 %v1080, %v1094
        %v1098 = vmul.f32 %v1082, %v1095
        %v1099 = vmul.f32 %v1084, %v1096
        %v1100 = vpack.c.bf16 %v1098, %v1097
        %v1101 = vpack.c.bf16 %v1099, %v1099
        %1102 = vrot.lane.b32.xlu0 %v528, 32
        %v1103 = vpop.permute.xlu0 %1102
        %1104 = vrot.lane.b32.xlu0 %v529, 32
        %v1105 = vpop.permute.xlu0 %1104
        %v1108 = vsel %vm485, %v1100, 0
        %v1111 = vsel %vm485, %v1101, 0
        %v1114 = vand.u32 %v1105, %v539
        %1116 = vmatprep.subr.bf16.mxu0 0
        %1117 = vmatpush1.bf16.msra.mxu0 %v1103
        %1118 = vmatprep.subr.bf16.mxu0 0
        %1119 = vmatpush1.bf16.msra.mxu0 %v1114
        %1120 = vmatprep.subr.bf16.mxu0 0
        %1121 = vmatpush1.bf16.msra.mxu0 0
        %1122 = vmatprep.subr.bf16.mxu0 0
        %1123 = vmatpush1.bf16.msra.mxu0 0
        %1124 = vmatprep.subr.bf16.mxu0 0
        %1125 = vmatpush1.bf16.msra.mxu0 0
        %1126 = vmatprep.subr.bf16.mxu0 0
        %1127 = vmatpush1.bf16.msra.mxu0 0
        %1128 = vmatprep.subr.bf16.mxu0 0
        %1129 = vmatpush1.bf16.msra.mxu0 0
        %1130 = vmatprep.subr.bf16.mxu0 0
        %1131 = vmatpush1.bf16.msra.mxu0 0
        %1132 = vmatprep.subr.bf16.mxu0 0
        %1133 = vmatpush1.bf16.msra.mxu0 0
        %1134 = vmatprep.subr.bf16.mxu0 0
        %1135 = vmatpush1.bf16.msra.mxu0 0
        %1136 = vmatprep.subr.bf16.mxu0 0
        %1137 = vmatpush1.bf16.msra.mxu0 0
        %1138 = vmatprep.subr.bf16.mxu0 0
        %1139 = vmatpush1.bf16.msra.mxu0 0
        %1140 = vmatprep.subr.bf16.mxu0 0
        %1141 = vmatpush1.bf16.msra.mxu0 0
        %1142 = vmatprep.subr.bf16.mxu0 0
        %1143 = vmatpush1.bf16.msra.mxu0 0
        %1144 = vmatprep.subr.bf16.mxu0 0
        %1145 = vmatpush1.bf16.msra.mxu0 0
        %1146 = vmatprep.subr.bf16.mxu0 0
        %1147 = vmatpush1.bf16.msra.mxu0 0
        %1148 = vmatprep.mubr.bf16.mxu0 0
        %1149 = vmatmul.mubr.bf16.gmra.mrb[0].mxu0 %v1108
        %v1150 = vpop.f32.mrb[0].mxu0
        %v1151 = vadd.f32 0.0, %v1150
        %v1152 = vpop.f32.mrb[0].mxu0
        %v1153 = vpop.f32.mrb[0].mxu0
        %v1154 = vadd.f32 0.0, %v1153
        %v1155 = vpop.f32.mrb[0].mxu0
        %1156 = vmatprep.mubr.bf16.mxu0 0
        %1157 = vmatmul.mubr.bf16.gmra.mrb[0].mxu0 %v1111
        %v1158 = vpop.f32.mrb[0].mxu0
        %v1159 = vadd.f32 0.0, %v1158
        %v1160 = vpop.f32.mrb[0].mxu0
        %v1161 = vpop.f32.mrb[0].mxu0
        %v1162 = vpop.f32.mrb[0].mxu0
        %1163 = vdwg.mxu0
        %v1164 = vpack.c.bf16 %v1154, %v1151
        %v1165 = vpack.c.bf16 %v1159, %v1159
        %v1168 = vunpack.c.l.b16 %v1164
        %v1169 = vunpack.c.h.b16 %v1164
        %v1170 = vunpack.c.l.b16 %v1165
        %v1171 = vpack.c.b16 %v1168, %v1168
        %v1172 = vpack.c.b16 %v1169, %v1169
        %v1173 = vpack.c.b16 %v1170, %v1170
        %1174 = vrot.lane.b32.xlu0 %v1171, 96
        %v1175 = vpop.permute.xlu0 %1174
        %1176 = vrot.lane.b32.xlu0 %v1172, 96
        %v1177 = vpop.permute.xlu0 %1176
        %1178 = vrot.lane.b32.xlu0 %v1173, 96
        %v1179 = vpop.permute.xlu0 %1178
        %vm1183 = vcmask 1044224
        %1184 = vst.msk [vmem:[%s397] sm:$0xf] %vm1183, %v1175
        %1185 = vst.msk [vmem:[%s397 + $0x4] sm:$0xf] %vm1183, %v1177
        %vm1186 = vcmask 1041152
        %vm1187 = vmand %vm1186, %vm608
        %v1188 = vld [vmem:[%s397 + $0x8] sm:$0x1]
        %v1189 = vsel %vm1187, %v1179, %v1188
        %1190 = vst [vmem:[%s397 + $0x8] sm:$0x1] %v1189
        %p1191 = scmp.lt.s32.totalorder %s18, 1
        %s1192 = scalar_select %p1191, %s18, 1
        %p1193 = scmp.lt.s32.totalorder %s19, 0
        %s1194 = scalar_select %p1193, %s19, 0
        %s1195 = smul.addr %s1192, 3
        %s1196 = sadd.s32 %s1194, %s1195
        %s1197 = smul.addr %s1196, 4
        %s1198 = scalar_lea.vmem %s3, %s1197
        // Predicated region
        $region156: #{encode_image.14} parent=142 // pred_check
          %p1199 = pneg %p134
        $region157: #{encode_image.14} parent=142 // pred_check_branch
          %1201 = sbr.rel (%p1199) target = $region159
        $region158: #{encode_image.14} parent=142 // pred_region
          _
        $region159: #{encode_image.14} parent=142 // pred_fallthru
          _
      $region143: #{encode_image.14} parent=5 // pred_fallthru
        _
      %p1202 = scmp.le.s32.totalorder 2, %s9
      // Predicated region
      $region160: #{encode_image.14} parent=5 // pred_check
        %p1203 = pneg %p1202
      $region161: #{encode_image.14} parent=5 // pred_check_branch
        %1205 = sbr.rel (%p1203) target = $region163
      $region162: #{encode_image.14} parent=5 // pred_region
        %s1206 = ssub.s32 %s9, 2
        // Predicated region
        $region164: #{encode_image.14} parent=162 // pred_check
          %p1207 = pneg %p140
        $region165: #{encode_image.14} parent=162 // pred_check_branch
          %1209 = sbr.rel (%p1207) target = $region167
        $region166: #{encode_image.14} parent=162 // pred_region
          %p1210 = scmp.lt.s32.totalorder %s20, 1
          %s1211 = scalar_select %p1210, %s20, 1
          %p1212 = scmp.lt.s32.totalorder %s21, 0
          %s1213 = scalar_select %p1212, %s21, 0
          %s1214 = smul.addr %s1211, 3
          %s1215 = sadd.s32 %s1213, %s1214
          %s1216 = smul.addr %s1215, 4
          %s1217 = scalar_lea.vmem %s3, %s1216
        $region167: #{encode_image.14} parent=162 // pred_fallthru
          _
      $region163: #{encode_image.14} parent=5 // pred_fallthru
        _
    $region6: #{encode_image.14} parent=1 // loop_footer
      %s13 = sadd.s32 1, %s9
    $region7: #{encode_image.14} parent=1 // loop_footer_branch
      %8 = sbr.rel target = $region3
    $region8: #{encode_image.14} parent=1 // loop_exit
      _

// kernel: encode_image.13
$region0: #{encode_image.13}
  #allocation0 [shape = 'u32[]', space=smem, size = 0x4, offset = 0x4, fixed_abs, tag = 'smem constant byte address 0x4 - core index']
  #allocation1 [shape = 'u32[144,128]{1,0:T(1,128)}', space=vmem, size = 0x12000, scoped, tag = 'internal scratch']
  #allocation2 [shape = 'bf16[34,128]{1,0:T(8,128)(2,1)}', space=vmem, size = 0x2800, scoped, tag = 'scratch operand']
  %s0 = inlined_call_operand.vmem [shape: f32[34,128], index: 0, kind: input, shape index: {}]
  %s1 = inlined_call_operand.vmem [shape: f32[1,128], index: 1, kind: input, shape index: {}]
  %s2 = inlined_call_operand.vmem [shape: f32[1,128], index: 2, kind: input, shape index: {}]
  %s3 = inlined_call_operand.vmem [shape: bf16[128,384], index: 3, kind: input, shape index: {}]
  %s4 = inlined_call_operand.vmem [shape: f32[1,384], index: 4, kind: input, shape index: {}]
  %s5 = inlined_call_operand.vmem [shape: bf16[34,384], index: 5, kind: output, shape index: {}]
  %s6 = sld [smem:[#allocation0]]
  $region34: #{encode_image.13} parent=0
    _
  %s8 = ssub.s32 1, %s6
  %s9 = scalar_select 0, %s8, %s6
  // Predicated region
  $region2: #{encode_image.13} parent=0 // pred_check
    _
  $region3: #{encode_image.13} parent=0 // pred_check_branch
    %11 = sbr.rel (0) target = $region5
  $region4: #{encode_image.13} parent=0 // pred_region
    _
  $region5: #{encode_image.13} parent=0 // pred_fallthru
    _
  // Predicated region
  $region6: #{encode_image.13} parent=0 // pred_check
    _
  $region7: #{encode_image.13} parent=0 // pred_check_branch
    %13 = sbr.rel (0) target = $region9
  $region8: #{encode_image.13} parent=0 // pred_region
    _
  $region9: #{encode_image.13} parent=0 // pred_fallthru
    _
  // Predicated region
  $region10: #{encode_image.13} parent=0 // pred_check
    _
  $region11: #{encode_image.13} parent=0 // pred_check_branch
    %15 = sbr.rel (0) target = $region13
  $region12: #{encode_image.13} parent=0 // pred_region
    _
  $region13: #{encode_image.13} parent=0 // pred_fallthru
    _
  // Predicated region
  $region14: #{encode_image.13} parent=0 // pred_check
    _
  $region15: #{encode_image.13} parent=0 // pred_check_branch
    %17 = sbr.rel (0) target = $region17
  $region16: #{encode_image.13} parent=0 // pred_region
    _
  $region17: #{encode_image.13} parent=0 // pred_fallthru
    _
  // Predicated region
  $region18: #{encode_image.13} parent=0 // pred_check
    _
  $region19: #{encode_image.13} parent=0 // pred_check_branch
    %19 = sbr.rel (0) target = $region21
  $region20: #{encode_image.13} parent=0 // pred_region
    _
  $region21: #{encode_image.13} parent=0 // pred_fallthru
    _
  %p21 = scmp.eq.s32.totalorder 0, 0
  // Predicated region
  $region22: #{encode_image.13} parent=0 // pred_check
    %p22 = pneg %p21
  $region23: #{encode_image.13} parent=0 // pred_check_branch
    %24 = sbr.rel (%p22) target = $region25
  $region24: #{encode_image.13} parent=0 // pred_region
    %v25 = vld [vmem:[%s0] sm:$0xff]
    %v26 = vld [vmem:[%s0 + $0x8] sm:$0xff]
    %v27 = vld [vmem:[%s0 + $0x10] sm:$0xff]
    %v28 = vld [vmem:[%s0 + $0x18] sm:$0xff]
    %v29 = vld [vmem:[%s0 + $0x20] sm:$0x3]
    %30 = vadd.xlane.f32.xlu0 %v25
    %v31 = vpop.xlane.xlu0 %30
    %32 = vadd.xlane.f32.xlu0 %v26
    %v33 = vpop.xlane.xlu0 %32
    %34 = vadd.xlane.f32.xlu0 %v27
    %v35 = vpop.xlane.xlu0 %34
    %36 = vadd.xlane.f32.xlu0 %v28
    %v37 = vpop.xlane.xlu0 %36
    %vm38 = vcmask 1041408
    %v39 = vsel %vm38, %v29, 0.0
    %40 = vadd.xlane.f32.xlu0 %v39
    %v41 = vpop.xlane.xlu0 %40
    %v42 = vrcp.pop 128.0
    %v43 = vmul.f32 %v31, %v42
    %v44 = vmul.f32 %v33, %v42
    %v45 = vmul.f32 %v35, %v42
    %v46 = vmul.f32 %v37, %v42
    %v47 = vmul.f32 %v41, %v42
    %v48 = vsub.f32 %v25, %v43
    %v49 = vsub.f32 %v26, %v44
    %v50 = vsub.f32 %v27, %v45
    %v51 = vsub.f32 %v28, %v46
    %v52 = vsub.f32 %v29, %v47
    %v53 = vmul.f32 %v48, %v48
    %v54 = vmul.f32 %v49, %v49
    %v55 = vmul.f32 %v50, %v50
    %v56 = vmul.f32 %v51, %v51
    %v57 = vmul.f32 %v52, %v52
    %58 = vadd.xlane.f32.xlu0 %v53
    %v59 = vpop.xlane.xlu0 %58
    %60 = vadd.xlane.f32.xlu0 %v54
    %v61 = vpop.xlane.xlu0 %60
    %62 = vadd.xlane.f32.xlu0 %v55
    %v63 = vpop.xlane.xlu0 %62
    %64 = vadd.xlane.f32.xlu0 %v56
    %v65 = vpop.xlane.xlu0 %64
    %v66 = vsel %vm38, %v57, 0.0
    %67 = vadd.xlane.f32.xlu0 %v66
    %v68 = vpop.xlane.xlu0 %67
    %v69 = vmul.f32 %v59, %v42
    %v70 = vmul.f32 %v61, %v42
    %v71 = vmul.f32 %v63, %v42
    %v72 = vmul.f32 %v65, %v42
    %v73 = vmul.f32 %v68, %v42
    %v74 = vadd.f32 %v69, 1e-05
    %v75 = vadd.f32 %v70, 1e-05
    %v76 = vadd.f32 %v71, 1e-05
    %v77 = vadd.f32 %v72, 1e-05
    %v78 = vadd.f32 %v73, 1e-05
    %v79 = vrsqrt.pop %v74
    %v80 = vrsqrt.pop %v75
    %v81 = vrsqrt.pop %v76
    %v82 = vrsqrt.pop %v77
    %v83 = vrsqrt.pop %v78
    %v84 = vmul.f32 %v48, %v79
    %v85 = vmul.f32 %v49, %v80
    %v86 = vmul.f32 %v50, %v81
    %v87 = vmul.f32 %v51, %v82
    %v88 = vmul.f32 %v52, %v83
    %v89 = vld [vmem:[%s1] sm:$0x1]
    %v91 = vlaneseq
    %v92 = vshrl.u32 %v91, 7
    %v93 = vsub.s32 0, %v92
    %v94 = vrot.slane %v89, %v93
    %v96 = vmul.f32 %v84, %v94
    %v97 = vmul.f32 %v85, %v94
    %v98 = vmul.f32 %v86, %v94
    %v99 = vmul.f32 %v87, %v94
    %v100 = vmul.f32 %v88, %v94
    %v101 = vld [vmem:[%s2] sm:$0x1]
    %v103 = vlaneseq
    %v104 = vshrl.u32 %v103, 7
    %v105 = vsub.s32 0, %v104
    %v106 = vrot.slane %v101, %v105
    %v108 = vadd.f32 %v96, %v106
    %v109 = vadd.f32 %v97, %v106
    %v110 = vadd.f32 %v98, %v106
    %v111 = vadd.f32 %v99, %v106
    %v112 = vadd.f32 %v100, %v106
    %v113 = vpack.c.bf16 %v109, %v108
    %v114 = vpack.c.bf16 %v111, %v110
    %v115 = vpack.c.bf16 %v112, %v112
    %v119 = vunpack.c.l.b16 %v113
    %v120 = vunpack.c.h.b16 %v113
    %v121 = vunpack.c.l.b16 %v114
    %v122 = vunpack.c.h.b16 %v114
    %v123 = vunpack.c.l.b16 %v115
    %v124 = vpack.c.b16 %v119, %v119
    %v125 = vpack.c.b16 %v120, %v120
    %v126 = vpack.c.b16 %v121, %v121
    %v127 = vpack.c.b16 %v122, %v122
    %v128 = vpack.c.b16 %v123, %v123
    %134 = vst [vmem:[#allocation2] sm:$0xf] %v124
    %135 = vst [vmem:[#allocation2 + $0x4] sm:$0xf] %v125
    %136 = vst [vmem:[#allocation2 + $0x8] sm:$0xf] %v126
    %137 = vst [vmem:[#allocation2 + $0xc] sm:$0xf] %v127
    %138 = vst [vmem:[#allocation2 + $0x10] sm:$0x1] %v128
  $region25: #{encode_image.13} parent=0 // pred_fallthru
    _
  %v139 = vld [vmem:[#allocation2] sm:$0xf]
  %v140 = vld [vmem:[#allocation2 + $0x4] sm:$0xf]
  %v141 = vld [vmem:[#allocation2 + $0x8] sm:$0xf]
  %v142 = vld [vmem:[#allocation2 + $0xc] sm:$0xf]
  %v143 = vld [vmem:[#allocation2 + $0x10] sm:$0x1]
  %v144 = vld [vmem:[%s3] sm:$0xff]
  %v145 = vld [vmem:[%s3 + $0x8] sm:$0xf]
  %v146 = vld [vmem:[%s3 + $0xc] sm:$0xff]
  %v147 = vld [vmem:[%s3 + $0x14] sm:$0xf]
  %v148 = vld [vmem:[%s3 + $0x18] sm:$0xff]
  %v149 = vld [vmem:[%s3 + $0x20] sm:$0xf]
  %v150 = vld [vmem:[%s3 + $0x24] sm:$0xff]
  %v151 = vld [vmem:[%s3 + $0x2c] sm:$0xf]
  %v152 = vld [vmem:[%s3 + $0x30] sm:$0xff]
  %v153 = vld [vmem:[%s3 + $0x38] sm:$0xf]
  %v154 = vld [vmem:[%s3 + $0x3c] sm:$0xff]
  %v155 = vld [vmem:[%s3 + $0x44] sm:$0xf]
  %v156 = vld [vmem:[%s3 + $0x48] sm:$0xff]
  %v157 = vld [vmem:[%s3 + $0x50] sm:$0xf]
  %v158 = vld [vmem:[%s3 + $0x54] sm:$0xff]
  %v159 = vld [vmem:[%s3 + $0x5c] sm:$0xf]
  %v160 = vld [vmem:[%s3 + $0x60] sm:$0xff]
  %v161 = vld [vmem:[%s3 + $0x68] sm:$0xf]
  %v162 = vld [vmem:[%s3 + $0x6c] sm:$0xff]
  %v163 = vld [vmem:[%s3 + $0x74] sm:$0xf]
  %v164 = vld [vmem:[%s3 + $0x78] sm:$0xff]
  %v165 = vld [vmem:[%s3 + $0x80] sm:$0xf]
  %v166 = vld [vmem:[%s3 + $0x84] sm:$0xff]
  %v167 = vld [vmem:[%s3 + $0x8c] sm:$0xf]
  %v168 = vld [vmem:[%s3 + $0x90] sm:$0xff]
  %v169 = vld [vmem:[%s3 + $0x98] sm:$0xf]
  %v170 = vld [vmem:[%s3 + $0x9c] sm:$0xff]
  %v171 = vld [vmem:[%s3 + $0xa4] sm:$0xf]
  %v172 = vld [vmem:[%s3 + $0xa8] sm:$0xff]
  %v173 = vld [vmem:[%s3 + $0xb0] sm:$0xf]
  %v174 = vld [vmem:[%s3 + $0xb4] sm:$0xff]
  %v175 = vld [vmem:[%s3 + $0xbc] sm:$0xf]
  %v176 = vld [vmem:[%s4] sm:$0x7]
  %v178 = vlaneseq
  %v179 = vshrl.u32 %v178, 7
  %v180 = vsub.s32 0, %v179
  %v181 = vrot.slane %v176, %v180
  %v182 = vlaneseq
  %v183 = vshrl.u32 %v182, 7
  %v184 = vsub.s32 1, %v183
  %v185 = vrot.slane %v176, %v184
  %v186 = vlaneseq
  %v187 = vshrl.u32 %v186, 7
  %v188 = vsub.s32 2, %v187
  %v189 = vrot.slane %v176, %v188
  %v198 = vunpack.c.l.b16 %v139
  %v199 = vunpack.c.l.b16 %v140
  %v200 = vunpack.c.l.b16 %v141
  %v201 = vunpack.c.l.b16 %v142
  %v202 = vunpack.c.l.b16 %v143
  %v203 = vpack.c.b16 %v199, %v198
  %v204 = vpack.c.b16 %v201, %v200
  %v205 = vpack.c.b16 %v202, %v202
  %v241 = vunpack.c.l.b16 %v144
  %v242 = vunpack.c.h.b16 %v144
  %v243 = vunpack.c.l.b16 %v145
  %v244 = vunpack.c.l.b16 %v146
  %v245 = vunpack.c.h.b16 %v146
  %v246 = vunpack.c.l.b16 %v147
  %v247 = vunpack.c.l.b16 %v148
  %v248 = vunpack.c.h.b16 %v148
  %v249 = vunpack.c.l.b16 %v149
  %v250 = vunpack.c.l.b16 %v150
  %v251 = vunpack.c.h.b16 %v150
  %v252 = vunpack.c.l.b16 %v151
  %v253 = vunpack.c.l.b16 %v152
  %v254 = vunpack.c.h.b16 %v152
  %v255 = vunpack.c.l.b16 %v153
  %v256 = vunpack.c.l.b16 %v154
  %v257 = vunpack.c.h.b16 %v154
  %v258 = vunpack.c.l.b16 %v155
  %v259 = vunpack.c.l.b16 %v156
  %v260 = vunpack.c.h.b16 %v156
  %v261 = vunpack.c.l.b16 %v157
  %v262 = vunpack.c.l.b16 %v158
  %v263 = vunpack.c.h.b16 %v158
  %v264 = vunpack.c.l.b16 %v159
  %v265 = vunpack.c.l.b16 %v160
  %v266 = vunpack.c.h.b16 %v160
  %v267 = vunpack.c.l.b16 %v161
  %v268 = vunpack.c.l.b16 %v162
  %v269 = vunpack.c.h.b16 %v162
  %v270 = vunpack.c.l.b16 %v163
  %v271 = vunpack.c.l.b16 %v164
  %v272 = vunpack.c.h.b16 %v164
  %v273 = vunpack.c.l.b16 %v165
  %v274 = vunpack.c.l.b16 %v166
  %v275 = vunpack.c.h.b16 %v166
  %v276 = vunpack.c.l.b16 %v167
  %v277 = vunpack.c.l.b16 %v168
  %v278 = vunpack.c.h.b16 %v168
  %v279 = vunpack.c.l.b16 %v169
  %v280 = vunpack.c.l.b16 %v170
  %v281 = vunpack.c.h.b16 %v170
  %v282 = vunpack.c.l.b16 %v171
  %v283 = vunpack.c.l.b16 %v172
  %v284 = vunpack.c.h.b16 %v172
  %v285 = vunpack.c.l.b16 %v173
  %v286 = vunpack.c.l.b16 %v174
  %v287 = vunpack.c.h.b16 %v174
  %v288 = vunpack.c.l.b16 %v175
  %v289 = vpack.c.b16 %v244, %v241
  %v290 = vpack.c.b16 %v245, %v242
  %v291 = vpack.c.b16 %v246, %v243
  %v292 = vpack.c.b16 %v250, %v247
  %v293 = vpack.c.b16 %v251, %v248
  %v294 = vpack.c.b16 %v252, %v249
  %v295 = vpack.c.b16 %v256, %v253
  %v296 = vpack.c.b16 %v257, %v254
  %v297 = vpack.c.b16 %v258, %v255
  %v298 = vpack.c.b16 %v262, %v259
  %v299 = vpack.c.b16 %v263, %v260
  %v300 = vpack.c.b16 %v264, %v261
  %v301 = vpack.c.b16 %v268, %v265
  %v302 = vpack.c.b16 %v269, %v266
  %v303 = vpack.c.b16 %v270, %v267
  %v304 = vpack.c.b16 %v274, %v271
  %v305 = vpack.c.b16 %v275, %v272
  %v306 = vpack.c.b16 %v276, %v273
  %v307 = vpack.c.b16 %v280, %v277
  %v308 = vpack.c.b16 %v281, %v278
  %v309 = vpack.c.b16 %v282, %v279
  %v310 = vpack.c.b16 %v286, %v283
  %v311 = vpack.c.b16 %v287, %v284
  %v312 = vpack.c.b16 %v288, %v285
  %337 = vmatprep.subr.bf16.mxu0 %v290
  %338 = vmatpush1.bf16.msra.mxu0 %v289
  %339 = vmatprep.subr.bf16.mxu0 %v293
  %340 = vmatpush1.bf16.msra.mxu0 %v292
  %341 = vmatprep.subr.bf16.mxu0 %v296
  %342 = vmatpush1.bf16.msra.mxu0 %v295
  %343 = vmatprep.subr.bf16.mxu0 %v299
  %344 = vmatpush1.bf16.msra.mxu0 %v298
  %345 = vmatprep.subr.bf16.mxu0 %v302
  %346 = vmatpush1.bf16.msra.mxu0 %v301
  %347 = vmatprep.subr.bf16.mxu0 %v305
  %348 = vmatpush1.bf16.msra.mxu0 %v304
  %349 = vmatprep.subr.bf16.mxu0 %v308
  %350 = vmatpush1.bf16.msra.mxu0 %v307
  %351 = vmatprep.subr.bf16.mxu0 %v311
  %352 = vmatpush1.bf16.msra.mxu0 %v310
  %353 = vmatprep.subr.bf16.mxu0 0
  %354 = vmatpush1.bf16.msra.mxu0 0
  %355 = vmatprep.subr.bf16.mxu0 0
  %356 = vmatpush1.bf16.msra.mxu0 0
  %357 = vmatprep.subr.bf16.mxu0 0
  %358 = vmatpush1.bf16.msra.mxu0 0
  %359 = vmatprep.subr.bf16.mxu0 0
  %360 = vmatpush1.bf16.msra.mxu0 0
  %361 = vmatprep.subr.bf16.mxu0 0
  %362 = vmatpush1.bf16.msra.mxu0 0
  %363 = vmatprep.subr.bf16.mxu0 0
  %364 = vmatpush1.bf16.msra.mxu0 0
  %365 = vmatprep.subr.bf16.mxu0 0
  %366 = vmatpush1.bf16.msra.mxu0 0
  %367 = vmatprep.subr.bf16.mxu0 0
  %368 = vmatpush1.bf16.msra.mxu0 0
  %369 = vmatprep.mubr.bf16.mxu0 0
  %370 = vmatmul.mubr.bf16.gmra.mrb[0].mxu0 %v203
  %v371 = vpop.f32.mrb[0].mxu0
  %v372 = vadd.f32 %v181, %v371
  %v373 = vpop.f32.mrb[0].mxu0
  %v374 = vadd.f32 %v185, %v373
  %v375 = vpop.f32.mrb[0].mxu0
  %v376 = vadd.f32 %v181, %v375
  %v377 = vpop.f32.mrb[0].mxu0
  %v378 = vadd.f32 %v185, %v377
  %379 = vmatprep.mubr.bf16.mxu0 0
  %380 = vmatmul.mubr.bf16.gmra.mrb[0].mxu0 %v204
  %v381 = vpop.f32.mrb[0].mxu0
  %v382 = vadd.f32 %v181, %v381
  %v383 = vpop.f32.mrb[0].mxu0
  %v384 = vadd.f32 %v185, %v383
  %v385 = vpop.f32.mrb[0].mxu0
  %v386 = vadd.f32 %v181, %v385
  %v387 = vpop.f32.mrb[0].mxu0
  %v388 = vadd.f32 %v185, %v387
  %389 = vmatprep.mubr.bf16.mxu0 0
  %390 = vmatmul.mubr.bf16.gmra.mrb[0].mxu0 %v205
  %v391 = vpop.f32.mrb[0].mxu0
  %v392 = vadd.f32 %v181, %v391
  %v393 = vpop.f32.mrb[0].mxu0
  %v394 = vadd.f32 %v185, %v393
  %v395 = vpop.f32.mrb[0].mxu0
  %v396 = vpop.f32.mrb[0].mxu0
  %397 = vdwg.mxu0
  %398 = vmatprep.subr.bf16.mxu0 0
  %399 = vmatpush1.bf16.msra.mxu0 %v291
  %400 = vmatprep.subr.bf16.mxu0 0
  %401 = vmatpush1.bf16.msra.mxu0 %v294
  %402 = vmatprep.subr.bf16.mxu0 0
  %403 = vmatpush1.bf16.msra.mxu0 %v297
  %404 = vmatprep.subr.bf16.mxu0 0
  %405 = vmatpush1.bf16.msra.mxu0 %v300
  %406 = vmatprep.subr.bf16.mxu0 0
  %407 = vmatpush1.bf16.msra.mxu0 %v303
  %408 = vmatprep.subr.bf16.mxu0 0
  %409 = vmatpush1.bf16.msra.mxu0 %v306
  %410 = vmatprep.subr.bf16.mxu0 0
  %411 = vmatpush1.bf16.msra.mxu0 %v309
  %412 = vmatprep.subr.bf16.mxu0 0
  %413 = vmatpush1.bf16.msra.mxu0 %v312
  %414 = vmatprep.subr.bf16.mxu0 0
  %415 = vmatpush1.bf16.msra.mxu0 0
  %416 = vmatprep.subr.bf16.mxu0 0
  %417 = vmatpush1.bf16.msra.mxu0 0
  %418 = vmatprep.subr.bf16.mxu0 0
  %419 = vmatpush1.bf16.msra.mxu0 0
  %420 = vmatprep.subr.bf16.mxu0 0
  %421 = vmatpush1.bf16.msra.mxu0 0
  %422 = vmatprep.subr.bf16.mxu0 0
  %423 = vmatpush1.bf16.msra.mxu0 0
  %424 = vmatprep.subr.bf16.mxu0 0
  %425 = vmatpush1.bf16.msra.mxu0 0
  %426 = vmatprep.subr.bf16.mxu0 0
  %427 = vmatpush1.bf16.msra.mxu0 0
  %428 = vmatprep.subr.bf16.mxu0 0
  %429 = vmatpush1.bf16.msra.mxu0 0
  %430 = vmatprep.mubr.bf16.mxu0 0
  %431 = vmatmul.mubr.bf16.gmra.mrb[0].mxu0 %v203
  %v432 = vpop.f32.mrb[0].mxu0
  %v433 = vadd.f32 %v189, %v432
  %v434 = vpop.f32.mrb[0].mxu0
  %v435 = vpop.f32.mrb[0].mxu0
  %v436 = vadd.f32 %v189, %v435
  %v437 = vpop.f32.mrb[0].mxu0
  %438 = vmatprep.mubr.bf16.mxu0 0
  %439 = vmatmul.mubr.bf16.gmra.mrb[0].mxu0 %v204
  %v440 = vpop.f32.mrb[0].mxu0
  %v441 = vadd.f32 %v189, %v440
  %v442 = vpop.f32.mrb[0].mxu0
  %v443 = vpop.f32.mrb[0].mxu0
  %v444 = vadd.f32 %v189, %v443
  %v445 = vpop.f32.mrb[0].mxu0
  %446 = vmatprep.mubr.bf16.mxu0 0
  %447 = vmatmul.mubr.bf16.gmra.mrb[0].mxu0 %v205
  %v448 = vpop.f32.mrb[0].mxu0
  %v449 = vadd.f32 %v189, %v448
  %v450 = vpop.f32.mrb[0].mxu0
  %v451 = vpop.f32.mrb[0].mxu0
  %v452 = vpop.f32.mrb[0].mxu0
  %453 = vdwg.mxu0
  %v454 = vpack.c.bf16 %v376, %v372
  %v455 = vpack.c.bf16 %v378, %v374
  %v456 = vpack.c.bf16 %v436, %v433
  %v457 = vpack.c.bf16 %v386, %v382
  %v458 = vpack.c.bf16 %v388, %v384
  %v459 = vpack.c.bf16 %v444, %v441
  %v460 = vpack.c.bf16 %v392, %v392
  %v461 = vpack.c.bf16 %v394, %v394
  %v462 = vpack.c.bf16 %v449, %v449
  %v472 = vunpack.c.l.b16 %v454
  %v473 = vunpack.c.l.b16 %v455
  %v474 = vunpack.c.l.b16 %v456
  %v475 = vunpack.c.h.b16 %v454
  %v476 = vunpack.c.h.b16 %v455
  %v477 = vunpack.c.h.b16 %v456
  %v478 = vunpack.c.l.b16 %v457
  %v479 = vunpack.c.l.b16 %v458
  %v480 = vunpack.c.l.b16 %v459
  %v481 = vunpack.c.h.b16 %v457
  %v482 = vunpack.c.h.b16 %v458
  %v483 = vunpack.c.h.b16 %v459
  %v484 = vunpack.c.l.b16 %v460
  %v485 = vunpack.c.l.b16 %v461
  %v486 = vunpack.c.l.b16 %v462
  %v487 = vpack.c.b16 %v473, %v472
  %v488 = vpack.c.b16 %v474, %v474
  %v489 = vpack.c.b16 %v476, %v475
  %v490 = vpack.c.b16 %v477, %v477
  %v491 = vpack.c.b16 %v479, %v478
  %v492 = vpack.c.b16 %v480, %v480
  %v493 = vpack.c.b16 %v482, %v481
  %v494 = vpack.c.b16 %v483, %v483
  %v495 = vpack.c.b16 %v485, %v484
  %v496 = vpack.c.b16 %v486, %v486
  %507 = vst [vmem:[%s5] sm:$0xff] %v487
  %508 = vst [vmem:[%s5 + $0x8] sm:$0xf] %v488
  %509 = vst [vmem:[%s5 + $0xc] sm:$0xff] %v489
  %510 = vst [vmem:[%s5 + $0x14] sm:$0xf] %v490
  %511 = vst [vmem:[%s5 + $0x18] sm:$0xff] %v491
  %512 = vst [vmem:[%s5 + $0x20] sm:$0xf] %v492
  %513 = vst [vmem:[%s5 + $0x24] sm:$0xff] %v493
  %514 = vst [vmem:[%s5 + $0x2c] sm:$0xf] %v494
  %515 = vst [vmem:[%s5 + $0x30] sm:$0x11] %v495
  %516 = vst [vmem:[%s5 + $0x38] sm:$0x1] %v496
  // Predicated region
  $region26: #{encode_image.13} parent=0 // pred_check
    _
  $region27: #{encode_image.13} parent=0 // pred_check_branch
    %518 = sbr.rel (0) target = $region29
  $region28: #{encode_image.13} parent=0 // pred_region
    _
  $region29: #{encode_image.13} parent=0 // pred_fallthru
    _
  // Predicated region
  $region30: #{encode_image.13} parent=0 // pred_check
    _
  $region31: #{encode_image.13} parent=0 // pred_check_branch
    %520 = sbr.rel (0) target = $region33
  $region32: #{encode_image.13} parent=0 // pred_region
    _
  $region33: #{encode_image.13} parent=0 // pred_fallthru
    _

// kernel: encode_image.15
$region0: #{encode_image.15}
  #allocation0 [shape = 'u32[]', space=smem, size = 0x4, offset = 0x4, fixed_abs, tag = 'smem constant byte address 0x4 - core index']
  #allocation1 [shape = 'u32[144,128]{1,0:T(1,128)}', space=vmem, size = 0x12000, scoped, tag = 'internal scratch']
  %s0 = inlined_call_operand.vmem [shape: bf16[34,128], index: 0, kind: input, shape index: {}]
  %s1 = inlined_call_operand.vmem [shape: bf16[128,128], index: 1, kind: input, shape index: {}]
  %s2 = inlined_call_operand.vmem [shape: f32[1,128], index: 2, kind: input, shape index: {}]
  %s3 = inlined_call_operand.vmem [shape: f32[34,128], index: 3, kind: input, shape index: {}]
  %s4 = inlined_call_operand.vmem [shape: f32[34,128], index: 4, kind: output, shape index: {}]
  %s5 = sld [smem:[#allocation0]]
  $region26: #{encode_image.15} parent=0
    _
  %s7 = ssub.s32 1, %s5
  %s8 = scalar_select 0, %s7, %s5
  // Predicated region
  $region2: #{encode_image.15} parent=0 // pred_check
    _
  $region3: #{encode_image.15} parent=0 // pred_check_branch
    %10 = sbr.rel (0) target = $region5
  $region4: #{encode_image.15} parent=0 // pred_region
    _
  $region5: #{encode_image.15} parent=0 // pred_fallthru
    _
  // Predicated region
  $region6: #{encode_image.15} parent=0 // pred_check
    _
  $region7: #{encode_image.15} parent=0 // pred_check_branch
    %12 = sbr.rel (0) target = $region9
  $region8: #{encode_image.15} parent=0 // pred_region
    _
  $region9: #{encode_image.15} parent=0 // pred_fallthru
    _
  // Predicated region
  $region10: #{encode_image.15} parent=0 // pred_check
    _
  $region11: #{encode_image.15} parent=0 // pred_check_branch
    %14 = sbr.rel (0) target = $region13
  $region12: #{encode_image.15} parent=0 // pred_region
    _
  $region13: #{encode_image.15} parent=0 // pred_fallthru
    _
  // Predicated region
  $region14: #{encode_image.15} parent=0 // pred_check
    _
  $region15: #{encode_image.15} parent=0 // pred_check_branch
    %16 = sbr.rel (0) target = $region17
  $region16: #{encode_image.15} parent=0 // pred_region
    _
  $region17: #{encode_image.15} parent=0 // pred_fallthru
    _
  %v18 = vld [vmem:[%s0] sm:$0xf]
  %v19 = vld [vmem:[%s0 + $0x4] sm:$0xf]
  %v20 = vld [vmem:[%s0 + $0x8] sm:$0xf]
  %v21 = vld [vmem:[%s0 + $0xc] sm:$0xf]
  %v22 = vld [vmem:[%s0 + $0x10] sm:$0x1]
  %v23 = vld [vmem:[%s1] sm:$0xf]
  %v24 = vld [vmem:[%s1 + $0x4] sm:$0xf]
  %v25 = vld [vmem:[%s1 + $0x8] sm:$0xf]
  %v26 = vld [vmem:[%s1 + $0xc] sm:$0xf]
  %v27 = vld [vmem:[%s1 + $0x10] sm:$0xf]
  %v28 = vld [vmem:[%s1 + $0x14] sm:$0xf]
  %v29 = vld [vmem:[%s1 + $0x18] sm:$0xf]
  %v30 = vld [vmem:[%s1 + $0x1c] sm:$0xf]
  %v31 = vld [vmem:[%s1 + $0x20] sm:$0xf]
  %v32 = vld [vmem:[%s1 + $0x24] sm:$0xf]
  %v33 = vld [vmem:[%s1 + $0x28] sm:$0xf]
  %v34 = vld [vmem:[%s1 + $0x2c] sm:$0xf]
  %v35 = vld [vmem:[%s1 + $0x30] sm:$0xf]
  %v36 = vld [vmem:[%s1 + $0x34] sm:$0xf]
  %v37 = vld [vmem:[%s1 + $0x38] sm:$0xf]
  %v38 = vld [vmem:[%s1 + $0x3c] sm:$0xf]
  %v39 = vld [vmem:[%s2] sm:$0x1]
  %v41 = vlaneseq
  %v42 = vshrl.u32 %v41, 7
  %v43 = vsub.s32 0, %v42
  %v44 = vrot.slane %v39, %v43
  %v51 = vunpack.c.l.b16 %v18
  %v52 = vunpack.c.l.b16 %v19
  %v53 = vunpack.c.l.b16 %v20
  %v54 = vunpack.c.l.b16 %v21
  %v55 = vunpack.c.l.b16 %v22
  %v56 = vpack.c.b16 %v52, %v51
  %v57 = vpack.c.b16 %v54, %v53
  %v58 = vpack.c.b16 %v55, %v55
  %v78 = vunpack.c.l.b16 %v23
  %v79 = vunpack.c.l.b16 %v24
  %v80 = vunpack.c.l.b16 %v25
  %v81 = vunpack.c.l.b16 %v26
  %v82 = vunpack.c.l.b16 %v27
  %v83 = vunpack.c.l.b16 %v28
  %v84 = vunpack.c.l.b16 %v29
  %v85 = vunpack.c.l.b16 %v30
  %v86 = vunpack.c.l.b16 %v31
  %v87 = vunpack.c.l.b16 %v32
  %v88 = vunpack.c.l.b16 %v33
  %v89 = vunpack.c.l.b16 %v34
  %v90 = vunpack.c.l.b16 %v35
  %v91 = vunpack.c.l.b16 %v36
  %v92 = vunpack.c.l.b16 %v37
  %v93 = vunpack.c.l.b16 %v38
  %v94 = vpack.c.b16 %v79, %v78
  %v95 = vpack.c.b16 %v81, %v80
  %v96 = vpack.c.b16 %v83, %v82
  %v97 = vpack.c.b16 %v85, %v84
  %v98 = vpack.c.b16 %v87, %v86
  %v99 = vpack.c.b16 %v89, %v88
  %v100 = vpack.c.b16 %v91, %v90
  %v101 = vpack.c.b16 %v93, %v92
  %110 = vmatprep.subr.bf16.mxu0 0
  %111 = vmatpush1.bf16.msra.mxu0 %v94
  %112 = vmatprep.subr.bf16.mxu0 0
  %113 = vmatpush1.bf16.msra.mxu0 %v95
  %114 = vmatprep.subr.bf16.mxu0 0
  %115 = vmatpush1.bf16.msra.mxu0 %v96
  %116 = vmatprep.subr.bf16.mxu0 0
  %117 = vmatpush1.bf16.msra.mxu0 %v97
  %118 = vmatprep.subr.bf16.mxu0 0
  %119 = vmatpush1.bf16.msra.mxu0 %v98
  %120 = vmatprep.subr.bf16.mxu0 0
  %121 = vmatpush1.bf16.msra.mxu0 %v99
  %122 = vmatprep.subr.bf16.mxu0 0
  %123 = vmatpush1.bf16.msra.mxu0 %v100
  %124 = vmatprep.subr.bf16.mxu0 0
  %125 = vmatpush1.bf16.msra.mxu0 %v101
  %126 = vmatprep.subr.bf16.mxu0 0
  %127 = vmatpush1.bf16.msra.mxu0 0
  %128 = vmatprep.subr.bf16.mxu0 0
  %129 = vmatpush1.bf16.msra.mxu0 0
  %130 = vmatprep.subr.bf16.mxu0 0
  %131 = vmatpush1.bf16.msra.mxu0 0
  %132 = vmatprep.subr.bf16.mxu0 0
  %133 = vmatpush1.bf16.msra.mxu0 0
  %134 = vmatprep.subr.bf16.mxu0 0
  %135 = vmatpush1.bf16.msra.mxu0 0
  %136 = vmatprep.subr.bf16.mxu0 0
  %137 = vmatpush1.bf16.msra.mxu0 0
  %138 = vmatprep.subr.bf16.mxu0 0
  %139 = vmatpush1.bf16.msra.mxu0 0
  %140 = vmatprep.subr.bf16.mxu0 0
  %141 = vmatpush1.bf16.msra.mxu0 0
  %142 = vmatprep.mubr.bf16.mxu0 0
  %143 = vmatmul.mubr.bf16.gmra.mrb[0].mxu0 %v56
  %v144 = vpop.f32.mrb[0].mxu0
  %v145 = vadd.f32 %v44, %v144
  %v146 = vpop.f32.mrb[0].mxu0
  %v147 = vpop.f32.mrb[0].mxu0
  %v148 = vadd.f32 %v44, %v147
  %v149 = vpop.f32.mrb[0].mxu0
  %150 = vmatprep.mubr.bf16.mxu0 0
  %151 = vmatmul.mubr.bf16.gmra.mrb[0].mxu0 %v57
  %v152 = vpop.f32.mrb[0].mxu0
  %v153 = vadd.f32 %v44, %v152
  %v154 = vpop.f32.mrb[0].mxu0
  %v155 = vpop.f32.mrb[0].mxu0
  %v156 = vadd.f32 %v44, %v155
  %v157 = vpop.f32.mrb[0].mxu0
  %158 = vmatprep.mubr.bf16.mxu0 0
  %159 = vmatmul.mubr.bf16.gmra.mrb[0].mxu0 %v58
  %v160 = vpop.f32.mrb[0].mxu0
  %v161 = vadd.f32 %v44, %v160
  %v162 = vpop.f32.mrb[0].mxu0
  %v163 = vpop.f32.mrb[0].mxu0
  %v164 = vpop.f32.mrb[0].mxu0
  %165 = vdwg.mxu0
  %v166 = vld [vmem:[%s3] sm:$0xff]
  %v167 = vld [vmem:[%s3 + $0x8] sm:$0xff]
  %v168 = vld [vmem:[%s3 + $0x10] sm:$0xff]
  %v169 = vld [vmem:[%s3 + $0x18] sm:$0xff]
  %v170 = vld [vmem:[%s3 + $0x20] sm:$0x3]
  %v171 = vadd.f32 %v145, %v166
  %v172 = vadd.f32 %v148, %v167
  %v173 = vadd.f32 %v153, %v168
  %v174 = vadd.f32 %v156, %v169
  %v175 = vadd.f32 %v161, %v170
  %176 = vst [vmem:[%s4] sm:$0xff] %v171
  %177 = vst [vmem:[%s4 + $0x8] sm:$0xff] %v172
  %178 = vst [vmem:[%s4 + $0x10] sm:$0xff] %v173
  %179 = vst [vmem:[%s4 + $0x18] sm:$0xff] %v174
  %180 = vst [vmem:[%s4 + $0x20] sm:$0x3] %v175
  // Predicated region
  $region18: #{encode_image.15} parent=0 // pred_check
    _
  $region19: #{encode_image.15} parent=0 // pred_check_branch
    %182 = sbr.rel (0) target = $region21
  $region20: #{encode_image.15} parent=0 // pred_region
    _
  $region21: #{encode_image.15} parent=0 // pred_fallthru
    _
  // Predicated region
  $region22: #{encode_image.15} parent=0 // pred_check
    _
  $region23: #{encode_image.15} parent=0 // pred_check_branch
    %184 = sbr.rel (0) target = $region25
  $region24: #{encode_image.15} parent=0 // pred_region
    _
  $region25: #{encode_image.15} parent=0 // pred_fallthru
    _

// kernel: encode_image.21
$region0: #{encode_image.21}
  #allocation0 [shape = 'u32[]', space=smem, size = 0x4, offset = 0x4, fixed_abs, tag = 'smem constant byte address 0x4 - core index']
  #allocation1 [shape = 'u32[144,128]{1,0:T(1,128)}', space=vmem, size = 0x12000, scoped, tag = 'internal scratch']
  #allocation2 [shape = 'bf16[2,128]{1,0:T(2,128)(2,1)}', space=vmem, size = 0x200, scoped, tag = 'scratch operand']
  %s0 = inlined_call_operand.vmem [shape: f32[2,128], index: 0, kind: input, shape index: {}]
  %s1 = inlined_call_operand.vmem [shape: f32[1,128], index: 1, kind: input, shape index: {}]
  %s2 = inlined_call_operand.vmem [shape: f32[1,128], index: 2, kind: input, shape index: {}]
  %s3 = inlined_call_operand.vmem [shape: bf16[128,64], index: 3, kind: input, shape index: {}]
  %s4 = inlined_call_operand.vmem [shape: f32[1,64], index: 4, kind: input, shape index: {}]
  %s5 = inlined_call_operand.hbm [shape: f32[2,64], index: 5, kind: output, shape index: {}]
  %s6 = sld [smem:[#allocation0]]
  $region34: #{encode_image.21} parent=0
    _
  %s8 = ssub.s32 1, %s6
  %s9 = scalar_select 0, %s8, %s6
  $region1: #{encode_image.21} parent=0
    #allocation3 [shape = 'u8[1024]{0}', space=vmem, size = 0x400, scoped, tag = 'output window, operand 0, single buffered']
    #allocation4 [shape = 's32[1]{0}', space=sflag, size = 0x4, scoped, tag = 'scoped memory for encode_image.21']
    %10 = vsyncpa [#allocation4], 0
    // Predicated region
    $region2: #{encode_image.21} parent=1 // pred_check
      _
    $region3: #{encode_image.21} parent=1 // pred_check_branch
      %12 = sbr.rel (0) target = $region5
    $region4: #{encode_image.21} parent=1 // pred_region
      _
    $region5: #{encode_image.21} parent=1 // pred_fallthru
      _
    // Predicated region
    $region6: #{encode_image.21} parent=1 // pred_check
      _
    $region7: #{encode_image.21} parent=1 // pred_check_branch
      %14 = sbr.rel (0) target = $region9
    $region8: #{encode_image.21} parent=1 // pred_region
      _
    $region9: #{encode_image.21} parent=1 // pred_fallthru
      _
    // Predicated region
    $region10: #{encode_image.21} parent=1 // pred_check
      _
    $region11: #{encode_image.21} parent=1 // pred_check_branch
      %16 = sbr.rel (0) target = $region13
    $region12: #{encode_image.21} parent=1 // pred_region
      _
    $region13: #{encode_image.21} parent=1 // pred_fallthru
      _
    // Predicated region
    $region14: #{encode_image.21} parent=1 // pred_check
      _
    $region15: #{encode_image.21} parent=1 // pred_check_branch
      %18 = sbr.rel (0) target = $region17
    $region16: #{encode_image.21} parent=1 // pred_region
      _
    $region17: #{encode_image.21} parent=1 // pred_fallthru
      _
    // Predicated region
    $region18: #{encode_image.21} parent=1 // pred_check
      _
    $region19: #{encode_image.21} parent=1 // pred_check_branch
      %20 = sbr.rel (0) target = $region21
    $region20: #{encode_image.21} parent=1 // pred_region
      _
    $region21: #{encode_image.21} parent=1 // pred_fallthru
      _
    %p22 = scmp.eq.s32.totalorder 0, 0
    // Predicated region
    $region22: #{encode_image.21} parent=1 // pred_check
      %p23 = pneg %p22
    $region23: #{encode_image.21} parent=1 // pred_check_branch
      %25 = sbr.rel (%p23) target = $region25
    $region24: #{encode_image.21} parent=1 // pred_region
      %v26 = vld [vmem:[%s0] sm:$0x3]
      %vm27 = vcmask 1041408
      %v28 = vsel %vm27, %v26, 0.0
      %29 = vadd.xlane.f32.xlu0 %v28
      %v30 = vpop.xlane.xlu0 %29
      %v31 = vrcp.pop 128.0
      %v32 = vmul.f32 %v30, %v31
      %v33 = vsub.f32 %v26, %v32
      %v34 = vmul.f32 %v33, %v33
      %v35 = vsel %vm27, %v34, 0.0
      %36 = vadd.xlane.f32.xlu0 %v35
      %v37 = vpop.xlane.xlu0 %36
      %v38 = vmul.f32 %v37, %v31
      %v39 = vadd.f32 %v38, 1e-05
      %v40 = vrsqrt.pop %v39
      %v41 = vmul.f32 %v33, %v40
      %v42 = vld [vmem:[%s1] sm:$0x1]
      %v44 = vlaneseq
      %v45 = vshrl.u32 %v44, 7
      %v46 = vsub.s32 0, %v45
      %v47 = vrot.slane %v42, %v46
      %v49 = vmul.f32 %v41, %v47
      %v50 = vld [vmem:[%s2] sm:$0x1]
      %v52 = vlaneseq
      %v53 = vshrl.u32 %v52, 7
      %v54 = vsub.s32 0, %v53
      %v55 = vrot.slane %v50, %v54
      %v57 = vadd.f32 %v49, %v55
      %v58 = vpack.c.bf16 %v57, %v57
      %59 = vst [vmem:[#allocation2] sm:$0x1] %v58
    $region25: #{encode_image.21} parent=1 // pred_fallthru
      _
    %v60 = vld [vmem:[#allocation2] sm:$0x1]
    %v61 = vld [vmem:[%s3] sm:$0xf]
    %v62 = vld [vmem:[%s3 + $0x4] sm:$0xf]
    %v63 = vld [vmem:[%s3 + $0x8] sm:$0xf]
    %v64 = vld [vmem:[%s3 + $0xc] sm:$0xf]
    %v65 = vld [vmem:[%s3 + $0x10] sm:$0xf]
    %v66 = vld [vmem:[%s3 + $0x14] sm:$0xf]
    %v67 = vld [vmem:[%s3 + $0x18] sm:$0xf]
    %v68 = vld [vmem:[%s3 + $0x1c] sm:$0xf]
    %v69 = vld [vmem:[%s3 + $0x20] sm:$0xf]
    %v70 = vld [vmem:[%s3 + $0x24] sm:$0xf]
    %v71 = vld [vmem:[%s3 + $0x28] sm:$0xf]
    %v72 = vld [vmem:[%s3 + $0x2c] sm:$0xf]
    %v73 = vld [vmem:[%s3 + $0x30] sm:$0xf]
    %v74 = vld [vmem:[%s3 + $0x34] sm:$0xf]
    %v75 = vld [vmem:[%s3 + $0x38] sm:$0xf]
    %v76 = vld [vmem:[%s3 + $0x3c] sm:$0xf]
    %v77 = vld [vmem:[%s4] sm:$0x1]
    %v79 = vlaneseq
    %v80 = vshrl.u32 %v79, 7
    %v81 = vsub.s32 0, %v80
    %v82 = vrot.slane %v77, %v81
    %v100 = vunpack.c.l.b16 %v61
    %v101 = vunpack.c.l.b16 %v62
    %v102 = vunpack.c.l.b16 %v63
    %v103 = vunpack.c.l.b16 %v64
    %v104 = vunpack.c.l.b16 %v65
    %v105 = vunpack.c.l.b16 %v66
    %v106 = vunpack.c.l.b16 %v67
    %v107 = vunpack.c.l.b16 %v68
    %v108 = vunpack.c.l.b16 %v69
    %v109 = vunpack.c.l.b16 %v70
    %v110 = vunpack.c.l.b16 %v71
    %v111 = vunpack.c.l.b16 %v72
    %v112 = vunpack.c.l.b16 %v73
    %v113 = vunpack.c.l.b16 %v74
    %v114 = vunpack.c.l.b16 %v75
    %v115 = vunpack.c.l.b16 %v76
    %v116 = vpack.c.b16 %v101, %v100
    %v117 = vpack.c.b16 %v103, %v102
    %v118 = vpack.c.b16 %v105, %v104
    %v119 = vpack.c.b16 %v107, %v106
    %v120 = vpack.c.b16 %v109, %v108
    %v121 = vpack.c.b16 %v111, %v110
    %v122 = vpack.c.b16 %v113, %v112
    %v123 = vpack.c.b16 %v115, %v114
    %132 = vmatprep.subr.bf16.mxu0 0
    %133 = vmatpush1.bf16.msra.mxu0 %v116
    %134 = vmatprep.subr.bf16.mxu0 0
    %135 = vmatpush1.bf16.msra.mxu0 %v117
    %136 = vmatprep.subr.bf16.mxu0 0
    %137 = vmatpush1.bf16.msra.mxu0 %v118
    %138 = vmatprep.subr.bf16.mxu0 0
    %139 = vmatpush1.bf16.msra.mxu0 %v119
    %140 = vmatprep.subr.bf16.mxu0 0
    %141 = vmatpush1.bf16.msra.mxu0 %v120
    %142 = vmatprep.subr.bf16.mxu0 0
    %143 = vmatpush1.bf16.msra.mxu0 %v121
    %144 = vmatprep.subr.bf16.mxu0 0
    %145 = vmatpush1.bf16.msra.mxu0 %v122
    %146 = vmatprep.subr.bf16.mxu0 0
    %147 = vmatpush1.bf16.msra.mxu0 %v123
    %148 = vmatprep.subr.bf16.mxu0 0
    %149 = vmatpush1.bf16.msra.mxu0 0
    %150 = vmatprep.subr.bf16.mxu0 0
    %151 = vmatpush1.bf16.msra.mxu0 0
    %152 = vmatprep.subr.bf16.mxu0 0
    %153 = vmatpush1.bf16.msra.mxu0 0
    %154 = vmatprep.subr.bf16.mxu0 0
    %155 = vmatpush1.bf16.msra.mxu0 0
    %156 = vmatprep.subr.bf16.mxu0 0
    %157 = vmatpush1.bf16.msra.mxu0 0
    %158 = vmatprep.subr.bf16.mxu0 0
    %159 = vmatpush1.bf16.msra.mxu0 0
    %160 = vmatprep.subr.bf16.mxu0 0
    %161 = vmatpush1.bf16.msra.mxu0 0
    %162 = vmatprep.subr.bf16.mxu0 0
    %163 = vmatpush1.bf16.msra.mxu0 0
    %164 = vmatprep.mubr.bf16.mxu0 0
    %165 = vmatmul.mubr.bf16.gmra.mrb[0].mxu0 %v60
    %v166 = vpop.f32.mrb[0].mxu0
    %v167 = vadd.f32 %v82, %v166
    %v168 = vpop.f32.mrb[0].mxu0
    %v169 = vpop.f32.mrb[0].mxu0
    %v170 = vpop.f32.mrb[0].mxu0
    %171 = vdwg.mxu0
    %vm172 = vcmask 517120
    %173 = vst.msk [vmem:[#allocation3] sm:$0x3] %vm172, %v167
    // Predicated region
    $region26: #{encode_image.21} parent=1 // pred_check
      _
    $region27: #{encode_image.21} parent=1 // pred_check_branch
      %175 = sbr.rel (0) target = $region29
    $region28: #{encode_image.21} parent=1 // pred_region
      %s177 = ssub.s32 32, 32
      %178 = vsyncadd [#allocation4], %s177
      %s180 = sshll.u32 [#allocation3], 4
      %s181 = int_to_ptr.vmem [resolvable:$true] %s180
      %183 = dma.vmem_to_hbm [thread:$0]  %s181, 32, %s5, [#allocation4]
    $region29: #{encode_image.21} parent=1 // pred_fallthru
      _
    // Predicated region
    $region30: #{encode_image.21} parent=1 // pred_check
      _
    $region31: #{encode_image.21} parent=1 // pred_check_branch
      %185 = sbr.rel (0) target = $region33
    $region32: #{encode_image.21} parent=1 // pred_region
      %186 = dma.done [#allocation4], 32
    $region33: #{encode_image.21} parent=1 // pred_fallthru
      _
    %187 = vsyncpa [#allocation4], 1

// kernel: encode_image.16
$region0: #{encode_image.16}
  #allocation0 [shape = 'u32[]', space=smem, size = 0x4, offset = 0x4, fixed_abs, tag = 'smem constant byte address 0x4 - core index']
  #allocation1 [shape = 'u32[144,128]{1,0:T(1,128)}', space=vmem, size = 0x12000, scoped, tag = 'internal scratch']
  #allocation2 [shape = 'bf16[34,128]{1,0:T(8,128)(2,1)}', space=vmem, size = 0x2800, scoped, tag = 'scratch operand']
  #allocation3 [shape = 'f32[34,128]{1,0:T(8,128)}', space=vmem, size = 0x5000, scoped, tag = 'scratch operand']
  %s0 = inlined_call_operand.vmem [shape: f32[34,128], index: 0, kind: input, shape index: {}]
  %s1 = inlined_call_operand.vmem [shape: f32[1,128], index: 1, kind: input, shape index: {}]
  %s2 = inlined_call_operand.vmem [shape: f32[1,128], index: 2, kind: input, shape index: {}]
  %s3 = inlined_call_operand.vmem [shape: bf16[128,512], index: 3, kind: input, shape index: {}]
  %s4 = inlined_call_operand.vmem [shape: f32[1,512], index: 4, kind: input, shape index: {}]
  %s5 = inlined_call_operand.vmem [shape: bf16[512,128], index: 5, kind: input, shape index: {}]
  %s6 = inlined_call_operand.vmem [shape: f32[1,128], index: 6, kind: input, shape index: {}]
  %s7 = inlined_call_operand.vmem [shape: f32[34,128], index: 7, kind: output, shape index: {}]
  %s8 = sld [smem:[#allocation0]]
  $region46: #{encode_image.16} parent=0
    _
  %s10 = ssub.s32 1, %s8
  %s11 = scalar_select 0, %s10, %s8
  // Predicated region
  $region2: #{encode_image.16} parent=0 // pred_check
    _
  $region3: #{encode_image.16} parent=0 // pred_check_branch
    %13 = sbr.rel (0) target = $region5
  $region4: #{encode_image.16} parent=0 // pred_region
    _
  $region5: #{encode_image.16} parent=0 // pred_fallthru
    _
  // Predicated region
  $region6: #{encode_image.16} parent=0 // pred_check
    _
  $region7: #{encode_image.16} parent=0 // pred_check_branch
    %15 = sbr.rel (0) target = $region9
  $region8: #{encode_image.16} parent=0 // pred_region
    _
  $region9: #{encode_image.16} parent=0 // pred_fallthru
    _
  // Predicated region
  $region10: #{encode_image.16} parent=0 // pred_check
    _
  $region11: #{encode_image.16} parent=0 // pred_check_branch
    %17 = sbr.rel (0) target = $region13
  $region12: #{encode_image.16} parent=0 // pred_region
    _
  $region13: #{encode_image.16} parent=0 // pred_fallthru
    _
  // Predicated region
  $region14: #{encode_image.16} parent=0 // pred_check
    _
  $region15: #{encode_image.16} parent=0 // pred_check_branch
    %19 = sbr.rel (0) target = $region17
  $region16: #{encode_image.16} parent=0 // pred_region
    _
  $region17: #{encode_image.16} parent=0 // pred_fallthru
    _
  // Predicated region
  $region18: #{encode_image.16} parent=0 // pred_check
    _
  $region19: #{encode_image.16} parent=0 // pred_check_branch
    %21 = sbr.rel (0) target = $region21
  $region20: #{encode_image.16} parent=0 // pred_region
    _
  $region21: #{encode_image.16} parent=0 // pred_fallthru
    _
  // Predicated region
  $region22: #{encode_image.16} parent=0 // pred_check
    _
  $region23: #{encode_image.16} parent=0 // pred_check_branch
    %23 = sbr.rel (0) target = $region25
  $region24: #{encode_image.16} parent=0 // pred_region
    _
  $region25: #{encode_image.16} parent=0 // pred_fallthru
    _
  // Predicated region
  $region26: #{encode_image.16} parent=0 // pred_check
    _
  $region27: #{encode_image.16} parent=0 // pred_check_branch
    %25 = sbr.rel (0) target = $region29
  $region28: #{encode_image.16} parent=0 // pred_region
    _
  $region29: #{encode_image.16} parent=0 // pred_fallthru
    _
  %p27 = scmp.eq.s32.totalorder 0, 0
  // Predicated region
  $region30: #{encode_image.16} parent=0 // pred_check
    %p28 = pneg %p27
  $region31: #{encode_image.16} parent=0 // pred_check_branch
    %30 = sbr.rel (%p28) target = $region33
  $region32: #{encode_image.16} parent=0 // pred_region
    %v31 = vld [vmem:[%s0] sm:$0xff]
    %v32 = vld [vmem:[%s0 + $0x8] sm:$0xff]
    %v33 = vld [vmem:[%s0 + $0x10] sm:$0xff]
    %v34 = vld [vmem:[%s0 + $0x18] sm:$0xff]
    %v35 = vld [vmem:[%s0 + $0x20] sm:$0x3]
    %36 = vadd.xlane.f32.xlu0 %v31
    %v37 = vpop.xlane.xlu0 %36
    %38 = vadd.xlane.f32.xlu0 %v32
    %v39 = vpop.xlane.xlu0 %38
    %40 = vadd.xlane.f32.xlu0 %v33
    %v41 = vpop.xlane.xlu0 %40
    %42 = vadd.xlane.f32.xlu0 %v34
    %v43 = vpop.xlane.xlu0 %42
    %vm44 = vcmask 1041408
    %v45 = vsel %vm44, %v35, 0.0
    %46 = vadd.xlane.f32.xlu0 %v45
    %v47 = vpop.xlane.xlu0 %46
    %v48 = vrcp.pop 128.0
    %v49 = vmul.f32 %v37, %v48
    %v50 = vmul.f32 %v39, %v48
    %v51 = vmul.f32 %v41, %v48
    %v52 = vmul.f32 %v43, %v48
    %v53 = vmul.f32 %v47, %v48
    %v54 = vsub.f32 %v31, %v49
    %v55 = vsub.f32 %v32, %v50
    %v56 = vsub.f32 %v33, %v51
    %v57 = vsub.f32 %v34, %v52
    %v58 = vsub.f32 %v35, %v53
    %v59 = vmul.f32 %v54, %v54
    %v60 = vmul.f32 %v55, %v55
    %v61 = vmul.f32 %v56, %v56
    %v62 = vmul.f32 %v57, %v57
    %v63 = vmul.f32 %v58, %v58
    %64 = vadd.xlane.f32.xlu0 %v59
    %v65 = vpop.xlane.xlu0 %64
    %66 = vadd.xlane.f32.xlu0 %v60
    %v67 = vpop.xlane.xlu0 %66
    %68 = vadd.xlane.f32.xlu0 %v61
    %v69 = vpop.xlane.xlu0 %68
    %70 = vadd.xlane.f32.xlu0 %v62
    %v71 = vpop.xlane.xlu0 %70
    %v72 = vsel %vm44, %v63, 0.0
    %73 = vadd.xlane.f32.xlu0 %v72
    %v74 = vpop.xlane.xlu0 %73
    %v75 = vmul.f32 %v65, %v48
    %v76 = vmul.f32 %v67, %v48
    %v77 = vmul.f32 %v69, %v48
    %v78 = vmul.f32 %v71, %v48
    %v79 = vmul.f32 %v74, %v48
    %v80 = vadd.f32 %v75, 1e-05
    %v81 = vadd.f32 %v76, 1e-05
    %v82 = vadd.f32 %v77, 1e-05
    %v83 = vadd.f32 %v78, 1e-05
    %v84 = vadd.f32 %v79, 1e-05
    %v85 = vrsqrt.pop %v80
    %v86 = vrsqrt.pop %v81
    %v87 = vrsqrt.pop %v82
    %v88 = vrsqrt.pop %v83
    %v89 = vrsqrt.pop %v84
    %v90 = vmul.f32 %v54, %v85
    %v91 = vmul.f32 %v55, %v86
    %v92 = vmul.f32 %v56, %v87
    %v93 = vmul.f32 %v57, %v88
    %v94 = vmul.f32 %v58, %v89
    %v95 = vld [vmem:[%s1] sm:$0x1]
    %v97 = vlaneseq
    %v98 = vshrl.u32 %v97, 7
    %v99 = vsub.s32 0, %v98
    %v100 = vrot.slane %v95, %v99
    %v102 = vmul.f32 %v90, %v100
    %v103 = vmul.f32 %v91, %v100
    %v104 = vmul.f32 %v92, %v100
    %v105 = vmul.f32 %v93, %v100
    %v106 = vmul.f32 %v94, %v100
    %v107 = vld [vmem:[%s2] sm:$0x1]
    %v109 = vlaneseq
    %v110 = vshrl.u32 %v109, 7
    %v111 = vsub.s32 0, %v110
    %v112 = vrot.slane %v107, %v111
    %v114 = vadd.f32 %v102, %v112
    %v115 = vadd.f32 %v103, %v112
    %v116 = vadd.f32 %v104, %v112
    %v117 = vadd.f32 %v105, %v112
    %v118 = vadd.f32 %v106, %v112
    %v119 = vpack.c.bf16 %v115, %v114
    %v120 = vpack.c.bf16 %v117, %v116
    %v121 = vpack.c.bf16 %v118, %v118
    %v125 = vunpack.c.l.b16 %v119
    %v126 = vunpack.c.h.b16 %v119
    %v127 = vunpack.c.l.b16 %v120
    %v128 = vunpack.c.h.b16 %v120
    %v129 = vunpack.c.l.b16 %v121
    %v130 = vpack.c.b16 %v125, %v125
    %v131 = vpack.c.b16 %v126, %v126
    %v132 = vpack.c.b16 %v127, %v127
    %v133 = vpack.c.b16 %v128, %v128
    %v134 = vpack.c.b16 %v129, %v129
    %140 = vst [vmem:[#allocation2] sm:$0xf] %v130
    %141 = vst [vmem:[#allocation2 + $0x4] sm:$0xf] %v131
    %142 = vst [vmem:[#allocation2 + $0x8] sm:$0xf] %v132
    %143 = vst [vmem:[#allocation2 + $0xc] sm:$0xf] %v133
    %144 = vst [vmem:[#allocation2 + $0x10] sm:$0x1] %v134
    %145 = vst [vmem:[#allocation3] sm:$0xff] 0.0
    %146 = vst [vmem:[#allocation3 + $0x8] sm:$0xff] 0.0
    %147 = vst [vmem:[#allocation3 + $0x10] sm:$0xff] 0.0
    %148 = vst [vmem:[#allocation3 + $0x18] sm:$0xff] 0.0
    %149 = vst [vmem:[#allocation3 + $0x20] sm:$0x3] 0.0
  $region33: #{encode_image.16} parent=0 // pred_fallthru
    _
  %v150 = vld [vmem:[#allocation2] sm:$0xf]
  %v151 = vld [vmem:[#allocation2 + $0x4] sm:$0xf]
  %v152 = vld [vmem:[#allocation2 + $0x8] sm:$0xf]
  %v153 = vld [vmem:[#allocation2 + $0xc] sm:$0xf]
  %v154 = vld [vmem:[#allocation2 + $0x10] sm:$0x1]
  %v155 = vld [vmem:[%s3] sm:$0xff]
  %v156 = vld [vmem:[%s3 + $0x8] sm:$0xff]
  %v157 = vld [vmem:[%s3 + $0x10] sm:$0xff]
  %v158 = vld [vmem:[%s3 + $0x18] sm:$0xff]
  %v159 = vld [vmem:[%s3 + $0x20] sm:$0xff]
  %v160 = vld [vmem:[%s3 + $0x28] sm:$0xff]
  %v161 = vld [vmem:[%s3 + $0x30] sm:$0xff]
  %v162 = vld [vmem:[%s3 + $0x38] sm:$0xff]
  %v163 = vld [vmem:[%s3 + $0x40] sm:$0xff]
  %v164 = vld [vmem:[%s3 + $0x48] sm:$0xff]
  %v165 = vld [vmem:[%s3 + $0x50] sm:$0xff]
  %v166 = vld [vmem:[%s3 + $0x58] sm:$0xff]
  %v167 = vld [vmem:[%s3 + $0x60] sm:$0xff]
  %v168 = vld [vmem:[%s3 + $0x68] sm:$0xff]
  %v169 = vld [vmem:[%s3 + $0x70] sm:$0xff]
  %v170 = vld [vmem:[%s3 + $0x78] sm:$0xff]
  %v171 = vld [vmem:[%s3 + $0x80] sm:$0xff]
  %v172 = vld [vmem:[%s3 + $0x88] sm:$0xff]
  %v173 = vld [vmem:[%s3 + $0x90] sm:$0xff]
  %v174 = vld [vmem:[%s3 + $0x98] sm:$0xff]
  %v175 = vld [vmem:[%s3 + $0xa0] sm:$0xff]
  %v176 = vld [vmem:[%s3 + $0xa8] sm:$0xff]
  %v177 = vld [vmem:[%s3 + $0xb0] sm:$0xff]
  %v178 = vld [vmem:[%s3 + $0xb8] sm:$0xff]
  %v179 = vld [vmem:[%s3 + $0xc0] sm:$0xff]
  %v180 = vld [vmem:[%s3 + $0xc8] sm:$0xff]
  %v181 = vld [vmem:[%s3 + $0xd0] sm:$0xff]
  %v182 = vld [vmem:[%s3 + $0xd8] sm:$0xff]
  %v183 = vld [vmem:[%s3 + $0xe0] sm:$0xff]
  %v184 = vld [vmem:[%s3 + $0xe8] sm:$0xff]
  %v185 = vld [vmem:[%s3 + $0xf0] sm:$0xff]
  %v186 = vld [vmem:[%s3 + $0xf8] sm:$0xff]
  %v187 = vld [vmem:[%s4] sm:$0xf]
  %v189 = vlaneseq
  %v190 = vshrl.u32 %v189, 7
  %v191 = vsub.s32 0, %v190
  %v192 = vrot.slane %v187, %v191
  %v193 = vlaneseq
  %v194 = vshrl.u32 %v193, 7
  %v195 = vsub.s32 1, %v194
  %v196 = vrot.slane %v187, %v195
  %v197 = vlaneseq
  %v198 = vshrl.u32 %v197, 7
  %v199 = vsub.s32 2, %v198
  %v200 = vrot.slane %v187, %v199
  %v201 = vlaneseq
  %v202 = vshrl.u32 %v201, 7
  %v203 = vsub.s32 3, %v202
  %v204 = vrot.slane %v187, %v203
  %v214 = vunpack.c.l.b16 %v150
  %v215 = vunpack.c.l.b16 %v151
  %v216 = vunpack.c.l.b16 %v152
  %v217 = vunpack.c.l.b16 %v153
  %v218 = vunpack.c.l.b16 %v154
  %v219 = vpack.c.b16 %v215, %v214
  %v220 = vpack.c.b16 %v217, %v216
  %v221 = vpack.c.b16 %v218, %v218
  %v257 = vunpack.c.l.b16 %v155
  %v258 = vunpack.c.h.b16 %v155
  %v259 = vunpack.c.l.b16 %v156
  %v260 = vunpack.c.h.b16 %v156
  %v261 = vunpack.c.l.b16 %v157
  %v262 = vunpack.c.h.b16 %v157
  %v263 = vunpack.c.l.b16 %v158
  %v264 = vunpack.c.h.b16 %v158
  %v265 = vunpack.c.l.b16 %v159
  %v266 = vunpack.c.h.b16 %v159
  %v267 = vunpack.c.l.b16 %v160
  %v268 = vunpack.c.h.b16 %v160
  %v269 = vunpack.c.l.b16 %v161
  %v270 = vunpack.c.h.b16 %v161
  %v271 = vunpack.c.l.b16 %v162
  %v272 = vunpack.c.h.b16 %v162
  %v273 = vunpack.c.l.b16 %v163
  %v274 = vunpack.c.h.b16 %v163
  %v275 = vunpack.c.l.b16 %v164
  %v276 = vunpack.c.h.b16 %v164
  %v277 = vunpack.c.l.b16 %v165
  %v278 = vunpack.c.h.b16 %v165
  %v279 = vunpack.c.l.b16 %v166
  %v280 = vunpack.c.h.b16 %v166
  %v281 = vunpack.c.l.b16 %v167
  %v282 = vunpack.c.h.b16 %v167
  %v283 = vunpack.c.l.b16 %v168
  %v284 = vunpack.c.h.b16 %v168
  %v285 = vunpack.c.l.b16 %v169
  %v286 = vunpack.c.h.b16 %v169
  %v287 = vunpack.c.l.b16 %v170
  %v288 = vunpack.c.h.b16 %v170
  %v289 = vunpack.c.l.b16 %v171
  %v290 = vunpack.c.h.b16 %v171
  %v291 = vunpack.c.l.b16 %v172
  %v292 = vunpack.c.h.b16 %v172
  %v293 = vunpack.c.l.b16 %v173
  %v294 = vunpack.c.h.b16 %v173
  %v295 = vunpack.c.l.b16 %v174
  %v296 = vunpack.c.h.b16 %v174
  %v297 = vunpack.c.l.b16 %v175
  %v298 = vunpack.c.h.b16 %v175
  %v299 = vunpack.c.l.b16 %v176
  %v300 = vunpack.c.h.b16 %v176
  %v301 = vunpack.c.l.b16 %v177
  %v302 = vunpack.c.h.b16 %v177
  %v303 = vunpack.c.l.b16 %v178
  %v304 = vunpack.c.h.b16 %v178
  %v305 = vunpack.c.l.b16 %v179
  %v306 = vunpack.c.h.b16 %v179
  %v307 = vunpack.c.l.b16 %v180
  %v308 = vunpack.c.h.b16 %v180
  %v309 = vunpack.c.l.b16 %v181
  %v310 = vunpack.c.h.b16 %v181
  %v311 = vunpack.c.l.b16 %v182
  %v312 = vunpack.c.h.b16 %v182
  %v313 = vunpack.c.l.b16 %v183
  %v314 = vunpack.c.h.b16 %v183
  %v315 = vunpack.c.l.b16 %v184
  %v316 = vunpack.c.h.b16 %v184
  %v317 = vunpack.c.l.b16 %v185
  %v318 = vunpack.c.h.b16 %v185
  %v319 = vunpack.c.l.b16 %v186
  %v320 = vunpack.c.h.b16 %v186
  %v321 = vpack.c.b16 %v261, %v257
  %v322 = vpack.c.b16 %v262, %v258
  %v323 = vpack.c.b16 %v263, %v259
  %v324 = vpack.c.b16 %v264, %v260
  %v325 = vpack.c.b16 %v269, %v265
  %v326 = vpack.c.b16 %v270, %v266
  %v327 = vpack.c.b16 %v271, %v267
  %v328 = vpack.c.b16 %v272, %v268
  %v329 = vpack.c.b16 %v277, %v273
  %v330 = vpack.c.b16 %v278, %v274
  %v331 = vpack.c.b16 %v279, %v275
  %v332 = vpack.c.b16 %v280, %v276
  %v333 = vpack.c.b16 %v285, %v281
  %v334 = vpack.c.b16 %v286, %v282
  %v335 = vpack.c.b16 %v287, %v283
  %v336 = vpack.c.b16 %v288, %v284
  %v337 = vpack.c.b16 %v293, %v289
  %v338 = vpack.c.b16 %v294, %v290
  %v339 = vpack.c.b16 %v295, %v291
  %v340 = vpack.c.b16 %v296, %v292
  %v341 = vpack.c.b16 %v301, %v297
  %v342 = vpack.c.b16 %v302, %v298
  %v343 = vpack.c.b16 %v303, %v299
  %v344 = vpack.c.b16 %v304, %v300
  %v345 = vpack.c.b16 %v309, %v305
  %v346 = vpack.c.b16 %v310, %v306
  %v347 = vpack.c.b16 %v311, %v307
  %v348 = vpack.c.b16 %v312, %v308
  %v349 = vpack.c.b16 %v317, %v313
  %v350 = vpack.c.b16 %v318, %v314
  %v351 = vpack.c.b16 %v319, %v315
  %v352 = vpack.c.b16 %v320, %v316
  %385 = vmatprep.subr.bf16.mxu0 %v322
  %386 = vmatpush1.bf16.msra.mxu0 %v321
  %387 = vmatprep.subr.bf16.mxu0 %v326
  %388 = vmatpush1.bf16.msra.mxu0 %v325
  %389 = vmatprep.subr.bf16.mxu0 %v330
  %390 = vmatpush1.bf16.msra.mxu0 %v329
  %391 = vmatprep.subr.bf16.mxu0 %v334
  %392 = vmatpush1.bf16.msra.mxu0 %v333
  %393 = vmatprep.subr.bf16.mxu0 %v338
  %394 = vmatpush1.bf16.msra.mxu0 %v337
  %395 = vmatprep.subr.bf16.mxu0 %v342
  %396 = vmatpush1.bf16.msra.mxu0 %v341
  %397 = vmatprep.subr.bf16.mxu0 %v346
  %398 = vmatpush1.bf16.msra.mxu0 %v345
  %399 = vmatprep.subr.bf16.mxu0 %v350
  %400 = vmatpush1.bf16.msra.mxu0 %v349
  %401 = vmatprep.subr.bf16.mxu0 0
  %402 = vmatpush1.bf16.msra.mxu0 0
  %403 = vmatprep.subr.bf16.mxu0 0
  %404 = vmatpush1.bf16.msra.mxu0 0
  %405 = vmatprep.subr.bf16.mxu0 0
  %406 = vmatpush1.bf16.msra.mxu0 0
  %407 = vmatprep.subr.bf16.mxu0 0
  %408 = vmatpush1.bf16.msra.mxu0 0
  %409 = vmatprep.subr.bf16.mxu0 0
  %410 = vmatpush1.bf16.msra.mxu0 0
  %411 = vmatprep.subr.bf16.mxu0 0
  %412 = vmatpush1.bf16.msra.mxu0 0
  %413 = vmatprep.subr.bf16.mxu0 0
  %414 = vmatpush1.bf16.msra.mxu0 0
  %415 = vmatprep.subr.bf16.mxu0 0
  %416 = vmatpush1.bf16.msra.mxu0 0
  %417 = vmatprep.mubr.bf16.mxu0 0
  %418 = vmatmul.mubr.bf16.gmra.mrb[0].mxu0 %v219
  %v419 = vpop.f32.mrb[0].mxu0
  %v420 = vadd.f32 %v192, %v419
  %v421 = vpop.f32.mrb[0].mxu0
  %v422 = vadd.f32 %v196, %v421
  %v423 = vpop.f32.mrb[0].mxu0
  %v424 = vadd.f32 %v192, %v423
  %v425 = vpop.f32.mrb[0].mxu0
  %v426 = vadd.f32 %v196, %v425
  %427 = vmatprep.mubr.bf16.mxu0 0
  %428 = vmatmul.mubr.bf16.gmra.mrb[0].mxu0 %v220
  %v429 = vpop.f32.mrb[0].mxu0
  %v430 = vadd.f32 %v192, %v429
  %v431 = vpop.f32.mrb[0].mxu0
  %v432 = vadd.f32 %v196, %v431
  %v433 = vpop.f32.mrb[0].mxu0
  %v434 = vadd.f32 %v192, %v433
  %v435 = vpop.f32.mrb[0].mxu0
  %v436 = vadd.f32 %v196, %v435
  %437 = vmatprep.mubr.bf16.mxu0 0
  %438 = vmatmul.mubr.bf16.gmra.mrb[0].mxu0 %v221
  %v439 = vpop.f32.mrb[0].mxu0
  %v440 = vadd.f32 %v192, %v439
  %v441 = vpop.f32.mrb[0].mxu0
  %v442 = vadd.f32 %v196, %v441
  %v443 = vpop.f32.mrb[0].mxu0
  %v444 = vpop.f32.mrb[0].mxu0
  %445 = vdwg.mxu0
  %446 = vmatprep.subr.bf16.mxu0 %v324
  %447 = vmatpush1.bf16.msra.mxu0 %v323
  %448 = vmatprep.subr.bf16.mxu0 %v328
  %449 = vmatpush1.bf16.msra.mxu0 %v327
  %450 = vmatprep.subr.bf16.mxu0 %v332
  %451 = vmatpush1.bf16.msra.mxu0 %v331
  %452 = vmatprep.subr.bf16.mxu0 %v336
  %453 = vmatpush1.bf16.msra.mxu0 %v335
  %454 = vmatprep.subr.bf16.mxu0 %v340
  %455 = vmatpush1.bf16.msra.mxu0 %v339
  %456 = vmatprep.subr.bf16.mxu0 %v344
  %457 = vmatpush1.bf16.msra.mxu0 %v343
  %458 = vmatprep.subr.bf16.mxu0 %v348
  %459 = vmatpush1.bf16.msra.mxu0 %v347
  %460 = vmatprep.subr.bf16.mxu0 %v352
  %461 = vmatpush1.bf16.msra.mxu0 %v351
  %462 = vmatprep.subr.bf16.mxu0 0
  %463 = vmatpush1.bf16.msra.mxu0 0
  %464 = vmatprep.subr.bf16.mxu0 0
  %465 = vmatpush1.bf16.msra.mxu0 0
  %466 = vmatprep.subr.bf16.mxu0 0
  %467 = vmatpush1.bf16.msra.mxu0 0
  %468 = vmatprep.subr.bf16.mxu0 0
  %469 = vmatpush1.bf16.msra.mxu0 0
  %470 = vmatprep.subr.bf16.mxu0 0
  %471 = vmatpush1.bf16.msra.mxu0 0
  %472 = vmatprep.subr.bf16.mxu0 0
  %473 = vmatpush1.bf16.msra.mxu0 0
  %474 = vmatprep.subr.bf16.mxu0 0
  %475 = vmatpush1.bf16.msra.mxu0 0
  %476 = vmatprep.subr.bf16.mxu0 0
  %477 = vmatpush1.bf16.msra.mxu0 0
  %478 = vmatprep.mubr.bf16.mxu0 0
  %479 = vmatmul.mubr.bf16.gmra.mrb[0].mxu0 %v219
  %v480 = vpop.f32.mrb[0].mxu0
  %v481 = vadd.f32 %v200, %v480
  %v482 = vpop.f32.mrb[0].mxu0
  %v483 = vadd.f32 %v204, %v482
  %v484 = vpop.f32.mrb[0].mxu0
  %v485 = vadd.f32 %v200, %v484
  %v486 = vpop.f32.mrb[0].mxu0
  %v487 = vadd.f32 %v204, %v486
  %488 = vmatprep.mubr.bf16.mxu0 0
  %489 = vmatmul.mubr.bf16.gmra.mrb[0].mxu0 %v220
  %v490 = vpop.f32.mrb[0].mxu0
  %v491 = vadd.f32 %v200, %v490
  %v492 = vpop.f32.mrb[0].mxu0
  %v493 = vadd.f32 %v204, %v492
  %v494 = vpop.f32.mrb[0].mxu0
  %v495 = vadd.f32 %v200, %v494
  %v496 = vpop.f32.mrb[0].mxu0
  %v497 = vadd.f32 %v204, %v496
  %498 = vmatprep.mubr.bf16.mxu0 0
  %499 = vmatmul.mubr.bf16.gmra.mrb[0].mxu0 %v221
  %v500 = vpop.f32.mrb[0].mxu0
  %v501 = vadd.f32 %v200, %v500
  %v502 = vpop.f32.mrb[0].mxu0
  %v503 = vadd.f32 %v204, %v502
  %v504 = vpop.f32.mrb[0].mxu0
  %v505 = vpop.f32.mrb[0].mxu0
  %506 = vdwg.mxu0
  %v507 = vmul.f32 %v420, 1.702
  %v508 = vmul.f32 %v422, 1.702
  %v509 = vmul.f32 %v481, 1.702
  %v510 = vmul.f32 %v483, 1.702
  %v511 = vmul.f32 %v424, 1.702
  %v512 = vmul.f32 %v426, 1.702
  %v513 = vmul.f32 %v485, 1.702
  %v514 = vmul.f32 %v487, 1.702
  %v515 = vmul.f32 %v430, 1.702
  %v516 = vmul.f32 %v432, 1.702
  %v517 = vmul.f32 %v491, 1.702
  %v518 = vmul.f32 %v493, 1.702
  %v519 = vmul.f32 %v434, 1.702
  %v520 = vmul.f32 %v436, 1.702
  %v521 = vmul.f32 %v495, 1.702
  %v522 = vmul.f32 %v497, 1.702
  %v523 = vmul.f32 %v440, 1.702
  %v524 = vmul.f32 %v442, 1.702
  %v525 = vmul.f32 %v501, 1.702
  %v526 = vmul.f32 %v503, 1.702
  %v527 = vxor.u32 %v507, 2147483648
  %v528 = vxor.u32 %v508, 2147483648
  %v529 = vxor.u32 %v509, 2147483648
  %v530 = vxor.u32 %v510, 2147483648
  %v531 = vxor.u32 %v511, 2147483648
  %v532 = vxor.u32 %v512, 2147483648
  %v533 = vxor.u32 %v513, 2147483648
  %v534 = vxor.u32 %v514, 2147483648
  %v535 = vxor.u32 %v515, 2147483648
  %v536 = vxor.u32 %v516, 2147483648
  %v537 = vxor.u32 %v517, 2147483648
  %v538 = vxor.u32 %v518, 2147483648
  %v539 = vxor.u32 %v519, 2147483648
  %v540 = vxor.u32 %v520, 2147483648
  %v541 = vxor.u32 %v521, 2147483648
  %v542 = vxor.u32 %v522, 2147483648
  %v543 = vxor.u32 %v523, 2147483648
  %v544 = vxor.u32 %v524, 2147483648
  %v545 = vxor.u32 %v525, 2147483648
  %v546 = vxor.u32 %v526, 2147483648
  %v547 = vmul.f32 %v527, 1.442695
  %v548 = vpow.pop %v547
  %v549 = vmul.f32 %v528, 1.442695
  %v550 = vpow.pop %v549
  %v551 = vmul.f32 %v529, 1.442695
  %v552 = vpow.pop %v551
  %v553 = vmul.f32 %v530, 1.442695
  %v554 = vpow.pop %v553
  %v555 = vmul.f32 %v531, 1.442695
  %v556 = vpow.pop %v555
  %v557 = vmul.f32 %v532, 1.442695
  %v558 = vpow.pop %v557
  %v559 = vmul.f32 %v533, 1.442695
  %v560 = vpow.pop %v559
  %v561 = vmul.f32 %v534, 1.442695
  %v562 = vpow.pop %v561
  %v563 = vmul.f32 %v535, 1.442695
  %v564 = vpow.pop %v563
  %v565 = vmul.f32 %v536, 1.442695
  %v566 = vpow.pop %v565
  %v567 = vmul.f32 %v537, 1.442695
  %v568 = vpow.pop %v567
  %v569 = vmul.f32 %v538, 1.442695
  %v570 = vpow.pop %v569
  %v571 = vmul.f32 %v539, 1.442695
  %v572 = vpow.pop %v571
  %v573 = vmul.f32 %v540, 1.442695
  %v574 = vpow.pop %v573
  %v575 = vmul.f32 %v541, 1.442695
  %v576 = vpow.pop %v575
  %v577 = vmul.f32 %v542, 1.442695
  %v578 = vpow.pop %v577
  %v579 = vmul.f32 %v543, 1.442695
  %v580 = vpow.pop %v579
  %v581 = vmul.f32 %v544, 1.442695
  %v582 = vpow.pop %v581
  %v583 = vmul.f32 %v545, 1.442695
  %v584 = vpow.pop %v583
  %v585 = vmul.f32 %v546, 1.442695
  %v586 = vpow.pop %v585
  %v587 = vadd.f32 %v548, 1.0
  %v588 = vadd.f32 %v550, 1.0
  %v589 = vadd.f32 %v552, 1.0
  %v590 = vadd.f32 %v554, 1.0
  %v591 = vadd.f32 %v556, 1.0
  %v592 = vadd.f32 %v558, 1.0
  %v593 = vadd.f32 %v560, 1.0
  %v594 = vadd.f32 %v562, 1.0
  %v595 = vadd.f32 %v564, 1.0
  %v596 = vadd.f32 %v566, 1.0
  %v597 = vadd.f32 %v568, 1.0
  %v598 = vadd.f32 %v570, 1.0
  %v599 = vadd.f32 %v572, 1.0
  %v600 = vadd.f32 %v574, 1.0
  %v601 = vadd.f32 %v576, 1.0
  %v602 = vadd.f32 %v578, 1.0
  %v603 = vadd.f32 %v580, 1.0
  %v604 = vadd.f32 %v582, 1.0
  %v605 = vadd.f32 %v584, 1.0
  %v606 = vadd.f32 %v586, 1.0
  %v607 = vrcp.pop %v587
  %v608 = vmul.f32 1.0, %v607
  %v609 = vrcp.pop %v588
  %v610 = vmul.f32 1.0, %v609
  %v611 = vrcp.pop %v589
  %v612 = vmul.f32 1.0, %v611
  %v613 = vrcp.pop %v590
  %v614 = vmul.f32 1.0, %v613
  %v615 = vrcp.pop %v591
  %v616 = vmul.f32 1.0, %v615
  %v617 = vrcp.pop %v592
  %v618 = vmul.f32 1.0, %v617
  %v619 = vrcp.pop %v593
  %v620 = vmul.f32 1.0, %v619
  %v621 = vrcp.pop %v594
  %v622 = vmul.f32 1.0, %v621
  %v623 = vrcp.pop %v595
  %v624 = vmul.f32 1.0, %v623
  %v625 = vrcp.pop %v596
  %v626 = vmul.f32 1.0, %v625
  %v627 = vrcp.pop %v597
  %v628 = vmul.f32 1.0, %v627
  %v629 = vrcp.pop %v598
  %v630 = vmul.f32 1.0, %v629
  %v631 = vrcp.pop %v599
  %v632 = vmul.f32 1.0, %v631
  %v633 = vrcp.pop %v600
  %v634 = vmul.f32 1.0, %v633
  %v635 = vrcp.pop %v601
  %v636 = vmul.f32 1.0, %v635
  %v637 = vrcp.pop %v602
  %v638 = vmul.f32 1.0, %v637
  %v639 = vrcp.pop %v603
  %v640 = vmul.f32 1.0, %v639
  %v641 = vrcp.pop %v604
  %v642 = vmul.f32 1.0, %v641
  %v643 = vrcp.pop %v605
  %v644 = vmul.f32 1.0, %v643
  %v645 = vrcp.pop %v606
  %v646 = vmul.f32 1.0, %v645
  %v647 = vmul.f32 %v420, %v608
  %v648 = vmul.f32 %v422, %v610
  %v649 = vmul.f32 %v481, %v612
  %v650 = vmul.f32 %v483, %v614
  %v651 = vmul.f32 %v424, %v616
  %v652 = vmul.f32 %v426, %v618
  %v653 = vmul.f32 %v485, %v620
  %v654 = vmul.f32 %v487, %v622
  %v655 = vmul.f32 %v430, %v624
  %v656 = vmul.f32 %v432, %v626
  %v657 = vmul.f32 %v491, %v628
  %v658 = vmul.f32 %v493, %v630
  %v659 = vmul.f32 %v434, %v632
  %v660 = vmul.f32 %v436, %v634
  %v661 = vmul.f32 %v495, %v636
  %v662 = vmul.f32 %v497, %v638
  %v663 = vmul.f32 %v440, %v640
  %v664 = vmul.f32 %v442, %v642
  %v665 = vmul.f32 %v501, %v644
  %v666 = vmul.f32 %v503, %v646
  %v667 = vld [vmem:[#allocation3] sm:$0xff]
  %v668 = vld [vmem:[#allocation3 + $0x8] sm:$0xff]
  %v669 = vld [vmem:[#allocation3 + $0x10] sm:$0xff]
  %v670 = vld [vmem:[#allocation3 + $0x18] sm:$0xff]
  %v671 = vld [vmem:[#allocation3 + $0x20] sm:$0x3]
  %v672 = vpack.c.bf16 %v651, %v647
  %v673 = vpack.c.bf16 %v652, %v648
  %v674 = vpack.c.bf16 %v653, %v649
  %v675 = vpack.c.bf16 %v654, %v650
  %v676 = vpack.c.bf16 %v659, %v655
  %v677 = vpack.c.bf16 %v660, %v656
  %v678 = vpack.c.bf16 %v661, %v657
  %v679 = vpack.c.bf16 %v662, %v658
  %v680 = vpack.c.bf16 %v663, %v663
  %v681 = vpack.c.bf16 %v664, %v664
  %v682 = vpack.c.bf16 %v665, %v665
  %v683 = vpack.c.bf16 %v666, %v666
  %v684 = vld [vmem:[%s5] sm:$0xf]
  %v685 = vld [vmem:[%s5 + $0x4] sm:$0xf]
  %v686 = vld [vmem:[%s5 + $0x8] sm:$0xf]
  %v687 = vld [vmem:[%s5 + $0xc] sm:$0xf]
  %v688 = vld [vmem:[%s5 + $0x10] sm:$0xf]
  %v689 = vld [vmem:[%s5 + $0x14] sm:$0xf]
  %v690 = vld [vmem:[%s5 + $0x18] sm:$0xf]
  %v691 = vld [vmem:[%s5 + $0x1c] sm:$0xf]
  %v692 = vld [vmem:[%s5 + $0x20] sm:$0xf]
  %v693 = vld [vmem:[%s5 + $0x24] sm:$0xf]
  %v694 = vld [vmem:[%s5 + $0x28] sm:$0xf]
  %v695 = vld [vmem:[%s5 + $0x2c] sm:$0xf]
  %v696 = vld [vmem:[%s5 + $0x30] sm:$0xf]
  %v697 = vld [vmem:[%s5 + $0x34] sm:$0xf]
  %v698 = vld [vmem:[%s5 + $0x38] sm:$0xf]
  %v699 = vld [vmem:[%s5 + $0x3c] sm:$0xf]
  %v700 = vld [vmem:[%s5 + $0x40] sm:$0xf]
  %v701 = vld [vmem:[%s5 + $0x44] sm:$0xf]
  %v702 = vld [vmem:[%s5 + $0x48] sm:$0xf]
  %v703 = vld [vmem:[%s5 + $0x4c] sm:$0xf]
  %v704 = vld [vmem:[%s5 + $0x50] sm:$0xf]
  %v705 = vld [vmem:[%s5 + $0x54] sm:$0xf]
  %v706 = vld [vmem:[%s5 + $0x58] sm:$0xf]
  %v707 = vld [vmem:[%s5 + $0x5c] sm:$0xf]
  %v708 = vld [vmem:[%s5 + $0x60] sm:$0xf]
  %v709 = vld [vmem:[%s5 + $0x64] sm:$0xf]
  %v710 = vld [vmem:[%s5 + $0x68] sm:$0xf]
  %v711 = vld [vmem:[%s5 + $0x6c] sm:$0xf]
  %v712 = vld [vmem:[%s5 + $0x70] sm:$0xf]
  %v713 = vld [vmem:[%s5 + $0x74] sm:$0xf]
  %v714 = vld [vmem:[%s5 + $0x78] sm:$0xf]
  %v715 = vld [vmem:[%s5 + $0x7c] sm:$0xf]
  %v716 = vld [vmem:[%s5 + $0x80] sm:$0xf]
  %v717 = vld [vmem:[%s5 + $0x84] sm:$0xf]
  %v718 = vld [vmem:[%s5 + $0x88] sm:$0xf]
  %v719 = vld [vmem:[%s5 + $0x8c] sm:$0xf]
  %v720 = vld [vmem:[%s5 + $0x90] sm:$0xf]
  %v721 = vld [vmem:[%s5 + $0x94] sm:$0xf]
  %v722 = vld [vmem:[%s5 + $0x98] sm:$0xf]
  %v723 = vld [vmem:[%s5 + $0x9c] sm:$0xf]
  %v724 = vld [vmem:[%s5 + $0xa0] sm:$0xf]
  %v725 = vld [vmem:[%s5 + $0xa4] sm:$0xf]
  %v726 = vld [vmem:[%s5 + $0xa8] sm:$0xf]
  %v727 = vld [vmem:[%s5 + $0xac] sm:$0xf]
  %v728 = vld [vmem:[%s5 + $0xb0] sm:$0xf]
  %v729 = vld [vmem:[%s5 + $0xb4] sm:$0xf]
  %v730 = vld [vmem:[%s5 + $0xb8] sm:$0xf]
  %v731 = vld [vmem:[%s5 + $0xbc] sm:$0xf]
  %v732 = vld [vmem:[%s5 + $0xc0] sm:$0xf]
  %v733 = vld [vmem:[%s5 + $0xc4] sm:$0xf]
  %v734 = vld [vmem:[%s5 + $0xc8] sm:$0xf]
  %v735 = vld [vmem:[%s5 + $0xcc] sm:$0xf]
  %v736 = vld [vmem:[%s5 + $0xd0] sm:$0xf]
  %v737 = vld [vmem:[%s5 + $0xd4] sm:$0xf]
  %v738 = vld [vmem:[%s5 + $0xd8] sm:$0xf]
  %v739 = vld [vmem:[%s5 + $0xdc] sm:$0xf]
  %v740 = vld [vmem:[%s5 + $0xe0] sm:$0xf]
  %v741 = vld [vmem:[%s5 + $0xe4] sm:$0xf]
  %v742 = vld [vmem:[%s5 + $0xe8] sm:$0xf]
  %v743 = vld [vmem:[%s5 + $0xec] sm:$0xf]
  %v744 = vld [vmem:[%s5 + $0xf0] sm:$0xf]
  %v745 = vld [vmem:[%s5 + $0xf4] sm:$0xf]
  %v746 = vld [vmem:[%s5 + $0xf8] sm:$0xf]
  %v747 = vld [vmem:[%s5 + $0xfc] sm:$0xf]
  %v812 = vunpack.c.l.b16 %v684
  %v813 = vunpack.c.l.b16 %v685
  %v814 = vunpack.c.l.b16 %v686
  %v815 = vunpack.c.l.b16 %v687
  %v816 = vunpack.c.l.b16 %v688
  %v817 = vunpack.c.l.b16 %v689
  %v818 = vunpack.c.l.b16 %v690
  %v819 = vunpack.c.l.b16 %v691
  %v820 = vunpack.c.l.b16 %v692
  %v821 = vunpack.c.l.b16 %v693
  %v822 = vunpack.c.l.b16 %v694
  %v823 = vunpack.c.l.b16 %v695
  %v824 = vunpack.c.l.b16 %v696
  %v825 = vunpack.c.l.b16 %v697
  %v826 = vunpack.c.l.b16 %v698
  %v827 = vunpack.c.l.b16 %v699
  %v828 = vunpack.c.l.b16 %v700
  %v829 = vunpack.c.l.b16 %v701
  %v830 = vunpack.c.l.b16 %v702
  %v831 = vunpack.c.l.b16 %v703
  %v832 = vunpack.c.l.b16 %v704
  %v833 = vunpack.c.l.b16 %v705
  %v834 = vunpack.c.l.b16 %v706
  %v835 = vunpack.c.l.b16 %v707
  %v836 = vunpack.c.l.b16 %v708
  %v837 = vunpack.c.l.b16 %v709
  %v838 = vunpack.c.l.b16 %v710
  %v839 = vunpack.c.l.b16 %v711
  %v840 = vunpack.c.l.b16 %v712
  %v841 = vunpack.c.l.b16 %v713
  %v842 = vunpack.c.l.b16 %v714
  %v843 = vunpack.c.l.b16 %v715
  %v844 = vunpack.c.l.b16 %v716
  %v845 = vunpack.c.l.b16 %v717
  %v846 = vunpack.c.l.b16 %v718
  %v847 = vunpack.c.l.b16 %v719
  %v848 = vunpack.c.l.b16 %v720
  %v849 = vunpack.c.l.b16 %v721
  %v850 = vunpack.c.l.b16 %v722
  %v851 = vunpack.c.l.b16 %v723
  %v852 = vunpack.c.l.b16 %v724
  %v853 = vunpack.c.l.b16 %v725
  %v854 = vunpack.c.l.b16 %v726
  %v855 = vunpack.c.l.b16 %v727
  %v856 = vunpack.c.l.b16 %v728
  %v857 = vunpack.c.l.b16 %v729
  %v858 = vunpack.c.l.b16 %v730
  %v859 = vunpack.c.l.b16 %v731
  %v860 = vunpack.c.l.b16 %v732
  %v861 = vunpack.c.l.b16 %v733
  %v862 = vunpack.c.l.b16 %v734
  %v863 = vunpack.c.l.b16 %v735
  %v864 = vunpack.c.l.b16 %v736
  %v865 = vunpack.c.l.b16 %v737
  %v866 = vunpack.c.l.b16 %v738
  %v867 = vunpack.c.l.b16 %v739
  %v868 = vunpack.c.l.b16 %v740
  %v869 = vunpack.c.l.b16 %v741
  %v870 = vunpack.c.l.b16 %v742
  %v871 = vunpack.c.l.b16 %v743
  %v872 = vunpack.c.l.b16 %v744
  %v873 = vunpack.c.l.b16 %v745
  %v874 = vunpack.c.l.b16 %v746
  %v875 = vunpack.c.l.b16 %v747
  %v876 = vpack.c.b16 %v813, %v812
  %v877 = vpack.c.b16 %v815, %v814
  %v878 = vpack.c.b16 %v817, %v816
  %v879 = vpack.c.b16 %v819, %v818
  %v880 = vpack.c.b16 %v821, %v820
  %v881 = vpack.c.b16 %v823, %v822
  %v882 = vpack.c.b16 %v825, %v824
  %v883 = vpack.c.b16 %v827, %v826
  %v884 = vpack.c.b16 %v829, %v828
  %v885 = vpack.c.b16 %v831, %v830
  %v886 = vpack.c.b16 %v833, %v832
  %v887 = vpack.c.b16 %v835, %v834
  %v888 = vpack.c.b16 %v837, %v836
  %v889 = vpack.c.b16 %v839, %v838
  %v890 = vpack.c.b16 %v841, %v840
  %v891 = vpack.c.b16 %v843, %v842
  %v892 = vpack.c.b16 %v845, %v844
  %v893 = vpack.c.b16 %v847, %v846
  %v894 = vpack.c.b16 %v849, %v848
  %v895 = vpack.c.b16 %v851, %v850
  %v896 = vpack.c.b16 %v853, %v852
  %v897 = vpack.c.b16 %v855, %v854
  %v898 = vpack.c.b16 %v857, %v856
  %v899 = vpack.c.b16 %v859, %v858
  %v900 = vpack.c.b16 %v861, %v860
  %v901 = vpack.c.b16 %v863, %v862
  %v902 = vpack.c.b16 %v865, %v864
  %v903 = vpack.c.b16 %v867, %v866
  %v904 = vpack.c.b16 %v869, %v868
  %v905 = vpack.c.b16 %v871, %v870
  %v906 = vpack.c.b16 %v873, %v872
  %v907 = vpack.c.b16 %v875, %v874
  %940 = vmatprep.subr.bf16.mxu0 0
  %941 = vmatpush1.bf16.msra.mxu0 %v876
  %942 = vmatprep.subr.bf16.mxu0 0
  %943 = vmatpush1.bf16.msra.mxu0 %v877
  %944 = vmatprep.subr.bf16.mxu0 0
  %945 = vmatpush1.bf16.msra.mxu0 %v878
  %946 = vmatprep.subr.bf16.mxu0 0
  %947 = vmatpush1.bf16.msra.mxu0 %v879
  %948 = vmatprep.subr.bf16.mxu0 0
  %949 = vmatpush1.bf16.msra.mxu0 %v880
  %950 = vmatprep.subr.bf16.mxu0 0
  %951 = vmatpush1.bf16.msra.mxu0 %v881
  %952 = vmatprep.subr.bf16.mxu0 0
  %953 = vmatpush1.bf16.msra.mxu0 %v882
  %954 = vmatprep.subr.bf16.mxu0 0
  %955 = vmatpush1.bf16.msra.mxu0 %v883
  %956 = vmatprep.subr.bf16.mxu0 0
  %957 = vmatpush1.bf16.msra.mxu0 %v884
  %958 = vmatprep.subr.bf16.mxu0 0
  %959 = vmatpush1.bf16.msra.mxu0 %v885
  %960 = vmatprep.subr.bf16.mxu0 0
  %961 = vmatpush1.bf16.msra.mxu0 %v886
  %962 = vmatprep.subr.bf16.mxu0 0
  %963 = vmatpush1.bf16.msra.mxu0 %v887
  %964 = vmatprep.subr.bf16.mxu0 0
  %965 = vmatpush1.bf16.msra.mxu0 %v888
  %966 = vmatprep.subr.bf16.mxu0 0
  %967 = vmatpush1.bf16.msra.mxu0 %v889
  %968 = vmatprep.subr.bf16.mxu0 0
  %969 = vmatpush1.bf16.msra.mxu0 %v890
  %970 = vmatprep.subr.bf16.mxu0 0
  %971 = vmatpush1.bf16.msra.mxu0 %v891
  %972 = vmatprep.mubr.bf16.mxu0 %v673
  %973 = vmatmul.mubr.bf16.gmra.mrb[0].mxu0 %v672
  %v974 = vpop.f32.mrb[0].mxu0
  %v975 = vadd.f32 0.0, %v974
  %v976 = vpop.f32.mrb[0].mxu0
  %v977 = vpop.f32.mrb[0].mxu0
  %v978 = vadd.f32 0.0, %v977
  %v979 = vpop.f32.mrb[0].mxu0
  %980 = vmatprep.mubr.bf16.mxu0 %v677
  %981 = vmatmul.mubr.bf16.gmra.mrb[0].mxu0 %v676
  %v982 = vpop.f32.mrb[0].mxu0
  %v983 = vadd.f32 0.0, %v982
  %v984 = vpop.f32.mrb[0].mxu0
  %v985 = vpop.f32.mrb[0].mxu0
  %v986 = vadd.f32 0.0, %v985
  %v987 = vpop.f32.mrb[0].mxu0
  %988 = vmatprep.mubr.bf16.mxu0 %v681
  %989 = vmatmul.mubr.bf16.gmra.mrb[0].mxu0 %v680
  %v990 = vpop.f32.mrb[0].mxu0
  %v991 = vadd.f32 0.0, %v990
  %v992 = vpop.f32.mrb[0].mxu0
  %v993 = vpop.f32.mrb[0].mxu0
  %v994 = vpop.f32.mrb[0].mxu0
  %995 = vdwg.mxu0
  %996 = vmatprep.subr.bf16.mxu0 0
  %997 = vmatpush1.bf16.msra.mxu0 %v892
  %998 = vmatprep.subr.bf16.mxu0 0
  %999 = vmatpush1.bf16.msra.mxu0 %v893
  %1000 = vmatprep.subr.bf16.mxu0 0
  %1001 = vmatpush1.bf16.msra.mxu0 %v894
  %1002 = vmatprep.subr.bf16.mxu0 0
  %1003 = vmatpush1.bf16.msra.mxu0 %v895
  %1004 = vmatprep.subr.bf16.mxu0 0
  %1005 = vmatpush1.bf16.msra.mxu0 %v896
  %1006 = vmatprep.subr.bf16.mxu0 0
  %1007 = vmatpush1.bf16.msra.mxu0 %v897
  %1008 = vmatprep.subr.bf16.mxu0 0
  %1009 = vmatpush1.bf16.msra.mxu0 %v898
  %1010 = vmatprep.subr.bf16.mxu0 0
  %1011 = vmatpush1.bf16.msra.mxu0 %v899
  %1012 = vmatprep.subr.bf16.mxu0 0
  %1013 = vmatpush1.bf16.msra.mxu0 %v900
  %1014 = vmatprep.subr.bf16.mxu0 0
  %1015 = vmatpush1.bf16.msra.mxu0 %v901
  %1016 = vmatprep.subr.bf16.mxu0 0
  %1017 = vmatpush1.bf16.msra.mxu0 %v902
  %1018 = vmatprep.subr.bf16.mxu0 0
  %1019 = vmatpush1.bf16.msra.mxu0 %v903
  %1020 = vmatprep.subr.bf16.mxu0 0
  %1021 = vmatpush1.bf16.msra.mxu0 %v904
  %1022 = vmatprep.subr.bf16.mxu0 0
  %1023 = vmatpush1.bf16.msra.mxu0 %v905
  %1024 = vmatprep.subr.bf16.mxu0 0
  %1025 = vmatpush1.bf16.msra.mxu0 %v906
  %1026 = vmatprep.subr.bf16.mxu0 0
  %1027 = vmatpush1.bf16.msra.mxu0 %v907
  %1028 = vmatprep.mubr.bf16.mxu0 %v675
  %1029 = vmatmul.mubr.bf16.gmra.mrb[0].mxu0 %v674
  %v1030 = vpop.f32.mrb[0].mxu0
  %v1031 = vadd.f32 %v975, %v1030
  %v1032 = vpop.f32.mrb[0].mxu0
  %v1033 = vpop.f32.mrb[0].mxu0
  %v1034 = vadd.f32 %v978, %v1033
  %v1035 = vpop.f32.mrb[0].mxu0
  %1036 = vmatprep.mubr.bf16.mxu0 %v679
  %1037 = vmatmul.mubr.bf16.gmra.mrb[0].mxu0 %v678
  %v1038 = vpop.f32.mrb[0].mxu0
  %v1039 = vadd.f32 %v983, %v1038
  %v1040 = vpop.f32.mrb[0].mxu0
  %v1041 = vpop.f32.mrb[0].mxu0
  %v1042 = vadd.f32 %v986, %v1041
  %v1043 = vpop.f32.mrb[0].mxu0
  %1044 = vmatprep.mubr.bf16.mxu0 %v683
  %1045 = vmatmul.mubr.bf16.gmra.mrb[0].mxu0 %v682
  %v1046 = vpop.f32.mrb[0].mxu0
  %v1047 = vadd.f32 %v991, %v1046
  %v1048 = vpop.f32.mrb[0].mxu0
  %v1049 = vpop.f32.mrb[0].mxu0
  %v1050 = vpop.f32.mrb[0].mxu0
  %1051 = vdwg.mxu0
  %v1052 = vadd.f32 %v667, %v1031
  %v1053 = vadd.f32 %v668, %v1034
  %v1054 = vadd.f32 %v669, %v1039
  %v1055 = vadd.f32 %v670, %v1042
  %v1056 = vadd.f32 %v671, %v1047
  %1057 = vst [vmem:[#allocation3] sm:$0xff] %v1052
  %1058 = vst [vmem:[#allocation3 + $0x8] sm:$0xff] %v1053
  %1059 = vst [vmem:[#allocation3 + $0x10] sm:$0xff] %v1054
  %1060 = vst [vmem:[#allocation3 + $0x18] sm:$0xff] %v1055
  %1061 = vst [vmem:[#allocation3 + $0x20] sm:$0x3] %v1056
  // Predicated region
  $region34: #{encode_image.16} parent=0 // pred_check
    %p1062 = pneg %p27
  $region35: #{encode_image.16} parent=0 // pred_check_branch
    %1064 = sbr.rel (%p1062) target = $region37
  $region36: #{encode_image.16} parent=0 // pred_region
    %v1065 = vld [vmem:[#allocation3] sm:$0xff]
    %v1066 = vld [vmem:[#allocation3 + $0x8] sm:$0xff]
    %v1067 = vld [vmem:[#allocation3 + $0x10] sm:$0xff]
    %v1068 = vld [vmem:[#allocation3 + $0x18] sm:$0xff]
    %v1069 = vld [vmem:[#allocation3 + $0x20] sm:$0x3]
    %v1070 = vld [vmem:[%s6] sm:$0x1]
    %v1072 = vlaneseq
    %v1073 = vshrl.u32 %v1072, 7
    %v1074 = vsub.s32 0, %v1073
    %v1075 = vrot.slane %v1070, %v1074
    %v1077 = vadd.f32 %v1065, %v1075
    %v1078 = vadd.f32 %v1066, %v1075
    %v1079 = vadd.f32 %v1067, %v1075
    %v1080 = vadd.f32 %v1068, %v1075
    %v1081 = vadd.f32 %v1069, %v1075
    %v1082 = vld [vmem:[%s0] sm:$0xff]
    %v1083 = vld [vmem:[%s0 + $0x8] sm:$0xff]
    %v1084 = vld [vmem:[%s0 + $0x10] sm:$0xff]
    %v1085 = vld [vmem:[%s0 + $0x18] sm:$0xff]
    %v1086 = vld [vmem:[%s0 + $0x20] sm:$0x3]
    %v1087 = vadd.f32 %v1077, %v1082
    %v1088 = vadd.f32 %v1078, %v1083
    %v1089 = vadd.f32 %v1079, %v1084
    %v1090 = vadd.f32 %v1080, %v1085
    %v1091 = vadd.f32 %v1081, %v1086
    %1092 = vst [vmem:[%s7] sm:$0xff] %v1087
    %1093 = vst [vmem:[%s7 + $0x8] sm:$0xff] %v1088
    %1094 = vst [vmem:[%s7 + $0x10] sm:$0xff] %v1089
    %1095 = vst [vmem:[%s7 + $0x18] sm:$0xff] %v1090
    %1096 = vst [vmem:[%s7 + $0x20] sm:$0x3] %v1091
  $region37: #{encode_image.16} parent=0 // pred_fallthru
    _
  // Predicated region
  $region38: #{encode_image.16} parent=0 // pred_check
    _
  $region39: #{encode_image.16} parent=0 // pred_check_branch
    %1098 = sbr.rel (0) target = $region41
  $region40: #{encode_image.16} parent=0 // pred_region
    _
  $region41: #{encode_image.16} parent=0 // pred_fallthru
    _
  // Predicated region
  $region42: #{encode_image.16} parent=0 // pred_check
    _
  $region43: #{encode_image.16} parent=0 // pred_check_branch
    %1100 = sbr.rel (0) target = $region45
  $region44: #{encode_image.16} parent=0 // pred_region
    _
  $region45: #{encode_image.16} parent=0 // pred_fallthru
    _

</llo_original>
